<compile_context>
chip_gen: v5e
topology: v5e:2x2
jax: 0.10.0
libtpu: 0.0.40
codegen_flags: <defaults>
</compile_context>

<pallas_src>
import functools

import jax
import jax.numpy as jnp
from jax.experimental import pallas as pl
from jax.experimental.pallas import tpu as pltpu


_EPS = 1e-5


def _round_up(v, m):
    return ((v + m - 1) // m) * m


def _tpu_vmem_capacity_bytes():
    try:
        return int(pltpu.get_tpu_info().vmem_capacity_bytes)
    except Exception:
        return 64 << 20                      # conservative (v7x-sized) fallback


def _vmem_limit_bytes(cap):
    # 128 MiB parts (v5e/v6e): plenty of scoped headroom.  64 MiB parts (v7x): stay at
    # 32 MiB so the compiler keeps room for its own pipeline buffers.
    return (64 << 20) if cap >= (100 << 20) else (32 << 20)


def _choose_t_tile(T, Cp, Hp, cap):
    """Largest comfortable time tile: bigger tiles amortize the ~0.35us per-grid-step
    overhead and sit past the HBM-roofline knee (~512+ rows)."""
    budget = (16 << 20) if cap >= (100 << 20) else (8 << 20)
    per_row = 40 * Cp + 16 * Hp              # double-buffered blocks + in-kernel temps
    tt = budget // max(per_row, 1)
    tt = max(64, min(int(tt), 2048))
    tt = (tt // 16) * 16
    tt = min(tt, _round_up(T, 16))
    return max(16, tt)


# ---------------------------------------------------------------------------
# Pass A: dilated conv (C -> H) via halo DMA + im2col, plus lane-wise stats of h
# ---------------------------------------------------------------------------
def _conv1_stats_kernel(x_hbm, w1_ref, b1_ref, h_ref, stats_ref, xbuf, dma_sem, *,
                        t_tile, pad, dilation, ksize, t_real, t_padded):
    b = pl.program_id(0)
    t = pl.program_id(1)
    nt = pl.num_programs(1)
    win = t_tile + 2 * pad

    def copy_for(tt, slot):
        # x_hbm carries a zero guard block (t_tile rows) before the payload, so the
        # window start (tt+1)*t_tile - pad is always >= 0 and the end is in bounds.
        start = (tt + 1) * t_tile - pad
        return pltpu.make_async_copy(
            x_hbm.at[b, pl.ds(start, win), :], xbuf.at[slot], dma_sem.at[slot])

    # Prime the per-batch DMA chain (megacore-safe: every batch starts at t == 0)
    # and zero the grid-resident stats accumulator.
    @pl.when(t == 0)
    def _():
        copy_for(0, 0).start()
        stats_ref[...] = jnp.zeros_like(stats_ref)

    slot = t % 2

    # Prefetch the next window (other slot) before waiting on the current one.
    @pl.when(t + 1 < nt)
    def _():
        copy_for(t + 1, (t + 1) % 2).start()

    copy_for(t, slot).wait()

    xw = xbuf[slot].astype(jnp.bfloat16)                    # (win, Cp) bf16 MXU operand

    # Dilated "same" conv as one im2col matmul: the ksize taps are packed along the
    # contraction axis (K = ksize*Cp) so the MXU is filled by a single push.
    taps = [xw[k * dilation:k * dilation + t_tile, :] for k in range(ksize)]
    xcat = jnp.concatenate(taps, axis=1)                    # (t_tile, ksize*Cp)
    h = jnp.dot(xcat, w1_ref[...], preferred_element_type=jnp.float32)
    h = h + b1_ref[...]                                     # (1, Hp) broadcast, f32

    hb = h.astype(jnp.bfloat16)
    h_ref[...] = hb[None]

    # Lane-wise (sum, sum-of-squares) partials of the bf16-rounded h (what passes B/C
    # will read), masked to real rows, accumulated into the resident stats block.
    hs = hb.astype(jnp.float32)
    if t_padded != t_real:
        rows = t * t_tile + jax.lax.broadcasted_iota(jnp.int32, (t_tile, 1), 0)
        hs = jnp.where(rows < t_real, hs, 0.0)
    part = jnp.concatenate([jnp.sum(hs, axis=0, keepdims=True),
                            jnp.sum(hs * hs, axis=0, keepdims=True)], axis=0)
    stats_ref[...] += part[None]


# ---------------------------------------------------------------------------
# Shared: GroupNorm(1, H) -> GELU -> 1x1 conv (H -> 2C), used by passes B and C
# ---------------------------------------------------------------------------
def _norm_gelu_proj(h_f32, hstats, g1w, g1b, w2, b2, cnt, eps, approx_gelu):
    mean = jnp.sum(hstats[0:1, :], keepdims=True) / cnt      # (1, 1)
    var = jnp.sum(hstats[1:2, :], keepdims=True) / cnt - mean * mean
    inv = jax.lax.rsqrt(jnp.maximum(var, 0.0) + eps)
    hn = (h_f32 - mean) * inv * g1w + g1b
    hg = jax.nn.gelu(hn, approximate=approx_gelu)
    y = jnp.dot(hg.astype(jnp.bfloat16), w2, preferred_element_type=jnp.float32)
    return y + b2


# ---------------------------------------------------------------------------
# Pass B: global (lane-wise) stats of y only -- no y round trip through HBM
# ---------------------------------------------------------------------------
def _ystats_kernel(h_ref, hstats_ref, g1w_ref, g1b_ref, w2_ref, b2_ref, ystats_ref, *,
                   t_tile, t_real, t_padded, hidden, eps, approx_gelu):
    t = pl.program_id(1)

    @pl.when(t == 0)
    def _():
        ystats_ref[...] = jnp.zeros_like(ystats_ref)

    y = _norm_gelu_proj(h_ref[0].astype(jnp.float32), hstats_ref[0],
                        g1w_ref[...], g1b_ref[...], w2_ref[...], b2_ref[...],
                        float(t_real * hidden), eps, approx_gelu)
    if t_padded != t_real:
        rows = t * t_tile + jax.lax.broadcasted_iota(jnp.int32, (t_tile, 1), 0)
        y = jnp.where(rows < t_real, y, 0.0)
    part = jnp.concatenate([jnp.sum(y, axis=0, keepdims=True),
                            jnp.sum(y * y, axis=0, keepdims=True)], axis=0)
    ystats_ref[...] += part[None]


# ---------------------------------------------------------------------------
# Pass C: recompute y, GroupNorm(1,2C) -> GLU -> LayerScale -> residual add
# ---------------------------------------------------------------------------
def _out_kernel(h_ref, hstats_ref, g1w_ref, g1b_ref, w2_ref, b2_ref,
                ystats_ref, g2w_ref, g2b_ref, scale_ref, x_ref, o_ref, *,
                t_tile, t_real, t_padded, hidden, c_real, cp, eps, approx_gelu):
    t = pl.program_id(1)

    # Recompute y from h: one extra matmul is far cheaper than reading the 2*Cp-wide
    # y tile back from HBM (these passes are memory-bound).
    y = _norm_gelu_proj(h_ref[0].astype(jnp.float32), hstats_ref[0],
                        g1w_ref[...], g1b_ref[...], w2_ref[...], b2_ref[...],
                        float(t_real * hidden), eps, approx_gelu)

    st = ystats_ref[0]
    cnt = float(t_real * 2 * c_real)
    mean = jnp.sum(st[0:1, :], keepdims=True) / cnt
    var = jnp.sum(st[1:2, :], keepdims=True) / cnt - mean * mean
    inv = jax.lax.rsqrt(jnp.maximum(var, 0.0) + eps)
    yn = (y - mean) * inv * g2w_ref[...] + g2b_ref[...]

    a = yn[:, :cp]                                          # first GLU half (lane-aligned)
    g = yn[:, cp:]                                          # gate half
    glu = a * jax.nn.sigmoid(g)

    out = x_ref[0] + glu * scale_ref[...]
    if t_padded != t_real:
        # Keep padded time rows exactly zero so the guard/pad invariant of the
        # activation buffer holds for the next layer's halo DMA.
        rows = t * t_tile + jax.lax.broadcasted_iota(jnp.int32, (t_tile, 1), 0)
        out = jnp.where(rows < t_real, out, 0.0)
    o_ref[...] = out[None].astype(o_ref.dtype)


# ---------------------------------------------------------------------------
# Wrapper: one residual layer = 3 pallas_calls on a (B, nT) grid
# ---------------------------------------------------------------------------
def _dconv_layer(x_g, packed, *, dilation, ksize, t_tile, T_real, C_real, hidden,
                 vmem_limit, approx_gelu, eps=_EPS):
    B, Tg, Cp = x_g.shape
    w1p, b1p, g1wp, g1bp, w2p, b2p, g2wp, g2bp, scalep = packed
    Hp = w1p.shape[1]
    pad = dilation * (ksize // 2)
    assert pad <= t_tile, (pad, t_tile)
    Tp = Tg - 2 * t_tile
    assert Tp % t_tile == 0
    nT = Tp // t_tile
    win = t_tile + 2 * pad

    reduce_params = pltpu.CompilerParams(
        dimension_semantics=("parallel", "arbitrary"),   # t carries the stats accumulators
        vmem_limit_bytes=vmem_limit)

    # ---- pass A: dilated conv (im2col) + h stats ----
    h, hstats = pl.pallas_call(
        functools.partial(_conv1_stats_kernel, t_tile=t_tile, pad=pad,
                          dilation=dilation, ksize=ksize, t_real=T_real, t_padded=Tp),
        grid=(B, nT),
        in_specs=[
            pl.BlockSpec(memory_space=pl.ANY),                         # x_g (manual halo DMA)
            pl.BlockSpec((ksize * Cp, Hp), lambda b, t: (0, 0)),       # im2col conv1 weight
            pl.BlockSpec((1, Hp), lambda b, t: (0, 0)),                # conv1 bias
        ],
        out_specs=[
            pl.BlockSpec((1, t_tile, Hp), lambda b, t: (b, t, 0)),     # h tile
            pl.BlockSpec((1, 2, Hp), lambda b, t: (b, 0, 0)),          # resident stats acc
        ],
        out_shape=[
            jax.ShapeDtypeStruct((B, Tp, Hp), jnp.bfloat16),
            jax.ShapeDtypeStruct((B, 2, Hp), jnp.float32),
        ],
        scratch_shapes=[
            pltpu.VMEM((2, win, Cp), jnp.float32),                     # double-buffered halo
            pltpu.SemaphoreType.DMA((2,)),
        ],
        compiler_params=reduce_params,
    )(x_g, w1p, b1p)

    # ---- pass B: norm(h) -> gelu -> 1x1 conv -> y stats only ----
    ystats = pl.pallas_call(
        functools.partial(_ystats_kernel, t_tile=t_tile, t_real=T_real, t_padded=Tp,
                          hidden=hidden, eps=eps, approx_gelu=approx_gelu),
        grid=(B, nT),
        in_specs=[
            pl.BlockSpec((1, t_tile, Hp), lambda b, t: (b, t, 0)),
            pl.BlockSpec((1, 2, Hp), lambda b, t: (b, 0, 0)),
            pl.BlockSpec((1, Hp), lambda b, t: (0, 0)),
            pl.BlockSpec((1, Hp), lambda b, t: (0, 0)),
            pl.BlockSpec((Hp, 2 * Cp), lambda b, t: (0, 0)),
            pl.BlockSpec((1, 2 * Cp), lambda b, t: (0, 0)),
        ],
        out_specs=pl.BlockSpec((1, 2, 2 * Cp), lambda b, t: (b, 0, 0)),
        out_shape=jax.ShapeDtypeStruct((B, 2, 2 * Cp), jnp.float32),
        compiler_params=reduce_params,
    )(h, hstats, g1wp, g1bp, w2p, b2p)

    # ---- pass C: recompute y, norm(y) -> GLU -> LayerScale -> residual (aliased) ----
    out = pl.pallas_call(
        functools.partial(_out_kernel, t_tile=t_tile, t_real=T_real, t_padded=Tp,
                          hidden=hidden, c_real=C_real, cp=Cp, eps=eps,
                          approx_gelu=approx_gelu),
        grid=(B, nT),
        in_specs=[
            pl.BlockSpec((1, t_tile, Hp), lambda b, t: (b, t, 0)),     # h
            pl.BlockSpec((1, 2, Hp), lambda b, t: (b, 0, 0)),          # hstats
            pl.BlockSpec((1, Hp), lambda b, t: (0, 0)),                # g1 gamma
            pl.BlockSpec((1, Hp), lambda b, t: (0, 0)),                # g1 beta
            pl.BlockSpec((Hp, 2 * Cp), lambda b, t: (0, 0)),           # conv2 weight
            pl.BlockSpec((1, 2 * Cp), lambda b, t: (0, 0)),            # conv2 bias
            pl.BlockSpec((1, 2, 2 * Cp), lambda b, t: (b, 0, 0)),      # ystats
            pl.BlockSpec((1, 2 * Cp), lambda b, t: (0, 0)),            # g2 gamma
            pl.BlockSpec((1, 2 * Cp), lambda b, t: (0, 0)),            # g2 beta
            pl.BlockSpec((1, Cp), lambda b, t: (0, 0)),                # layer scale
            pl.BlockSpec((1, t_tile, Cp), lambda b, t: (b, t + 1, 0)), # x (skip guard block)
        ],
        out_specs=pl.BlockSpec((1, t_tile, Cp), lambda b, t: (b, t + 1, 0)),
        out_shape=jax.ShapeDtypeStruct((B, Tg, Cp), x_g.dtype),
        # Alias the activation stream: guard blocks are never (re)written, so they keep
        # their zeros and no fresh pass over the buffer is needed per layer.
        input_output_aliases={10: 0},
        compiler_params=pltpu.CompilerParams(
            dimension_semantics=("parallel", "parallel"),
            vmem_limit_bytes=vmem_limit),
    )(h, hstats, g1wp, g1bp, w2p, b2p, ystats, g2wp, g2bp, scalep, x_g)
    return out


# ---------------------------------------------------------------------------
# Parameter handling
# ---------------------------------------------------------------------------
def init_dconv_params(key, channels, compress=4.0, depth=2, init=1e-4, ksize=3):
    """Deterministic synthetic parameters in PyTorch layout.

    Per layer: conv1 weight (hidden, C, K), conv1 bias (hidden,), GN1 gamma/beta (hidden,),
    conv2 weight (2C, hidden), conv2 bias (2C,), GN2 gamma/beta (2C,), LayerScale (C,).
    """
    hidden = int(channels / compress)
    layers = []
    for d in range(depth):
        keys = jax.random.split(jax.random.fold_in(key, d), 8)
        w1 = 0.1 * jax.random.normal(keys[0], (hidden, channels, ksize), jnp.float32)
        b1 = 0.1 * jax.random.normal(keys[1], (hidden,), jnp.float32)
        g1w = 1.0 + 0.1 * jax.random.normal(keys[2], (hidden,), jnp.float32)
        g1b = 0.1 * jax.random.normal(keys[3], (hidden,), jnp.float32)
        w2 = 0.1 * jax.random.normal(keys[4], (2 * channels, hidden), jnp.float32)
        b2 = 0.1 * jax.random.normal(keys[5], (2 * channels,), jnp.float32)
        g2w = 1.0 + 0.1 * jax.random.normal(keys[6], (2 * channels,), jnp.float32)
        g2b = 0.1 * jax.random.normal(keys[7], (2 * channels,), jnp.float32)
        scale = jnp.full((channels,), init, jnp.float32)
        layers.append((w1, b1, g1w, g1b, w2, b2, g2w, g2b, scale))
    return layers


def _pack_layer_params(layer, Cp, Hp):
    """Pad / reorder PyTorch-layout params for lane-aligned kernels (bf16 weights)."""
    w1, b1, g1w, g1b, w2, b2, g2w, g2b, scale = layer
    hidden, C, K = w1.shape

    w1p = jnp.zeros((K, Cp, Hp), jnp.float32)
    w1p = w1p.at[:, :C, :hidden].set(jnp.transpose(w1, (2, 1, 0)))     # (K, Cin, H)
    w1p = w1p.reshape(K * Cp, Hp).astype(jnp.bfloat16)                 # im2col layout

    def vec_h(v):
        return jnp.zeros((1, Hp), jnp.float32).at[0, :hidden].set(v)

    def vec_2c(v):
        z = jnp.zeros((1, 2 * Cp), jnp.float32)
        z = z.at[0, :C].set(v[:C])
        z = z.at[0, Cp:Cp + C].set(v[C:])
        return z

    w2p = jnp.zeros((Hp, 2 * Cp), jnp.float32)
    w2p = w2p.at[:hidden, :C].set(jnp.transpose(w2[:C, :]))            # GLU "a" half
    w2p = w2p.at[:hidden, Cp:Cp + C].set(jnp.transpose(w2[C:, :]))     # GLU gate half
    w2p = w2p.astype(jnp.bfloat16)

    scalep = jnp.zeros((1, Cp), jnp.float32).at[0, :C].set(scale)
    return (w1p, vec_h(b1), vec_h(g1w), vec_h(g1b),
            w2p, vec_2c(b2), vec_2c(g2w), vec_2c(g2b), scalep)


def dconv_forward(x_nct, params, *, dilate=True, t_tile=None, approx_gelu=True, eps=_EPS):
    """x_nct: (B, C, T) float32, same as the PyTorch module. Returns (B, C, T)."""
    B, C, T = x_nct.shape
    hidden, Cw, ksize = params[0][0].shape
    assert Cw == C
    Cp = _round_up(C, 128)
    Hp = _round_up(hidden, 128)

    cap = _tpu_vmem_capacity_bytes()
    vmem_limit = _vmem_limit_bytes(cap)
    if t_tile is None:
        t_tile = _choose_t_tile(T, Cp, Hp, cap)
    t_tile = max(16, (min(int(t_tile), 2048) // 16) * 16)
    t_tile = min(t_tile, _round_up(T, 16))
    Tp = _round_up(T, t_tile)
    Tg = Tp + 2 * t_tile    # one zero guard block on each side for the halo DMA windows

    # NCT -> NTC, zero guard blocks + zero time / channel padding.  Guard & pad rows stay
    # exactly zero across layers (pass C masks them and aliases its output onto this
    # buffer), so the dilated conv's halo DMA reads straight from it with no per-layer
    # padded copy of the activation.
    x_g = jnp.pad(jnp.transpose(x_nct, (0, 2, 1)).astype(jnp.float32),
                  ((0, 0), (t_tile, t_tile + Tp - T), (0, Cp - C)))

    for d, layer in enumerate(params):
        dilation = 2 ** d if dilate else 1
        packed = _pack_layer_params(layer, Cp, Hp)
        x_g = _dconv_layer(x_g, packed, dilation=dilation, ksize=ksize,
                           t_tile=t_tile, T_real=T, C_real=C, hidden=hidden,
                           vmem_limit=vmem_limit, approx_gelu=approx_gelu, eps=eps)

    return jnp.transpose(x_g[:, t_tile:t_tile + T, :C], (0, 2, 1)).astype(x_nct.dtype)


# ---------------------------------------------------------------------------
# Pure-JAX reference (mirrors the PyTorch module) for a numerical sanity check
# ---------------------------------------------------------------------------
def _ref_groupnorm(x, w, b, eps):
    mean = jnp.mean(x, axis=(1, 2), keepdims=True)
    var = jnp.mean((x - mean) ** 2, axis=(1, 2), keepdims=True)
    return (x - mean) * jax.lax.rsqrt(var + eps) * w[None, :, None] + b[None, :, None]


def _reference_dconv(x_nct, params, *, dilate=True, eps=_EPS):
    out = x_nct.astype(jnp.float32)
    for d, (w1, b1, g1w, g1b, w2, b2, g2w, g2b, scale) in enumerate(params):
        hidden, C, K = w1.shape
        dil = 2 ** d if dilate else 1
        pad = dil * (K // 2)
        T = out.shape[2]
        xp = jnp.pad(out, ((0, 0), (0, 0), (pad, pad)))
        h = jnp.zeros((out.shape[0], hidden, T), jnp.float32)
        for k in range(K):
            h = h + jnp.einsum("oc,bct->bot", w1[:, :, k], xp[:, :, k * dil:k * dil + T])
        h = h + b1[None, :, None]
        h = _ref_groupnorm(h, g1w, g1b, eps)
        h = jax.nn.gelu(h, approximate=False)      # PyTorch nn.GELU default (exact erf)
        y = jnp.einsum("oc,bct->bot", w2, h) + b2[None, :, None]
        y = _ref_groupnorm(y, g2w, g2b, eps)
        glu = y[:, :C] * jax.nn.sigmoid(y[:, C:])
        out = out + glu * scale[None, :, None]
    return out


if __name__ == "__main__":
    B, C, T = 2, 16, 250           # T not a tile multiple -> exercises masking + halo edges
    key = jax.random.PRNGKey(0)
    kx, kp = jax.random.split(key)
    x = jax.random.normal(kx, (B, C, T), jnp.float32)
    params = init_dconv_params(kp, channels=C, compress=4.0, depth=2, init=1e-4, ksize=3)

    # t_tile=128 forces a 2-tile grid at this tiny test size (production sizes use the
    # auto-chosen, much larger tile).
    fwd = jax.jit(lambda xx, pp: dconv_forward(xx, pp, t_tile=128))
    out = fwd(x, params)
    jax.block_until_ready(out)

    assert out.shape == (B, C, T) and out.dtype == jnp.float32
    assert bool(jnp.all(jnp.isfinite(out)))

    # Compare the residual-branch contribution against the f32 reference (bf16 MXU
    # operands + tanh-GELU introduce small drift; gross bugs change the branch by O(1)).
    ref = _reference_dconv(x, params)
    sig = float(jnp.max(jnp.abs(ref - x)))
    err = float(jnp.max(jnp.abs(out - ref)))
    assert err <= 0.15 * sig + 1e-6, (err, sig)

    print("KERNEL_OK")
</pallas_src>

<mosaic_0001>
module attributes {stable_mosaic.version = 11 : i64} {
  func.func @_conv1_stats_kernel(%arg0: i32, %arg1: i32, %arg2: memref<2x512x128xf32, #tpu.memory_space<any>>, %arg3: memref<384x128xbf16, #tpu.memory_space<vmem>>, %arg4: memref<1x128xf32, #tpu.memory_space<vmem>>, %arg5: memref<1x128x128xbf16, #tpu.memory_space<vmem>>, %arg6: memref<1x2x128xf32, #tpu.memory_space<vmem>>, %arg7: memref<2x130x128xf32, #tpu.memory_space<vmem>>, %arg8: memref<2x!tpu.dma_semaphore, #tpu.memory_space<semaphore_mem>>) attributes {dimension_semantics = [#tpu.dimension_semantics<parallel>, #tpu.dimension_semantics<arbitrary>], iteration_bounds = array<i64: 2, 2>, scalar_prefetch = 0 : i64, scratch_operands = 2 : i64, tpu.core_type = #tpu.core_type<tc>, window_params = [{}, {pipeline_mode = #tpu.pipeline_mode<synchronous>, transform_indices = @transform_1, window_bounds = array<i64: 384, 128>}, {pipeline_mode = #tpu.pipeline_mode<synchronous>, transform_indices = @transform_2, window_bounds = array<i64: 1, 128>}, {transform_indices = @transform_3, window_bounds = array<i64: 1, 128, 128>}, {transform_indices = @transform_4, window_bounds = array<i64: 1, 2, 128>}]} {
    %c0_i32 = arith.constant 0 : i32
    %0 = arith.cmpi eq, %arg1, %c0_i32 : i32
    %1 = arith.extui %0 : i1 to i32
    %c0_i32_0 = arith.constant 0 : i32
    %2 = arith.cmpi ne, %1, %c0_i32_0 : i32
    scf.if %2 {
      %c0_i32_31 = arith.constant 0 : i32
      %c0_i32_32 = arith.constant 0 : i32
      %c127_i32 = arith.constant 127 : i32
      %c0_i32_33 = arith.constant 0 : i32
      %63 = tpu.memref_slice %arg2[%arg0, %c127_i32, %c0_i32_33] : memref<2x512x128xf32, #tpu.memory_space<any>> -> memref<1x130x128xf32, #tpu.memory_space<any>>
      %64 = tpu.memref_squeeze %63 : memref<1x130x128xf32, #tpu.memory_space<any>> -> memref<130x128xf32, #tpu.memory_space<any>>
      %c0_i32_34 = arith.constant 0 : i32
      %c0_i32_35 = arith.constant 0 : i32
      %65 = tpu.memref_slice %arg7[%c0_i32_31, %c0_i32_34, %c0_i32_35] : memref<2x130x128xf32, #tpu.memory_space<vmem>> -> memref<1x130x128xf32, #tpu.memory_space<vmem>>
      %66 = tpu.memref_squeeze %65 : memref<1x130x128xf32, #tpu.memory_space<vmem>> -> memref<130x128xf32, #tpu.memory_space<vmem>>
      %67 = tpu.memref_slice %arg8[%c0_i32_32] : memref<2x!tpu.dma_semaphore, #tpu.memory_space<semaphore_mem>> -> memref<1x!tpu.dma_semaphore, #tpu.memory_space<semaphore_mem>>
      %68 = tpu.memref_squeeze %67 : memref<1x!tpu.dma_semaphore, #tpu.memory_space<semaphore_mem>> -> memref<!tpu.dma_semaphore, #tpu.memory_space<semaphore_mem>>
      tpu.enqueue_dma source(%64 : memref<130x128xf32, #tpu.memory_space<any>>) target(%66 : memref<130x128xf32, #tpu.memory_space<vmem>>) target_semaphore(%68 : memref<!tpu.dma_semaphore, #tpu.memory_space<semaphore_mem>>)
      %cst_36 = arith.constant 0.000000e+00 : f32
      %69 = vector.broadcast %cst_36 : f32 to vector<1x2x128xf32>
      %c0_37 = arith.constant 0 : index
      %c0_38 = arith.constant 0 : index
      %c0_39 = arith.constant 0 : index
      %70 = vector.load %arg6[%c0_37, %c0_38, %c0_39] : memref<1x2x128xf32, #tpu.memory_space<vmem>>, vector<1x2x128xf32>
      tpu.vector_store %arg6[%c0_37, %c0_38, %c0_39], %69 {strides = array<i32>} : memref<1x2x128xf32, #tpu.memory_space<vmem>>, vector<1x2x128xf32>,
    } else {
    }
    %c2_i32 = arith.constant 2 : i32
    %c0_i32_1 = arith.constant 0 : i32
    %3 = arith.cmpi eq, %c2_i32, %c0_i32_1 : i32
    %c1_i32 = arith.constant 1 : i32
    %4 = arith.select %3, %c1_i32, %c2_i32 : i32
    %5 = arith.remsi %arg1, %4 : i32
    %c0_i32_2 = arith.constant 0 : i32
    %6 = arith.cmpi ne, %5, %c0_i32_2 : i32
    %c0_i32_3 = arith.constant 0 : i32
    %7 = arith.cmpi slt, %5, %c0_i32_3 : i32
    %c0_i32_4 = arith.constant 0 : i32
    %8 = arith.cmpi slt, %4, %c0_i32_4 : i32
    %9 = arith.xori %7, %8 : i1
    %10 = arith.andi %9, %6 : i1
    %11 = arith.addi %5, %4 : i32
    %12 = arith.select %10, %11, %5 : i32
    %c1_i32_5 = arith.constant 1 : i32
    %13 = arith.addi %arg1, %c1_i32_5 : i32
    %c2_i32_6 = arith.constant 2 : i32
    %14 = arith.cmpi slt, %13, %c2_i32_6 : i32
    %15 = arith.extui %14 : i1 to i32
    %c0_i32_7 = arith.constant 0 : i32
    %16 = arith.cmpi ne, %15, %c0_i32_7 : i32
    scf.if %16 {
      %c1_i32_31 = arith.constant 1 : i32
      %63 = arith.addi %arg1, %c1_i32_31 : i32
      %c1_i32_32 = arith.constant 1 : i32
      %64 = arith.addi %arg1, %c1_i32_32 : i32
      %c2_i32_33 = arith.constant 2 : i32
      %c0_i32_34 = arith.constant 0 : i32
      %65 = arith.cmpi eq, %c2_i32_33, %c0_i32_34 : i32
      %c1_i32_35 = arith.constant 1 : i32
      %66 = arith.select %65, %c1_i32_35, %c2_i32_33 : i32
      %67 = arith.remsi %64, %66 : i32
      %c0_i32_36 = arith.constant 0 : i32
      %68 = arith.cmpi ne, %67, %c0_i32_36 : i32
      %c0_i32_37 = arith.constant 0 : i32
      %69 = arith.cmpi slt, %67, %c0_i32_37 : i32
      %c0_i32_38 = arith.constant 0 : i32
      %70 = arith.cmpi slt, %66, %c0_i32_38 : i32
      %71 = arith.xori %69, %70 : i1
      %72 = arith.andi %71, %68 : i1
      %73 = arith.addi %67, %66 : i32
      %74 = arith.select %72, %73, %67 : i32
      %c1_i32_39 = arith.constant 1 : i32
      %75 = arith.addi %63, %c1_i32_39 : i32
      %c128_i32_40 = arith.constant 128 : i32
      %76 = arith.muli %75, %c128_i32_40 : i32
      %c1_i32_41 = arith.constant 1 : i32
      %77 = arith.subi %76, %c1_i32_41 : i32
      %c0_i32_42 = arith.constant 0 : i32
      %78 = tpu.memref_slice %arg2[%arg0, %77, %c0_i32_42] : memref<2x512x128xf32, #tpu.memory_space<any>> -> memref<1x130x128xf32, #tpu.memory_space<any>>
      %79 = tpu.memref_squeeze %78 : memref<1x130x128xf32, #tpu.memory_space<any>> -> memref<130x128xf32, #tpu.memory_space<any>>
      %c0_i32_43 = arith.constant 0 : i32
      %c0_i32_44 = arith.constant 0 : i32
      %80 = tpu.memref_slice %arg7[%74, %c0_i32_43, %c0_i32_44] : memref<2x130x128xf32, #tpu.memory_space<vmem>> -> memref<1x130x128xf32, #tpu.memory_space<vmem>>
      %81 = tpu.memref_squeeze %80 : memref<1x130x128xf32, #tpu.memory_space<vmem>> -> memref<130x128xf32, #tpu.memory_space<vmem>>
      %82 = tpu.memref_slice %arg8[%74] : memref<2x!tpu.dma_semaphore, #tpu.memory_space<semaphore_mem>> -> memref<1x!tpu.dma_semaphore, #tpu.memory_space<semaphore_mem>>
      %83 = tpu.memref_squeeze %82 : memref<1x!tpu.dma_semaphore, #tpu.memory_space<semaphore_mem>> -> memref<!tpu.dma_semaphore, #tpu.memory_space<semaphore_mem>>
      tpu.enqueue_dma source(%79 : memref<130x128xf32, #tpu.memory_space<any>>) target(%81 : memref<130x128xf32, #tpu.memory_space<vmem>>) target_semaphore(%83 : memref<!tpu.dma_semaphore, #tpu.memory_space<semaphore_mem>>)
    } else {
    }
    %c1_i32_8 = arith.constant 1 : i32
    %17 = arith.addi %arg1, %c1_i32_8 : i32
    %c128_i32 = arith.constant 128 : i32
    %18 = arith.muli %17, %c128_i32 : i32
    %c1_i32_9 = arith.constant 1 : i32
    %19 = arith.subi %18, %c1_i32_9 : i32
    %c0_i32_10 = arith.constant 0 : i32
    %20 = tpu.memref_slice %arg2[%arg0, %19, %c0_i32_10] : memref<2x512x128xf32, #tpu.memory_space<any>> -> memref<1x130x128xf32, #tpu.memory_space<any>>
    %21 = tpu.memref_squeeze %20 : memref<1x130x128xf32, #tpu.memory_space<any>> -> memref<130x128xf32, #tpu.memory_space<any>>
    %c0_i32_11 = arith.constant 0 : i32
    %c0_i32_12 = arith.constant 0 : i32
    %22 = tpu.memref_slice %arg7[%12, %c0_i32_11, %c0_i32_12] : memref<2x130x128xf32, #tpu.memory_space<vmem>> -> memref<1x130x128xf32, #tpu.memory_space<vmem>>
    %23 = tpu.memref_squeeze %22 : memref<1x130x128xf32, #tpu.memory_space<vmem>> -> memref<130x128xf32, #tpu.memory_space<vmem>>
    %24 = tpu.memref_slice %arg8[%12] : memref<2x!tpu.dma_semaphore, #tpu.memory_space<semaphore_mem>> -> memref<1x!tpu.dma_semaphore, #tpu.memory_space<semaphore_mem>>
    %25 = tpu.memref_squeeze %24 : memref<1x!tpu.dma_semaphore, #tpu.memory_space<semaphore_mem>> -> memref<!tpu.dma_semaphore, #tpu.memory_space<semaphore_mem>>
    tpu.wait_dma2 semaphore(%25 : memref<!tpu.dma_semaphore, #tpu.memory_space<semaphore_mem>>) src(%21 : memref<130x128xf32, #tpu.memory_space<any>>) dst(%23 : memref<130x128xf32, #tpu.memory_space<vmem>>)
    %26 = arith.index_cast %12 : i32 to index
    %c0 = arith.constant 0 : index
    %c0_13 = arith.constant 0 : index
    %27 = vector.load %arg7[%26, %c0, %c0_13] : memref<2x130x128xf32, #tpu.memory_space<vmem>>, vector<1x130x128xf32>
    %28 = vector.shape_cast %27 : vector<1x130x128xf32> to vector<130x128xf32>
    %29 = arith.truncf %28 : vector<130x128xf32> to vector<130x128xbf16>
    %30 = vector.extract_strided_slice %29 {offsets = [0, 0], sizes = [128, 128], strides = [1, 1]} : vector<130x128xbf16> to vector<128x128xbf16>
    %31 = vector.extract_strided_slice %29 {offsets = [1, 0], sizes = [128, 128], strides = [1, 1]} : vector<130x128xbf16> to vector<128x128xbf16>
    %32 = vector.extract_strided_slice %29 {offsets = [2, 0], sizes = [128, 128], strides = [1, 1]} : vector<130x128xbf16> to vector<128x128xbf16>
    %33 = tpu.concatenate %30, %31, %32 in 1 : vector<128x128xbf16>, vector<128x128xbf16>, vector<128x128xbf16> -> vector<128x384xbf16>
    %c0_14 = arith.constant 0 : index
    %c0_15 = arith.constant 0 : index
    %34 = vector.load %arg3[%c0_14, %c0_15] : memref<384x128xbf16, #tpu.memory_space<vmem>>, vector<384x128xbf16>
    %cst = arith.constant dense<0.000000e+00> : vector<128x128xf32>
    %35 = tpu.matmul %33, %34, %cst {dimension_numbers = #tpu.dot_dimension_numbers<[1], [0], [0], [1], [0, 0, 1, 1], [], []>} : vector<128x384xbf16>, vector<384x128xbf16>, vector<128x128xf32> -> vector<128x128xf32>
    %c0_16 = arith.constant 0 : index
    %c0_17 = arith.constant 0 : index
    %36 = vector.load %arg4[%c0_16, %c0_17] : memref<1x128xf32, #tpu.memory_space<vmem>>, vector<1x128xf32>
    %37 = vector.broadcast %36 : vector<1x128xf32> to vector<128x128xf32>
    %38 = arith.addf %35, %37 : vector<128x128xf32>
    %39 = arith.truncf %38 : vector<128x128xf32> to vector<128x128xbf16>
    %40 = vector.shape_cast %39 : vector<128x128xbf16> to vector<1x128x128xbf16>
    %c0_18 = arith.constant 0 : index
    %c0_19 = arith.constant 0 : index
    %c0_20 = arith.constant 0 : index
    %41 = vector.load %arg5[%c0_18, %c0_19, %c0_20] : memref<1x128x128xbf16, #tpu.memory_space<vmem>>, vector<1x128x128xbf16>
    tpu.vector_store %arg5[%c0_18, %c0_19, %c0_20], %40 {strides = array<i32>} : memref<1x128x128xbf16, #tpu.memory_space<vmem>>, vector<1x128x128xbf16>,
    %42 = arith.extf %39 : vector<128x128xbf16> to vector<128x128xf32>
    %c128_i32_21 = arith.constant 128 : i32
    %43 = arith.muli %arg1, %c128_i32_21 : i32
    %44 = tpu.iota {dimensions = array<i32: 0>} : vector<128x1xi32>
    %45 = vector.broadcast %43 : i32 to vector<128x1xi32>
    %46 = arith.addi %45, %44 : vector<128x1xi32>
    %c250_i32 = arith.constant 250 : i32
    %47 = vector.broadcast %c250_i32 : i32 to vector<128x1xi32>
    %48 = arith.cmpi slt, %46, %47 : vector<128x1xi32>
    %cst_22 = arith.constant 0.000000e+00 : f32
    %49 = vector.shape_cast %48 : vector<128x1xi1> to vector<128x1xi1>
    %50 = vector.broadcast %49 : vector<128x1xi1> to vector<128x128xi1>
    %51 = vector.broadcast %cst_22 : f32 to vector<128x128xf32>
    %52 = arith.select %50, %42, %51 : vector<128x128xi1>, vector<128x128xf32>
    %cst_23 = arith.constant dense<0.000000e+00> : vector<128xf32>
    %53 = vector.multi_reduction <add>, %52, %cst_23 [0] : vector<128x128xf32> to vector<128xf32>
    %54 = vector.shape_cast %53 : vector<128xf32> to vector<1x128xf32>
    %55 = arith.mulf %52, %52 : vector<128x128xf32>
    %cst_24 = arith.constant dense<0.000000e+00> : vector<128xf32>
    %56 = vector.multi_reduction <add>, %55, %cst_24 [0] : vector<128x128xf32> to vector<128xf32>
    %57 = vector.shape_cast %56 : vector<128xf32> to vector<1x128xf32>
    %58 = tpu.concatenate %54, %57 in 0 : vector<1x128xf32>, vector<1x128xf32> -> vector<2x128xf32>
    %c0_25 = arith.constant 0 : index
    %c0_26 = arith.constant 0 : index
    %c0_27 = arith.constant 0 : index
    %59 = vector.load %arg6[%c0_25, %c0_26, %c0_27] : memref<1x2x128xf32, #tpu.memory_space<vmem>>, vector<1x2x128xf32>
    %60 = vector.shape_cast %58 : vector<2x128xf32> to vector<1x2x128xf32>
    %61 = arith.addf %59, %60 : vector<1x2x128xf32>
    %c0_28 = arith.constant 0 : index
    %c0_29 = arith.constant 0 : index
    %c0_30 = arith.constant 0 : index
    %62 = vector.load %arg6[%c0_28, %c0_29, %c0_30] : memref<1x2x128xf32, #tpu.memory_space<vmem>>, vector<1x2x128xf32>
    tpu.vector_store %arg6[%c0_28, %c0_29, %c0_30], %61 {strides = array<i32>} : memref<1x2x128xf32, #tpu.memory_space<vmem>>, vector<1x2x128xf32>,
    return
  }
  func.func @transform_1(%arg0: i32, %arg1: i32) -> (i32, i32) {
    %c0_i32 = arith.constant 0 : i32
    %c0_i32_0 = arith.constant 0 : i32
    %c0_i32_1 = arith.constant 0 : i32
    return %c0_i32, %c0_i32_0 : i32, i32
  }
  func.func @transform_2(%arg0: i32, %arg1: i32) -> (i32, i32) {
    %c0_i32 = arith.constant 0 : i32
    %c0_i32_0 = arith.constant 0 : i32
    %c0_i32_1 = arith.constant 0 : i32
    return %c0_i32, %c0_i32_0 : i32, i32
  }
  func.func @transform_3(%arg0: i32, %arg1: i32) -> (i32, i32, i32) {
    %c0_i32 = arith.constant 0 : i32
    %c0_i32_0 = arith.constant 0 : i32
    return %arg0, %arg1, %c0_i32 : i32, i32, i32
  }
  func.func @transform_4(%arg0: i32, %arg1: i32) -> (i32, i32, i32) {
    %c0_i32 = arith.constant 0 : i32
    %c0_i32_0 = arith.constant 0 : i32
    %c0_i32_1 = arith.constant 0 : i32
    return %arg0, %c0_i32, %c0_i32_0 : i32, i32, i32
  }
}

module attributes {stable_mosaic.version = 11 : i64} {
  func.func @_ystats_kernel(%arg0: i32, %arg1: i32, %arg2: memref<1x128x128xbf16, #tpu.memory_space<vmem>>, %arg3: memref<1x2x128xf32, #tpu.memory_space<vmem>>, %arg4: memref<1x128xf32, #tpu.memory_space<vmem>>, %arg5: memref<1x128xf32, #tpu.memory_space<vmem>>, %arg6: memref<128x256xbf16, #tpu.memory_space<vmem>>, %arg7: memref<1x256xf32, #tpu.memory_space<vmem>>, %arg8: memref<1x2x256xf32, #tpu.memory_space<vmem>>) attributes {dimension_semantics = [#tpu.dimension_semantics<parallel>, #tpu.dimension_semantics<arbitrary>], iteration_bounds = array<i64: 2, 2>, scalar_prefetch = 0 : i64, scratch_operands = 0 : i64, tpu.core_type = #tpu.core_type<tc>, window_params = [{transform_indices = @transform_0, window_bounds = array<i64: 1, 128, 128>}, {transform_indices = @transform_1, window_bounds = array<i64: 1, 2, 128>}, {pipeline_mode = #tpu.pipeline_mode<synchronous>, transform_indices = @transform_2, window_bounds = array<i64: 1, 128>}, {pipeline_mode = #tpu.pipeline_mode<synchronous>, transform_indices = @transform_3, window_bounds = array<i64: 1, 128>}, {pipeline_mode = #tpu.pipeline_mode<synchronous>, transform_indices = @transform_4, window_bounds = array<i64: 128, 256>}, {pipeline_mode = #tpu.pipeline_mode<synchronous>, transform_indices = @transform_5, window_bounds = array<i64: 1, 256>}, {transform_indices = @transform_6, window_bounds = array<i64: 1, 2, 256>}]} {
    %c0_i32 = arith.constant 0 : i32
    %0 = arith.cmpi eq, %arg1, %c0_i32 : i32
    %1 = arith.extui %0 : i1 to i32
    %c0_i32_0 = arith.constant 0 : i32
    %2 = arith.cmpi ne, %1, %c0_i32_0 : i32
    scf.if %2 {
      %cst_33 = arith.constant 0.000000e+00 : f32
      %80 = vector.broadcast %cst_33 : f32 to vector<1x2x256xf32>
      %c0_34 = arith.constant 0 : index
      %c0_35 = arith.constant 0 : index
      %c0_36 = arith.constant 0 : index
      %81 = vector.load %arg8[%c0_34, %c0_35, %c0_36] : memref<1x2x256xf32, #tpu.memory_space<vmem>>, vector<1x2x256xf32>
      tpu.vector_store %arg8[%c0_34, %c0_35, %c0_36], %80 {strides = array<i32>} : memref<1x2x256xf32, #tpu.memory_space<vmem>>, vector<1x2x256xf32>,
    } else {
    }
    %c0 = arith.constant 0 : index
    %c0_1 = arith.constant 0 : index
    %c0_2 = arith.constant 0 : index
    %3 = vector.load %arg2[%c0, %c0_1, %c0_2] : memref<1x128x128xbf16, #tpu.memory_space<vmem>>, vector<1x128x128xbf16>
    %4 = vector.shape_cast %3 : vector<1x128x128xbf16> to vector<128x128xbf16>
    %5 = arith.extf %4 : vector<128x128xbf16> to vector<128x128xf32>
    %c0_3 = arith.constant 0 : index
    %c0_4 = arith.constant 0 : index
    %c0_5 = arith.constant 0 : index
    %6 = vector.load %arg3[%c0_3, %c0_4, %c0_5] : memref<1x2x128xf32, #tpu.memory_space<vmem>>, vector<1x2x128xf32>
    %7 = vector.shape_cast %6 : vector<1x2x128xf32> to vector<2x128xf32>
    %c0_6 = arith.constant 0 : index
    %c0_7 = arith.constant 0 : index
    %8 = vector.load %arg4[%c0_6, %c0_7] : memref<1x128xf32, #tpu.memory_space<vmem>>, vector<1x128xf32>
    %c0_8 = arith.constant 0 : index
    %c0_9 = arith.constant 0 : index
    %9 = vector.load %arg5[%c0_8, %c0_9] : memref<1x128xf32, #tpu.memory_space<vmem>>, vector<1x128xf32>
    %c0_10 = arith.constant 0 : index
    %c0_11 = arith.constant 0 : index
    %10 = vector.load %arg6[%c0_10, %c0_11] : memref<128x256xbf16, #tpu.memory_space<vmem>>, vector<128x256xbf16>
    %c0_12 = arith.constant 0 : index
    %c0_13 = arith.constant 0 : index
    %11 = vector.load %arg7[%c0_12, %c0_13] : memref<1x256xf32, #tpu.memory_space<vmem>>, vector<1x256xf32>
    %12 = vector.extract_strided_slice %7 {offsets = [0, 0], sizes = [1, 128], strides = [1, 1]} : vector<2x128xf32> to vector<1x128xf32>
    %13 = vector.shape_cast %12 : vector<1x128xf32> to vector<1x1x128xf32>
    %cst = arith.constant dense<0.000000e+00> : vector<1xf32>
    %14 = vector.multi_reduction <add>, %13, %cst [1, 2] : vector<1x1x128xf32> to vector<1xf32>
    %15 = vector.shape_cast %14 : vector<1xf32> to vector<1x1x1xf32>
    %16 = vector.extract %15[0, 0, 0] : f32 from vector<1x1x1xf32>
    %17 = vector.broadcast %16 : f32 to vector<1x1xf32>
    %cst_14 = arith.constant 1.000000e+03 : f32
    %18 = vector.broadcast %cst_14 : f32 to vector<1x1xf32>
    %19 = arith.divf %17, %18 : vector<1x1xf32>
    %20 = vector.extract_strided_slice %7 {offsets = [1, 0], sizes = [1, 128], strides = [1, 1]} : vector<2x128xf32> to vector<1x128xf32>
    %21 = vector.shape_cast %20 : vector<1x128xf32> to vector<1x1x128xf32>
    %cst_15 = arith.constant dense<0.000000e+00> : vector<1xf32>
    %22 = vector.multi_reduction <add>, %21, %cst_15 [1, 2] : vector<1x1x128xf32> to vector<1xf32>
    %23 = vector.shape_cast %22 : vector<1xf32> to vector<1x1x1xf32>
    %24 = vector.extract %23[0, 0, 0] : f32 from vector<1x1x1xf32>
    %25 = vector.broadcast %24 : f32 to vector<1x1xf32>
    %cst_16 = arith.constant 1.000000e+03 : f32
    %26 = vector.broadcast %cst_16 : f32 to vector<1x1xf32>
    %27 = arith.divf %25, %26 : vector<1x1xf32>
    %28 = arith.mulf %19, %19 : vector<1x1xf32>
    %29 = arith.subf %27, %28 : vector<1x1xf32>
    %cst_17 = arith.constant 0.000000e+00 : f32
    %30 = vector.broadcast %cst_17 : f32 to vector<1x1xf32>
    %31 = arith.maximumf %29, %30 : vector<1x1xf32>
    %cst_18 = arith.constant 9.99999974E-6 : f32
    %32 = vector.broadcast %cst_18 : f32 to vector<1x1xf32>
    %33 = arith.addf %31, %32 : vector<1x1xf32>
    %34 = math.rsqrt %33 : vector<1x1xf32>
    %35 = vector.broadcast %19 : vector<1x1xf32> to vector<128x128xf32>
    %36 = arith.subf %5, %35 : vector<128x128xf32>
    %37 = vector.broadcast %34 : vector<1x1xf32> to vector<128x128xf32>
    %38 = arith.mulf %36, %37 : vector<128x128xf32>
    %39 = vector.broadcast %8 : vector<1x128xf32> to vector<128x128xf32>
    %40 = arith.mulf %38, %39 : vector<128x128xf32>
    %41 = vector.broadcast %9 : vector<1x128xf32> to vector<128x128xf32>
    %42 = arith.addf %40, %41 : vector<128x128xf32>
    %43 = arith.mulf %42, %42 : vector<128x128xf32>
    %44 = arith.mulf %42, %43 : vector<128x128xf32>
    %cst_19 = arith.constant 4.471500e-02 : f32
    %45 = vector.broadcast %cst_19 : f32 to vector<128x128xf32>
    %46 = arith.mulf %45, %44 : vector<128x128xf32>
    %47 = arith.addf %42, %46 : vector<128x128xf32>
    %cst_20 = arith.constant 0.797884583 : f32
    %48 = vector.broadcast %cst_20 : f32 to vector<128x128xf32>
    %49 = arith.mulf %48, %47 : vector<128x128xf32>
    %50 = math.tanh %49 : vector<128x128xf32>
    %cst_21 = arith.constant 1.000000e+00 : f32
    %51 = vector.broadcast %cst_21 : f32 to vector<128x128xf32>
    %52 = arith.addf %51, %50 : vector<128x128xf32>
    %cst_22 = arith.constant 5.000000e-01 : f32
    %53 = vector.broadcast %cst_22 : f32 to vector<128x128xf32>
    %54 = arith.mulf %53, %52 : vector<128x128xf32>
    %55 = arith.mulf %42, %54 : vector<128x128xf32>
    %56 = arith.truncf %55 : vector<128x128xf32> to vector<128x128xbf16>
    %cst_23 = arith.constant dense<0.000000e+00> : vector<128x256xf32>
    %57 = tpu.matmul %56, %10, %cst_23 {dimension_numbers = #tpu.dot_dimension_numbers<[1], [0], [0], [1], [0, 0, 1, 1], [], []>} : vector<128x128xbf16>, vector<128x256xbf16>, vector<128x256xf32> -> vector<128x256xf32>
    %58 = vector.broadcast %11 : vector<1x256xf32> to vector<128x256xf32>
    %59 = arith.addf %57, %58 : vector<128x256xf32>
    %c128_i32 = arith.constant 128 : i32
    %60 = arith.muli %arg1, %c128_i32 : i32
    %61 = tpu.iota {dimensions = array<i32: 0>} : vector<128x1xi32>
    %62 = vector.broadcast %60 : i32 to vector<128x1xi32>
    %63 = arith.addi %62, %61 : vector<128x1xi32>
    %c250_i32 = arith.constant 250 : i32
    %64 = vector.broadcast %c250_i32 : i32 to vector<128x1xi32>
    %65 = arith.cmpi slt, %63, %64 : vector<128x1xi32>
    %cst_24 = arith.constant 0.000000e+00 : f32
    %66 = vector.shape_cast %65 : vector<128x1xi1> to vector<128x1xi1>
    %67 = vector.broadcast %66 : vector<128x1xi1> to vector<128x256xi1>
    %68 = vector.broadcast %cst_24 : f32 to vector<128x256xf32>
    %69 = arith.select %67, %59, %68 : vector<128x256xi1>, vector<128x256xf32>
    %cst_25 = arith.constant dense<0.000000e+00> : vector<256xf32>
    %70 = vector.multi_reduction <add>, %69, %cst_25 [0] : vector<128x256xf32> to vector<256xf32>
    %71 = vector.shape_cast %70 : vector<256xf32> to vector<1x256xf32>
    %72 = arith.mulf %69, %69 : vector<128x256xf32>
    %cst_26 = arith.constant dense<0.000000e+00> : vector<256xf32>
    %73 = vector.multi_reduction <add>, %72, %cst_26 [0] : vector<128x256xf32> to vector<256xf32>
    %74 = vector.shape_cast %73 : vector<256xf32> to vector<1x256xf32>
    %75 = tpu.concatenate %71, %74 in 0 : vector<1x256xf32>, vector<1x256xf32> -> vector<2x256xf32>
    %c0_27 = arith.constant 0 : index
    %c0_28 = arith.constant 0 : index
    %c0_29 = arith.constant 0 : index
    %76 = vector.load %arg8[%c0_27, %c0_28, %c0_29] : memref<1x2x256xf32, #tpu.memory_space<vmem>>, vector<1x2x256xf32>
    %77 = vector.shape_cast %75 : vector<2x256xf32> to vector<1x2x256xf32>
    %78 = arith.addf %76, %77 : vector<1x2x256xf32>
    %c0_30 = arith.constant 0 : index
    %c0_31 = arith.constant 0 : index
    %c0_32 = arith.constant 0 : index
    %79 = vector.load %arg8[%c0_30, %c0_31, %c0_32] : memref<1x2x256xf32, #tpu.memory_space<vmem>>, vector<1x2x256xf32>
    tpu.vector_store %arg8[%c0_30, %c0_31, %c0_32], %78 {strides = array<i32>} : memref<1x2x256xf32, #tpu.memory_space<vmem>>, vector<1x2x256xf32>,
    return
  }
  func.func @transform_0(%arg0: i32, %arg1: i32) -> (i32, i32, i32) {
    %c0_i32 = arith.constant 0 : i32
    %c0_i32_0 = arith.constant 0 : i32
    return %arg0, %arg1, %c0_i32 : i32, i32, i32
  }
  func.func @transform_1(%arg0: i32, %arg1: i32) -> (i32, i32, i32) {
    %c0_i32 = arith.constant 0 : i32
    %c0_i32_0 = arith.constant 0 : i32
    %c0_i32_1 = arith.constant 0 : i32
    return %arg0, %c0_i32, %c0_i32_0 : i32, i32, i32
  }
  func.func @transform_2(%arg0: i32, %arg1: i32) -> (i32, i32) {
    %c0_i32 = arith.constant 0 : i32
    %c0_i32_0 = arith.constant 0 : i32
    %c0_i32_1 = arith.constant 0 : i32
    return %c0_i32, %c0_i32_0 : i32, i32
  }
  func.func @transform_3(%arg0: i32, %arg1: i32) -> (i32, i32) {
    %c0_i32 = arith.constant 0 : i32
    %c0_i32_0 = arith.constant 0 : i32
    %c0_i32_1 = arith.constant 0 : i32
    return %c0_i32, %c0_i32_0 : i32, i32
  }
  func.func @transform_4(%arg0: i32, %arg1: i32) -> (i32, i32) {
    %c0_i32 = arith.constant 0 : i32
    %c0_i32_0 = arith.constant 0 : i32
    %c0_i32_1 = arith.constant 0 : i32
    return %c0_i32, %c0_i32_0 : i32, i32
  }
  func.func @transform_5(%arg0: i32, %arg1: i32) -> (i32, i32) {
    %c0_i32 = arith.constant 0 : i32
    %c0_i32_0 = arith.constant 0 : i32
    %c0_i32_1 = arith.constant 0 : i32
    return %c0_i32, %c0_i32_0 : i32, i32
  }
  func.func @transform_6(%arg0: i32, %arg1: i32) -> (i32, i32, i32) {
    %c0_i32 = arith.constant 0 : i32
    %c0_i32_0 = arith.constant 0 : i32
    %c0_i32_1 = arith.constant 0 : i32
    return %arg0, %c0_i32, %c0_i32_0 : i32, i32, i32
  }
}

module attributes {stable_mosaic.version = 11 : i64} {
  func.func @_out_kernel(%arg0: i32, %arg1: i32, %arg2: memref<1x128x128xbf16, #tpu.memory_space<vmem>>, %arg3: memref<1x2x128xf32, #tpu.memory_space<vmem>>, %arg4: memref<1x128xf32, #tpu.memory_space<vmem>>, %arg5: memref<1x128xf32, #tpu.memory_space<vmem>>, %arg6: memref<128x256xbf16, #tpu.memory_space<vmem>>, %arg7: memref<1x256xf32, #tpu.memory_space<vmem>>, %arg8: memref<1x2x256xf32, #tpu.memory_space<vmem>>, %arg9: memref<1x256xf32, #tpu.memory_space<vmem>>, %arg10: memref<1x256xf32, #tpu.memory_space<vmem>>, %arg11: memref<1x128xf32, #tpu.memory_space<vmem>>, %arg12: memref<1x128x128xf32, #tpu.memory_space<vmem>>, %arg13: memref<1x128x128xf32, #tpu.memory_space<vmem>>) attributes {dimension_semantics = [#tpu.dimension_semantics<parallel>, #tpu.dimension_semantics<parallel>], iteration_bounds = array<i64: 2, 2>, scalar_prefetch = 0 : i64, scratch_operands = 0 : i64, tpu.core_type = #tpu.core_type<tc>, window_params = [{transform_indices = @transform_0, window_bounds = array<i64: 1, 128, 128>}, {transform_indices = @transform_1, window_bounds = array<i64: 1, 2, 128>}, {pipeline_mode = #tpu.pipeline_mode<synchronous>, transform_indices = @transform_2, window_bounds = array<i64: 1, 128>}, {pipeline_mode = #tpu.pipeline_mode<synchronous>, transform_indices = @transform_3, window_bounds = array<i64: 1, 128>}, {pipeline_mode = #tpu.pipeline_mode<synchronous>, transform_indices = @transform_4, window_bounds = array<i64: 128, 256>}, {pipeline_mode = #tpu.pipeline_mode<synchronous>, transform_indices = @transform_5, window_bounds = array<i64: 1, 256>}, {transform_indices = @transform_6, window_bounds = array<i64: 1, 2, 256>}, {pipeline_mode = #tpu.pipeline_mode<synchronous>, transform_indices = @transform_7, window_bounds = array<i64: 1, 256>}, {pipeline_mode = #tpu.pipeline_mode<synchronous>, transform_indices = @transform_8, window_bounds = array<i64: 1, 256>}, {pipeline_mode = #tpu.pipeline_mode<synchronous>, transform_indices = @transform_9, window_bounds = array<i64: 1, 128>}, {transform_indices = @transform_10, window_bounds = array<i64: 1, 128, 128>}, {transform_indices = @transform_11, window_bounds = array<i64: 1, 128, 128>}]} {
    %c0 = arith.constant 0 : index
    %c0_0 = arith.constant 0 : index
    %c0_1 = arith.constant 0 : index
    %0 = vector.load %arg2[%c0, %c0_0, %c0_1] : memref<1x128x128xbf16, #tpu.memory_space<vmem>>, vector<1x128x128xbf16>
    %1 = vector.shape_cast %0 : vector<1x128x128xbf16> to vector<128x128xbf16>
    %2 = arith.extf %1 : vector<128x128xbf16> to vector<128x128xf32>
    %c0_2 = arith.constant 0 : index
    %c0_3 = arith.constant 0 : index
    %c0_4 = arith.constant 0 : index
    %3 = vector.load %arg3[%c0_2, %c0_3, %c0_4] : memref<1x2x128xf32, #tpu.memory_space<vmem>>, vector<1x2x128xf32>
    %4 = vector.shape_cast %3 : vector<1x2x128xf32> to vector<2x128xf32>
    %c0_5 = arith.constant 0 : index
    %c0_6 = arith.constant 0 : index
    %5 = vector.load %arg4[%c0_5, %c0_6] : memref<1x128xf32, #tpu.memory_space<vmem>>, vector<1x128xf32>
    %c0_7 = arith.constant 0 : index
    %c0_8 = arith.constant 0 : index
    %6 = vector.load %arg5[%c0_7, %c0_8] : memref<1x128xf32, #tpu.memory_space<vmem>>, vector<1x128xf32>
    %c0_9 = arith.constant 0 : index
    %c0_10 = arith.constant 0 : index
    %7 = vector.load %arg6[%c0_9, %c0_10] : memref<128x256xbf16, #tpu.memory_space<vmem>>, vector<128x256xbf16>
    %c0_11 = arith.constant 0 : index
    %c0_12 = arith.constant 0 : index
    %8 = vector.load %arg7[%c0_11, %c0_12] : memref<1x256xf32, #tpu.memory_space<vmem>>, vector<1x256xf32>
    %9 = vector.extract_strided_slice %4 {offsets = [0, 0], sizes = [1, 128], strides = [1, 1]} : vector<2x128xf32> to vector<1x128xf32>
    %10 = vector.shape_cast %9 : vector<1x128xf32> to vector<1x1x128xf32>
    %cst = arith.constant dense<0.000000e+00> : vector<1xf32>
    %11 = vector.multi_reduction <add>, %10, %cst [1, 2] : vector<1x1x128xf32> to vector<1xf32>
    %12 = vector.shape_cast %11 : vector<1xf32> to vector<1x1x1xf32>
    %13 = vector.extract %12[0, 0, 0] : f32 from vector<1x1x1xf32>
    %14 = vector.broadcast %13 : f32 to vector<1x1xf32>
    %cst_13 = arith.constant 1.000000e+03 : f32
    %15 = vector.broadcast %cst_13 : f32 to vector<1x1xf32>
    %16 = arith.divf %14, %15 : vector<1x1xf32>
    %17 = vector.extract_strided_slice %4 {offsets = [1, 0], sizes = [1, 128], strides = [1, 1]} : vector<2x128xf32> to vector<1x128xf32>
    %18 = vector.shape_cast %17 : vector<1x128xf32> to vector<1x1x128xf32>
    %cst_14 = arith.constant dense<0.000000e+00> : vector<1xf32>
    %19 = vector.multi_reduction <add>, %18, %cst_14 [1, 2] : vector<1x1x128xf32> to vector<1xf32>
    %20 = vector.shape_cast %19 : vector<1xf32> to vector<1x1x1xf32>
    %21 = vector.extract %20[0, 0, 0] : f32 from vector<1x1x1xf32>
    %22 = vector.broadcast %21 : f32 to vector<1x1xf32>
    %cst_15 = arith.constant 1.000000e+03 : f32
    %23 = vector.broadcast %cst_15 : f32 to vector<1x1xf32>
    %24 = arith.divf %22, %23 : vector<1x1xf32>
    %25 = arith.mulf %16, %16 : vector<1x1xf32>
    %26 = arith.subf %24, %25 : vector<1x1xf32>
    %cst_16 = arith.constant 0.000000e+00 : f32
    %27 = vector.broadcast %cst_16 : f32 to vector<1x1xf32>
    %28 = arith.maximumf %26, %27 : vector<1x1xf32>
    %cst_17 = arith.constant 9.99999974E-6 : f32
    %29 = vector.broadcast %cst_17 : f32 to vector<1x1xf32>
    %30 = arith.addf %28, %29 : vector<1x1xf32>
    %31 = math.rsqrt %30 : vector<1x1xf32>
    %32 = vector.broadcast %16 : vector<1x1xf32> to vector<128x128xf32>
    %33 = arith.subf %2, %32 : vector<128x128xf32>
    %34 = vector.broadcast %31 : vector<1x1xf32> to vector<128x128xf32>
    %35 = arith.mulf %33, %34 : vector<128x128xf32>
    %36 = vector.broadcast %5 : vector<1x128xf32> to vector<128x128xf32>
    %37 = arith.mulf %35, %36 : vector<128x128xf32>
    %38 = vector.broadcast %6 : vector<1x128xf32> to vector<128x128xf32>
    %39 = arith.addf %37, %38 : vector<128x128xf32>
    %40 = arith.mulf %39, %39 : vector<128x128xf32>
    %41 = arith.mulf %39, %40 : vector<128x128xf32>
    %cst_18 = arith.constant 4.471500e-02 : f32
    %42 = vector.broadcast %cst_18 : f32 to vector<128x128xf32>
    %43 = arith.mulf %42, %41 : vector<128x128xf32>
    %44 = arith.addf %39, %43 : vector<128x128xf32>
    %cst_19 = arith.constant 0.797884583 : f32
    %45 = vector.broadcast %cst_19 : f32 to vector<128x128xf32>
    %46 = arith.mulf %45, %44 : vector<128x128xf32>
    %47 = math.tanh %46 : vector<128x128xf32>
    %cst_20 = arith.constant 1.000000e+00 : f32
    %48 = vector.broadcast %cst_20 : f32 to vector<128x128xf32>
    %49 = arith.addf %48, %47 : vector<128x128xf32>
    %cst_21 = arith.constant 5.000000e-01 : f32
    %50 = vector.broadcast %cst_21 : f32 to vector<128x128xf32>
    %51 = arith.mulf %50, %49 : vector<128x128xf32>
    %52 = arith.mulf %39, %51 : vector<128x128xf32>
    %53 = arith.truncf %52 : vector<128x128xf32> to vector<128x128xbf16>
    %cst_22 = arith.constant dense<0.000000e+00> : vector<128x256xf32>
    %54 = tpu.matmul %53, %7, %cst_22 {dimension_numbers = #tpu.dot_dimension_numbers<[1], [0], [0], [1], [0, 0, 1, 1], [], []>} : vector<128x128xbf16>, vector<128x256xbf16>, vector<128x256xf32> -> vector<128x256xf32>
    %55 = vector.broadcast %8 : vector<1x256xf32> to vector<128x256xf32>
    %56 = arith.addf %54, %55 : vector<128x256xf32>
    %c0_23 = arith.constant 0 : index
    %c0_24 = arith.constant 0 : index
    %c0_25 = arith.constant 0 : index
    %57 = vector.load %arg8[%c0_23, %c0_24, %c0_25] : memref<1x2x256xf32, #tpu.memory_space<vmem>>, vector<1x2x256xf32>
    %58 = vector.shape_cast %57 : vector<1x2x256xf32> to vector<2x256xf32>
    %59 = vector.extract_strided_slice %58 {offsets = [0, 0], sizes = [1, 256], strides = [1, 1]} : vector<2x256xf32> to vector<1x256xf32>
    %60 = vector.shape_cast %59 : vector<1x256xf32> to vector<1x1x256xf32>
    %cst_26 = arith.constant dense<0.000000e+00> : vector<1xf32>
    %61 = vector.multi_reduction <add>, %60, %cst_26 [1, 2] : vector<1x1x256xf32> to vector<1xf32>
    %62 = vector.shape_cast %61 : vector<1xf32> to vector<1x1x1xf32>
    %63 = vector.extract %62[0, 0, 0] : f32 from vector<1x1x1xf32>
    %64 = vector.broadcast %63 : f32 to vector<1x1xf32>
    %cst_27 = arith.constant 8.000000e+03 : f32
    %65 = vector.broadcast %cst_27 : f32 to vector<1x1xf32>
    %66 = arith.divf %64, %65 : vector<1x1xf32>
    %67 = vector.extract_strided_slice %58 {offsets = [1, 0], sizes = [1, 256], strides = [1, 1]} : vector<2x256xf32> to vector<1x256xf32>
    %68 = vector.shape_cast %67 : vector<1x256xf32> to vector<1x1x256xf32>
    %cst_28 = arith.constant dense<0.000000e+00> : vector<1xf32>
    %69 = vector.multi_reduction <add>, %68, %cst_28 [1, 2] : vector<1x1x256xf32> to vector<1xf32>
    %70 = vector.shape_cast %69 : vector<1xf32> to vector<1x1x1xf32>
    %71 = vector.extract %70[0, 0, 0] : f32 from vector<1x1x1xf32>
    %72 = vector.broadcast %71 : f32 to vector<1x1xf32>
    %cst_29 = arith.constant 8.000000e+03 : f32
    %73 = vector.broadcast %cst_29 : f32 to vector<1x1xf32>
    %74 = arith.divf %72, %73 : vector<1x1xf32>
    %75 = arith.mulf %66, %66 : vector<1x1xf32>
    %76 = arith.subf %74, %75 : vector<1x1xf32>
    %cst_30 = arith.constant 0.000000e+00 : f32
    %77 = vector.broadcast %cst_30 : f32 to vector<1x1xf32>
    %78 = arith.maximumf %76, %77 : vector<1x1xf32>
    %cst_31 = arith.constant 9.99999974E-6 : f32
    %79 = vector.broadcast %cst_31 : f32 to vector<1x1xf32>
    %80 = arith.addf %78, %79 : vector<1x1xf32>
    %81 = math.rsqrt %80 : vector<1x1xf32>
    %82 = vector.broadcast %66 : vector<1x1xf32> to vector<128x256xf32>
    %83 = arith.subf %56, %82 : vector<128x256xf32>
    %84 = vector.broadcast %81 : vector<1x1xf32> to vector<128x256xf32>
    %85 = arith.mulf %83, %84 : vector<128x256xf32>
    %c0_32 = arith.constant 0 : index
    %c0_33 = arith.constant 0 : index
    %86 = vector.load %arg9[%c0_32, %c0_33] : memref<1x256xf32, #tpu.memory_space<vmem>>, vector<1x256xf32>
    %87 = vector.broadcast %86 : vector<1x256xf32> to vector<128x256xf32>
    %88 = arith.mulf %85, %87 : vector<128x256xf32>
    %c0_34 = arith.constant 0 : index
    %c0_35 = arith.constant 0 : index
    %89 = vector.load %arg10[%c0_34, %c0_35] : memref<1x256xf32, #tpu.memory_space<vmem>>, vector<1x256xf32>
    %90 = vector.broadcast %89 : vector<1x256xf32> to vector<128x256xf32>
    %91 = arith.addf %88, %90 : vector<128x256xf32>
    %92 = vector.extract_strided_slice %91 {offsets = [0, 0], sizes = [128, 128], strides = [1, 1]} : vector<128x256xf32> to vector<128x128xf32>
    %93 = vector.extract_strided_slice %91 {offsets = [0, 128], sizes = [128, 128], strides = [1, 1]} : vector<128x256xf32> to vector<128x128xf32>
    %94 = arith.negf %93 : vector<128x128xf32>
    %95 = math.exp %94 : vector<128x128xf32>
    %cst_36 = arith.constant 1.000000e+00 : f32
    %96 = vector.broadcast %cst_36 : f32 to vector<128x128xf32>
    %97 = arith.addf %96, %95 : vector<128x128xf32>
    %98 = arith.divf %96, %97 : vector<128x128xf32>
    %99 = arith.mulf %92, %98 : vector<128x128xf32>
    %c0_37 = arith.constant 0 : index
    %c0_38 = arith.constant 0 : index
    %c0_39 = arith.constant 0 : index
    %100 = vector.load %arg12[%c0_37, %c0_38, %c0_39] : memref<1x128x128xf32, #tpu.memory_space<vmem>>, vector<1x128x128xf32>
    %101 = vector.shape_cast %100 : vector<1x128x128xf32> to vector<128x128xf32>
    %c0_40 = arith.constant 0 : index
    %c0_41 = arith.constant 0 : index
    %102 = vector.load %arg11[%c0_40, %c0_41] : memref<1x128xf32, #tpu.memory_space<vmem>>, vector<1x128xf32>
    %103 = vector.broadcast %102 : vector<1x128xf32> to vector<128x128xf32>
    %104 = arith.mulf %99, %103 : vector<128x128xf32>
    %105 = arith.addf %101, %104 : vector<128x128xf32>
    %c128_i32 = arith.constant 128 : i32
    %106 = arith.muli %arg1, %c128_i32 : i32
    %107 = tpu.iota {dimensions = array<i32: 0>} : vector<128x1xi32>
    %108 = vector.broadcast %106 : i32 to vector<128x1xi32>
    %109 = arith.addi %108, %107 : vector<128x1xi32>
    %c250_i32 = arith.constant 250 : i32
    %110 = vector.broadcast %c250_i32 : i32 to vector<128x1xi32>
    %111 = arith.cmpi slt, %109, %110 : vector<128x1xi32>
    %cst_42 = arith.constant 0.000000e+00 : f32
    %112 = vector.shape_cast %111 : vector<128x1xi1> to vector<128x1xi1>
    %113 = vector.broadcast %112 : vector<128x1xi1> to vector<128x128xi1>
    %114 = vector.broadcast %cst_42 : f32 to vector<128x128xf32>
    %115 = arith.select %113, %105, %114 : vector<128x128xi1>, vector<128x128xf32>
    %116 = vector.shape_cast %115 : vector<128x128xf32> to vector<1x128x128xf32>
    %c0_43 = arith.constant 0 : index
    %c0_44 = arith.constant 0 : index
    %c0_45 = arith.constant 0 : index
    %117 = vector.load %arg13[%c0_43, %c0_44, %c0_45] : memref<1x128x128xf32, #tpu.memory_space<vmem>>, vector<1x128x128xf32>
    tpu.vector_store %arg13[%c0_43, %c0_44, %c0_45], %116 {strides = array<i32>} : memref<1x128x128xf32, #tpu.memory_space<vmem>>, vector<1x128x128xf32>,
    return
  }
  func.func @transform_0(%arg0: i32, %arg1: i32) -> (i32, i32, i32) {
    %c0_i32 = arith.constant 0 : i32
    %c0_i32_0 = arith.constant 0 : i32
    return %arg0, %arg1, %c0_i32 : i32, i32, i32
  }
  func.func @transform_1(%arg0: i32, %arg1: i32) -> (i32, i32, i32) {
    %c0_i32 = arith.constant 0 : i32
    %c0_i32_0 = arith.constant 0 : i32
    %c0_i32_1 = arith.constant 0 : i32
    return %arg0, %c0_i32, %c0_i32_0 : i32, i32, i32
  }
  func.func @transform_2(%arg0: i32, %arg1: i32) -> (i32, i32) {
    %c0_i32 = arith.constant 0 : i32
    %c0_i32_0 = arith.constant 0 : i32
    %c0_i32_1 = arith.constant 0 : i32
    return %c0_i32, %c0_i32_0 : i32, i32
  }
  func.func @transform_3(%arg0: i32, %arg1: i32) -> (i32, i32) {
    %c0_i32 = arith.constant 0 : i32
    %c0_i32_0 = arith.constant 0 : i32
    %c0_i32_1 = arith.constant 0 : i32
    return %c0_i32, %c0_i32_0 : i32, i32
  }
  func.func @transform_4(%arg0: i32, %arg1: i32) -> (i32, i32) {
    %c0_i32 = arith.constant 0 : i32
    %c0_i32_0 = arith.constant 0 : i32
    %c0_i32_1 = arith.constant 0 : i32
    return %c0_i32, %c0_i32_0 : i32, i32
  }
  func.func @transform_5(%arg0: i32, %arg1: i32) -> (i32, i32) {
    %c0_i32 = arith.constant 0 : i32
    %c0_i32_0 = arith.constant 0 : i32
    %c0_i32_1 = arith.constant 0 : i32
    return %c0_i32, %c0_i32_0 : i32, i32
  }
  func.func @transform_6(%arg0: i32, %arg1: i32) -> (i32, i32, i32) {
    %c0_i32 = arith.constant 0 : i32
    %c0_i32_0 = arith.constant 0 : i32
    %c0_i32_1 = arith.constant 0 : i32
    return %arg0, %c0_i32, %c0_i32_0 : i32, i32, i32
  }
  func.func @transform_7(%arg0: i32, %arg1: i32) -> (i32, i32) {
    %c0_i32 = arith.constant 0 : i32
    %c0_i32_0 = arith.constant 0 : i32
    %c0_i32_1 = arith.constant 0 : i32
    return %c0_i32, %c0_i32_0 : i32, i32
  }
  func.func @transform_8(%arg0: i32, %arg1: i32) -> (i32, i32) {
    %c0_i32 = arith.constant 0 : i32
    %c0_i32_0 = arith.constant 0 : i32
    %c0_i32_1 = arith.constant 0 : i32
    return %c0_i32, %c0_i32_0 : i32, i32
  }
  func.func @transform_9(%arg0: i32, %arg1: i32) -> (i32, i32) {
    %c0_i32 = arith.constant 0 : i32
    %c0_i32_0 = arith.constant 0 : i32
    %c0_i32_1 = arith.constant 0 : i32
    return %c0_i32, %c0_i32_0 : i32, i32
  }
  func.func @transform_10(%arg0: i32, %arg1: i32) -> (i32, i32, i32) {
    %c1_i32 = arith.constant 1 : i32
    %0 = arith.addi %arg1, %c1_i32 : i32
    %c0_i32 = arith.constant 0 : i32
    %c0_i32_0 = arith.constant 0 : i32
    return %arg0, %0, %c0_i32 : i32, i32, i32
  }
  func.func @transform_11(%arg0: i32, %arg1: i32) -> (i32, i32, i32) {
    %c1_i32 = arith.constant 1 : i32
    %0 = arith.addi %arg1, %c1_i32 : i32
    %c0_i32 = arith.constant 0 : i32
    %c0_i32_0 = arith.constant 0 : i32
    return %arg0, %0, %c0_i32 : i32, i32, i32
  }
}

module attributes {stable_mosaic.version = 11 : i64} {
  func.func @_conv1_stats_kernel(%arg0: i32, %arg1: i32, %arg2: memref<2x512x128xf32, #tpu.memory_space<any>>, %arg3: memref<384x128xbf16, #tpu.memory_space<vmem>>, %arg4: memref<1x128xf32, #tpu.memory_space<vmem>>, %arg5: memref<1x128x128xbf16, #tpu.memory_space<vmem>>, %arg6: memref<1x2x128xf32, #tpu.memory_space<vmem>>, %arg7: memref<2x132x128xf32, #tpu.memory_space<vmem>>, %arg8: memref<2x!tpu.dma_semaphore, #tpu.memory_space<semaphore_mem>>) attributes {dimension_semantics = [#tpu.dimension_semantics<parallel>, #tpu.dimension_semantics<arbitrary>], iteration_bounds = array<i64: 2, 2>, scalar_prefetch = 0 : i64, scratch_operands = 2 : i64, tpu.core_type = #tpu.core_type<tc>, window_params = [{}, {pipeline_mode = #tpu.pipeline_mode<synchronous>, transform_indices = @transform_1, window_bounds = array<i64: 384, 128>}, {pipeline_mode = #tpu.pipeline_mode<synchronous>, transform_indices = @transform_2, window_bounds = array<i64: 1, 128>}, {transform_indices = @transform_3, window_bounds = array<i64: 1, 128, 128>}, {transform_indices = @transform_4, window_bounds = array<i64: 1, 2, 128>}]} {
    %c0_i32 = arith.constant 0 : i32
    %0 = arith.cmpi eq, %arg1, %c0_i32 : i32
    %1 = arith.extui %0 : i1 to i32
    %c0_i32_0 = arith.constant 0 : i32
    %2 = arith.cmpi ne, %1, %c0_i32_0 : i32
    scf.if %2 {
      %c0_i32_31 = arith.constant 0 : i32
      %c0_i32_32 = arith.constant 0 : i32
      %c126_i32 = arith.constant 126 : i32
      %c0_i32_33 = arith.constant 0 : i32
      %63 = tpu.memref_slice %arg2[%arg0, %c126_i32, %c0_i32_33] : memref<2x512x128xf32, #tpu.memory_space<any>> -> memref<1x132x128xf32, #tpu.memory_space<any>>
      %64 = tpu.memref_squeeze %63 : memref<1x132x128xf32, #tpu.memory_space<any>> -> memref<132x128xf32, #tpu.memory_space<any>>
      %c0_i32_34 = arith.constant 0 : i32
      %c0_i32_35 = arith.constant 0 : i32
      %65 = tpu.memref_slice %arg7[%c0_i32_31, %c0_i32_34, %c0_i32_35] : memref<2x132x128xf32, #tpu.memory_space<vmem>> -> memref<1x132x128xf32, #tpu.memory_space<vmem>>
      %66 = tpu.memref_squeeze %65 : memref<1x132x128xf32, #tpu.memory_space<vmem>> -> memref<132x128xf32, #tpu.memory_space<vmem>>
      %67 = tpu.memref_slice %arg8[%c0_i32_32] : memref<2x!tpu.dma_semaphore, #tpu.memory_space<semaphore_mem>> -> memref<1x!tpu.dma_semaphore, #tpu.memory_space<semaphore_mem>>
      %68 = tpu.memref_squeeze %67 : memref<1x!tpu.dma_semaphore, #tpu.memory_space<semaphore_mem>> -> memref<!tpu.dma_semaphore, #tpu.memory_space<semaphore_mem>>
      tpu.enqueue_dma source(%64 : memref<132x128xf32, #tpu.memory_space<any>>) target(%66 : memref<132x128xf32, #tpu.memory_space<vmem>>) target_semaphore(%68 : memref<!tpu.dma_semaphore, #tpu.memory_space<semaphore_mem>>)
      %cst_36 = arith.constant 0.000000e+00 : f32
      %69 = vector.broadcast %cst_36 : f32 to vector<1x2x128xf32>
      %c0_37 = arith.constant 0 : index
      %c0_38 = arith.constant 0 : index
      %c0_39 = arith.constant 0 : index
      %70 = vector.load %arg6[%c0_37, %c0_38, %c0_39] : memref<1x2x128xf32, #tpu.memory_space<vmem>>, vector<1x2x128xf32>
      tpu.vector_store %arg6[%c0_37, %c0_38, %c0_39], %69 {strides = array<i32>} : memref<1x2x128xf32, #tpu.memory_space<vmem>>, vector<1x2x128xf32>,
    } else {
    }
    %c2_i32 = arith.constant 2 : i32
    %c0_i32_1 = arith.constant 0 : i32
    %3 = arith.cmpi eq, %c2_i32, %c0_i32_1 : i32
    %c1_i32 = arith.constant 1 : i32
    %4 = arith.select %3, %c1_i32, %c2_i32 : i32
    %5 = arith.remsi %arg1, %4 : i32
    %c0_i32_2 = arith.constant 0 : i32
    %6 = arith.cmpi ne, %5, %c0_i32_2 : i32
    %c0_i32_3 = arith.constant 0 : i32
    %7 = arith.cmpi slt, %5, %c0_i32_3 : i32
    %c0_i32_4 = arith.constant 0 : i32
    %8 = arith.cmpi slt, %4, %c0_i32_4 : i32
    %9 = arith.xori %7, %8 : i1
    %10 = arith.andi %9, %6 : i1
    %11 = arith.addi %5, %4 : i32
    %12 = arith.select %10, %11, %5 : i32
    %c1_i32_5 = arith.constant 1 : i32
    %13 = arith.addi %arg1, %c1_i32_5 : i32
    %c2_i32_6 = arith.constant 2 : i32
    %14 = arith.cmpi slt, %13, %c2_i32_6 : i32
    %15 = arith.extui %14 : i1 to i32
    %c0_i32_7 = arith.constant 0 : i32
    %16 = arith.cmpi ne, %15, %c0_i32_7 : i32
    scf.if %16 {
      %c1_i32_31 = arith.constant 1 : i32
      %63 = arith.addi %arg1, %c1_i32_31 : i32
      %c1_i32_32 = arith.constant 1 : i32
      %64 = arith.addi %arg1, %c1_i32_32 : i32
      %c2_i32_33 = arith.constant 2 : i32
      %c0_i32_34 = arith.constant 0 : i32
      %65 = arith.cmpi eq, %c2_i32_33, %c0_i32_34 : i32
      %c1_i32_35 = arith.constant 1 : i32
      %66 = arith.select %65, %c1_i32_35, %c2_i32_33 : i32
      %67 = arith.remsi %64, %66 : i32
      %c0_i32_36 = arith.constant 0 : i32
      %68 = arith.cmpi ne, %67, %c0_i32_36 : i32
      %c0_i32_37 = arith.constant 0 : i32
      %69 = arith.cmpi slt, %67, %c0_i32_37 : i32
      %c0_i32_38 = arith.constant 0 : i32
      %70 = arith.cmpi slt, %66, %c0_i32_38 : i32
      %71 = arith.xori %69, %70 : i1
      %72 = arith.andi %71, %68 : i1
      %73 = arith.addi %67, %66 : i32
      %74 = arith.select %72, %73, %67 : i32
      %c1_i32_39 = arith.constant 1 : i32
      %75 = arith.addi %63, %c1_i32_39 : i32
      %c128_i32_40 = arith.constant 128 : i32
      %76 = arith.muli %75, %c128_i32_40 : i32
      %c2_i32_41 = arith.constant 2 : i32
      %77 = arith.subi %76, %c2_i32_41 : i32
      %c0_i32_42 = arith.constant 0 : i32
      %78 = tpu.memref_slice %arg2[%arg0, %77, %c0_i32_42] : memref<2x512x128xf32, #tpu.memory_space<any>> -> memref<1x132x128xf32, #tpu.memory_space<any>>
      %79 = tpu.memref_squeeze %78 : memref<1x132x128xf32, #tpu.memory_space<any>> -> memref<132x128xf32, #tpu.memory_space<any>>
      %c0_i32_43 = arith.constant 0 : i32
      %c0_i32_44 = arith.constant 0 : i32
      %80 = tpu.memref_slice %arg7[%74, %c0_i32_43, %c0_i32_44] : memref<2x132x128xf32, #tpu.memory_space<vmem>> -> memref<1x132x128xf32, #tpu.memory_space<vmem>>
      %81 = tpu.memref_squeeze %80 : memref<1x132x128xf32, #tpu.memory_space<vmem>> -> memref<132x128xf32, #tpu.memory_space<vmem>>
      %82 = tpu.memref_slice %arg8[%74] : memref<2x!tpu.dma_semaphore, #tpu.memory_space<semaphore_mem>> -> memref<1x!tpu.dma_semaphore, #tpu.memory_space<semaphore_mem>>
      %83 = tpu.memref_squeeze %82 : memref<1x!tpu.dma_semaphore, #tpu.memory_space<semaphore_mem>> -> memref<!tpu.dma_semaphore, #tpu.memory_space<semaphore_mem>>
      tpu.enqueue_dma source(%79 : memref<132x128xf32, #tpu.memory_space<any>>) target(%81 : memref<132x128xf32, #tpu.memory_space<vmem>>) target_semaphore(%83 : memref<!tpu.dma_semaphore, #tpu.memory_space<semaphore_mem>>)
    } else {
    }
    %c1_i32_8 = arith.constant 1 : i32
    %17 = arith.addi %arg1, %c1_i32_8 : i32
    %c128_i32 = arith.constant 128 : i32
    %18 = arith.muli %17, %c128_i32 : i32
    %c2_i32_9 = arith.constant 2 : i32
    %19 = arith.subi %18, %c2_i32_9 : i32
    %c0_i32_10 = arith.constant 0 : i32
    %20 = tpu.memref_slice %arg2[%arg0, %19, %c0_i32_10] : memref<2x512x128xf32, #tpu.memory_space<any>> -> memref<1x132x128xf32, #tpu.memory_space<any>>
    %21 = tpu.memref_squeeze %20 : memref<1x132x128xf32, #tpu.memory_space<any>> -> memref<132x128xf32, #tpu.memory_space<any>>
    %c0_i32_11 = arith.constant 0 : i32
    %c0_i32_12 = arith.constant 0 : i32
    %22 = tpu.memref_slice %arg7[%12, %c0_i32_11, %c0_i32_12] : memref<2x132x128xf32, #tpu.memory_space<vmem>> -> memref<1x132x128xf32, #tpu.memory_space<vmem>>
    %23 = tpu.memref_squeeze %22 : memref<1x132x128xf32, #tpu.memory_space<vmem>> -> memref<132x128xf32, #tpu.memory_space<vmem>>
    %24 = tpu.memref_slice %arg8[%12] : memref<2x!tpu.dma_semaphore, #tpu.memory_space<semaphore_mem>> -> memref<1x!tpu.dma_semaphore, #tpu.memory_space<semaphore_mem>>
    %25 = tpu.memref_squeeze %24 : memref<1x!tpu.dma_semaphore, #tpu.memory_space<semaphore_mem>> -> memref<!tpu.dma_semaphore, #tpu.memory_space<semaphore_mem>>
    tpu.wait_dma2 semaphore(%25 : memref<!tpu.dma_semaphore, #tpu.memory_space<semaphore_mem>>) src(%21 : memref<132x128xf32, #tpu.memory_space<any>>) dst(%23 : memref<132x128xf32, #tpu.memory_space<vmem>>)
    %26 = arith.index_cast %12 : i32 to index
    %c0 = arith.constant 0 : index
    %c0_13 = arith.constant 0 : index
    %27 = vector.load %arg7[%26, %c0, %c0_13] : memref<2x132x128xf32, #tpu.memory_space<vmem>>, vector<1x132x128xf32>
    %28 = vector.shape_cast %27 : vector<1x132x128xf32> to vector<132x128xf32>
    %29 = arith.truncf %28 : vector<132x128xf32> to vector<132x128xbf16>
    %30 = vector.extract_strided_slice %29 {offsets = [0, 0], sizes = [128, 128], strides = [1, 1]} : vector<132x128xbf16> to vector<128x128xbf16>
    %31 = vector.extract_strided_slice %29 {offsets = [2, 0], sizes = [128, 128], strides = [1, 1]} : vector<132x128xbf16> to vector<128x128xbf16>
    %32 = vector.extract_strided_slice %29 {offsets = [4, 0], sizes = [128, 128], strides = [1, 1]} : vector<132x128xbf16> to vector<128x128xbf16>
    %33 = tpu.concatenate %30, %31, %32 in 1 : vector<128x128xbf16>, vector<128x128xbf16>, vector<128x128xbf16> -> vector<128x384xbf16>
    %c0_14 = arith.constant 0 : index
    %c0_15 = arith.constant 0 : index
    %34 = vector.load %arg3[%c0_14, %c0_15] : memref<384x128xbf16, #tpu.memory_space<vmem>>, vector<384x128xbf16>
    %cst = arith.constant dense<0.000000e+00> : vector<128x128xf32>
    %35 = tpu.matmul %33, %34, %cst {dimension_numbers = #tpu.dot_dimension_numbers<[1], [0], [0], [1], [0, 0, 1, 1], [], []>} : vector<128x384xbf16>, vector<384x128xbf16>, vector<128x128xf32> -> vector<128x128xf32>
    %c0_16 = arith.constant 0 : index
    %c0_17 = arith.constant 0 : index
    %36 = vector.load %arg4[%c0_16, %c0_17] : memref<1x128xf32, #tpu.memory_space<vmem>>, vector<1x128xf32>
    %37 = vector.broadcast %36 : vector<1x128xf32> to vector<128x128xf32>
    %38 = arith.addf %35, %37 : vector<128x128xf32>
    %39 = arith.truncf %38 : vector<128x128xf32> to vector<128x128xbf16>
    %40 = vector.shape_cast %39 : vector<128x128xbf16> to vector<1x128x128xbf16>
    %c0_18 = arith.constant 0 : index
    %c0_19 = arith.constant 0 : index
    %c0_20 = arith.constant 0 : index
    %41 = vector.load %arg5[%c0_18, %c0_19, %c0_20] : memref<1x128x128xbf16, #tpu.memory_space<vmem>>, vector<1x128x128xbf16>
    tpu.vector_store %arg5[%c0_18, %c0_19, %c0_20], %40 {strides = array<i32>} : memref<1x128x128xbf16, #tpu.memory_space<vmem>>, vector<1x128x128xbf16>,
    %42 = arith.extf %39 : vector<128x128xbf16> to vector<128x128xf32>
    %c128_i32_21 = arith.constant 128 : i32
    %43 = arith.muli %arg1, %c128_i32_21 : i32
    %44 = tpu.iota {dimensions = array<i32: 0>} : vector<128x1xi32>
    %45 = vector.broadcast %43 : i32 to vector<128x1xi32>
    %46 = arith.addi %45, %44 : vector<128x1xi32>
    %c250_i32 = arith.constant 250 : i32
    %47 = vector.broadcast %c250_i32 : i32 to vector<128x1xi32>
    %48 = arith.cmpi slt, %46, %47 : vector<128x1xi32>
    %cst_22 = arith.constant 0.000000e+00 : f32
    %49 = vector.shape_cast %48 : vector<128x1xi1> to vector<128x1xi1>
    %50 = vector.broadcast %49 : vector<128x1xi1> to vector<128x128xi1>
    %51 = vector.broadcast %cst_22 : f32 to vector<128x128xf32>
    %52 = arith.select %50, %42, %51 : vector<128x128xi1>, vector<128x128xf32>
    %cst_23 = arith.constant dense<0.000000e+00> : vector<128xf32>
    %53 = vector.multi_reduction <add>, %52, %cst_23 [0] : vector<128x128xf32> to vector<128xf32>
    %54 = vector.shape_cast %53 : vector<128xf32> to vector<1x128xf32>
    %55 = arith.mulf %52, %52 : vector<128x128xf32>
    %cst_24 = arith.constant dense<0.000000e+00> : vector<128xf32>
    %56 = vector.multi_reduction <add>, %55, %cst_24 [0] : vector<128x128xf32> to vector<128xf32>
    %57 = vector.shape_cast %56 : vector<128xf32> to vector<1x128xf32>
    %58 = tpu.concatenate %54, %57 in 0 : vector<1x128xf32>, vector<1x128xf32> -> vector<2x128xf32>
    %c0_25 = arith.constant 0 : index
    %c0_26 = arith.constant 0 : index
    %c0_27 = arith.constant 0 : index
    %59 = vector.load %arg6[%c0_25, %c0_26, %c0_27] : memref<1x2x128xf32, #tpu.memory_space<vmem>>, vector<1x2x128xf32>
    %60 = vector.shape_cast %58 : vector<2x128xf32> to vector<1x2x128xf32>
    %61 = arith.addf %59, %60 : vector<1x2x128xf32>
    %c0_28 = arith.constant 0 : index
    %c0_29 = arith.constant 0 : index
    %c0_30 = arith.constant 0 : index
    %62 = vector.load %arg6[%c0_28, %c0_29, %c0_30] : memref<1x2x128xf32, #tpu.memory_space<vmem>>, vector<1x2x128xf32>
    tpu.vector_store %arg6[%c0_28, %c0_29, %c0_30], %61 {strides = array<i32>} : memref<1x2x128xf32, #tpu.memory_space<vmem>>, vector<1x2x128xf32>,
    return
  }
  func.func @transform_1(%arg0: i32, %arg1: i32) -> (i32, i32) {
    %c0_i32 = arith.constant 0 : i32
    %c0_i32_0 = arith.constant 0 : i32
    %c0_i32_1 = arith.constant 0 : i32
    return %c0_i32, %c0_i32_0 : i32, i32
  }
  func.func @transform_2(%arg0: i32, %arg1: i32) -> (i32, i32) {
    %c0_i32 = arith.constant 0 : i32
    %c0_i32_0 = arith.constant 0 : i32
    %c0_i32_1 = arith.constant 0 : i32
    return %c0_i32, %c0_i32_0 : i32, i32
  }
  func.func @transform_3(%arg0: i32, %arg1: i32) -> (i32, i32, i32) {
    %c0_i32 = arith.constant 0 : i32
    %c0_i32_0 = arith.constant 0 : i32
    return %arg0, %arg1, %c0_i32 : i32, i32, i32
  }
  func.func @transform_4(%arg0: i32, %arg1: i32) -> (i32, i32, i32) {
    %c0_i32 = arith.constant 0 : i32
    %c0_i32_0 = arith.constant 0 : i32
    %c0_i32_1 = arith.constant 0 : i32
    return %arg0, %c0_i32, %c0_i32_0 : i32, i32, i32
  }
}

</mosaic_0001>

<llo_original>
// kernel: _lambda_.7
$region0: #{_lambda_.7}
  #allocation0 [shape = 'u32[]', space=smem, size = 0x4, offset = 0x4, fixed_abs, tag = 'smem constant byte address 0x4 - core index']
  #allocation1 [shape = 'u32[72,128]{1,0:T(1,128)}', space=vmem, size = 0x9000, scoped, tag = 'internal scratch']
  %s0 = inlined_call_operand.vmem [shape: bf16[2,256,128], index: 0, kind: input, shape index: {}]
  %s1 = inlined_call_operand.vmem [shape: f32[2,2,128], index: 1, kind: input, shape index: {}]
  %s2 = inlined_call_operand.vmem [shape: f32[1,128], index: 2, kind: input, shape index: {}]
  %s3 = inlined_call_operand.vmem [shape: f32[1,128], index: 3, kind: input, shape index: {}]
  %s4 = inlined_call_operand.vmem [shape: bf16[128,256], index: 4, kind: input, shape index: {}]
  %s5 = inlined_call_operand.vmem [shape: f32[1,256], index: 5, kind: input, shape index: {}]
  %s6 = inlined_call_operand.vmem [shape: f32[2,2,256], index: 6, kind: output, shape index: {}]
  %s7 = sld [smem:[#allocation0]]
  $region61: #{_lambda_.7} parent=0
    _
  %s9 = ssub.s32 1, %s7
  %s10 = scalar_select 0, %s9, %s7
  loop: start=0, step=1, limit=6
  $region2: #{_lambda_.7} parent=0 // loop_pre_header
    _
  $region3: #{_lambda_.7} parent=0 // loop_header
    %s12 = sphi 0, %s16
    %p13 = scmp.ge.s32.totalorder %s12, 6
    %s19 = sphi 0, %s31
    %s20 = sphi 0, %s27
    %s21 = sphi 0, %s19
    %s22 = sphi 0, %s20
    %s23 = sphi 0, %s21
    %s24 = sphi 0, %s22
    %s36 = sphi 0, %s38
    %s39 = sphi 0, %s36
    %s40 = sphi 0, %s39
    %s56 = sphi 0, %s40
    %s62 = sphi 0, %s64
    %s65 = sphi 0, %s62
    %s66 = sphi 0, %s65
    %s82 = sphi 0, %s66
    %s86 = sphi 0, %s86
    %s88 = sphi 0, %s86
    %s89 = sphi 0, %s88
    %s103 = sphi 0, %s89
    %s107 = sphi 0, %s107
    %s109 = sphi 0, %s107
    %s110 = sphi 0, %s109
    %s124 = sphi 0, %s110
    %s128 = sphi 0, %s128
    %s130 = sphi 0, %s128
    %s131 = sphi 0, %s130
    %s145 = sphi 0, %s131
    %s149 = sphi 0, %s149
    %s151 = sphi 0, %s149
    %s152 = sphi 0, %s151
    %s166 = sphi 0, %s152
    %s172 = sphi 0, %s174
    %s175 = sphi 0, %s172
    %s176 = sphi 0, %s175
    %s192 = sphi 0, %s176
  $region4: #{_lambda_.7} parent=0 // loop_header_branch
    %15 = sbr.rel (%p13) target = $region8
  $region5: #{_lambda_.7} parent=0 // loop_body
    %s17 = ssub.s32 %s12, 1
    %s18 = ssub.s32 %s12, 2
    %s25 = sadd.s32 1, %s20
    %p26 = scmp.ge.s32.totalorder %s25, 2
    %s27 = scalar_select %p26, 0, %s25
    %s28 = sadd.s32 1, %s19
    %s29 = scalar_select %p26, %s28, %s19
    %p30 = scmp.ge.s32.totalorder %s29, 2
    %s31 = scalar_select %p30, 0, %s29
    %s32 = ssub.s32 %s19, %s31
    %s33 = ssub.s32 %s20, %s27
    %s34 = sor.u32 %s32, %s33
    %p35 = scmp.eq.s32.totalorder %s34, 0
    %s37 = sadd.s32 %s36, 1
    %s38 = scalar_select %p35, %s36, %s37
    %p41 = pneg %p35
    %p42 = scmp.eq.s32.totalorder %s12, 3
    %p43 = por %p41, %p42
    %p44 = scmp.ne.s32.totalorder %s36, %s39
    %p45 = scmp.eq.s32.totalorder %s12, 0
    %p46 = por %p44, %p45
    %p47 = scmp.ne.s32.totalorder %s36, %s39
    %p48 = scmp.eq.s32.totalorder %s17, 3
    %p49 = por %p47, %p48
    %p50 = scmp.ne.s32.totalorder %s39, %s40
    %p51 = scmp.eq.s32.totalorder %s17, 0
    %p52 = por %p50, %p51
    %p53 = scmp.ne.s32.totalorder %s39, %s40
    %p54 = scmp.eq.s32.totalorder %s18, 3
    %p55 = por %p53, %p54
    %p57 = scmp.ne.s32.totalorder %s40, %s56
    %p58 = scmp.eq.s32.totalorder %s18, 0
    %p59 = por %p57, %p58
    %s60 = ssub.s32 %s19, %s31
    %p61 = scmp.eq.s32.totalorder %s60, 0
    %s63 = sadd.s32 %s62, 1
    %s64 = scalar_select %p61, %s62, %s63
    %p67 = pneg %p61
    %p68 = scmp.eq.s32.totalorder %s12, 3
    %p69 = por %p67, %p68
    %p70 = scmp.ne.s32.totalorder %s62, %s65
    %p71 = scmp.eq.s32.totalorder %s12, 0
    %p72 = por %p70, %p71
    %p73 = scmp.ne.s32.totalorder %s62, %s65
    %p74 = scmp.eq.s32.totalorder %s17, 3
    %p75 = por %p73, %p74
    %p76 = scmp.ne.s32.totalorder %s65, %s66
    %p77 = scmp.eq.s32.totalorder %s17, 0
    %p78 = por %p76, %p77
    %p79 = scmp.ne.s32.totalorder %s65, %s66
    %p80 = scmp.eq.s32.totalorder %s18, 3
    %p81 = por %p79, %p80
    %p83 = scmp.ne.s32.totalorder %s66, %s82
    %p84 = scmp.eq.s32.totalorder %s18, 0
    %p85 = por %p83, %p84
    %s87 = sadd.s32 %s86, 1
    %p90 = scmp.eq.s32.totalorder %s12, 3
    %p91 = scmp.ne.s32.totalorder %s86, %s88
    %p92 = scmp.eq.s32.totalorder %s12, 0
    %p93 = por %p91, %p92
    %p94 = scmp.ne.s32.totalorder %s86, %s88
    %p95 = scmp.eq.s32.totalorder %s17, 3
    %p96 = por %p94, %p95
    %p97 = scmp.ne.s32.totalorder %s88, %s89
    %p98 = scmp.eq.s32.totalorder %s17, 0
    %p99 = por %p97, %p98
    %p100 = scmp.ne.s32.totalorder %s88, %s89
    %p101 = scmp.eq.s32.totalorder %s18, 3
    %p102 = por %p100, %p101
    %p104 = scmp.ne.s32.totalorder %s89, %s103
    %p105 = scmp.eq.s32.totalorder %s18, 0
    %p106 = por %p104, %p105
    %s108 = sadd.s32 %s107, 1
    %p111 = scmp.eq.s32.totalorder %s12, 3
    %p112 = scmp.ne.s32.totalorder %s107, %s109
    %p113 = scmp.eq.s32.totalorder %s12, 0
    %p114 = por %p112, %p113
    %p115 = scmp.ne.s32.totalorder %s107, %s109
    %p116 = scmp.eq.s32.totalorder %s17, 3
    %p117 = por %p115, %p116
    %p118 = scmp.ne.s32.totalorder %s109, %s110
    %p119 = scmp.eq.s32.totalorder %s17, 0
    %p120 = por %p118, %p119
    %p121 = scmp.ne.s32.totalorder %s109, %s110
    %p122 = scmp.eq.s32.totalorder %s18, 3
    %p123 = por %p121, %p122
    %p125 = scmp.ne.s32.totalorder %s110, %s124
    %p126 = scmp.eq.s32.totalorder %s18, 0
    %p127 = por %p125, %p126
    %s129 = sadd.s32 %s128, 1
    %p132 = scmp.eq.s32.totalorder %s12, 3
    %p133 = scmp.ne.s32.totalorder %s128, %s130
    %p134 = scmp.eq.s32.totalorder %s12, 0
    %p135 = por %p133, %p134
    %p136 = scmp.ne.s32.totalorder %s128, %s130
    %p137 = scmp.eq.s32.totalorder %s17, 3
    %p138 = por %p136, %p137
    %p139 = scmp.ne.s32.totalorder %s130, %s131
    %p140 = scmp.eq.s32.totalorder %s17, 0
    %p141 = por %p139, %p140
    %p142 = scmp.ne.s32.totalorder %s130, %s131
    %p143 = scmp.eq.s32.totalorder %s18, 3
    %p144 = por %p142, %p143
    %p146 = scmp.ne.s32.totalorder %s131, %s145
    %p147 = scmp.eq.s32.totalorder %s18, 0
    %p148 = por %p146, %p147
    %s150 = sadd.s32 %s149, 1
    %p153 = scmp.eq.s32.totalorder %s12, 3
    %p154 = scmp.ne.s32.totalorder %s149, %s151
    %p155 = scmp.eq.s32.totalorder %s12, 0
    %p156 = por %p154, %p155
    %p157 = scmp.ne.s32.totalorder %s149, %s151
    %p158 = scmp.eq.s32.totalorder %s17, 3
    %p159 = por %p157, %p158
    %p160 = scmp.ne.s32.totalorder %s151, %s152
    %p161 = scmp.eq.s32.totalorder %s17, 0
    %p162 = por %p160, %p161
    %p163 = scmp.ne.s32.totalorder %s151, %s152
    %p164 = scmp.eq.s32.totalorder %s18, 3
    %p165 = por %p163, %p164
    %p167 = scmp.ne.s32.totalorder %s152, %s166
    %p168 = scmp.eq.s32.totalorder %s18, 0
    %p169 = por %p167, %p168
    %s170 = ssub.s32 %s19, %s31
    %p171 = scmp.eq.s32.totalorder %s170, 0
    %s173 = sadd.s32 %s172, 1
    %s174 = scalar_select %p171, %s172, %s173
    %p177 = pneg %p171
    %p178 = scmp.eq.s32.totalorder %s12, 3
    %p179 = por %p177, %p178
    %p180 = scmp.ne.s32.totalorder %s172, %s175
    %p181 = scmp.eq.s32.totalorder %s12, 0
    %p182 = por %p180, %p181
    %p183 = scmp.ne.s32.totalorder %s172, %s175
    %p184 = scmp.eq.s32.totalorder %s17, 3
    %p185 = por %p183, %p184
    %p186 = scmp.ne.s32.totalorder %s175, %s176
    %p187 = scmp.eq.s32.totalorder %s17, 0
    %p188 = por %p186, %p187
    %p189 = scmp.ne.s32.totalorder %s175, %s176
    %p190 = scmp.eq.s32.totalorder %s18, 3
    %p191 = por %p189, %p190
    %p193 = scmp.ne.s32.totalorder %s176, %s192
    %p194 = scmp.eq.s32.totalorder %s18, 0
    %p195 = por %p193, %p194
    %p196 = scmp.le.s32.totalorder 1, %s12
    %p197 = scmp.lt.s32.totalorder %s12, 5
    %p198 = pnand %p196, %p197
    %p199 = pneg %p198
    // Predicated region
    $region9: #{_lambda_.7} parent=5 // pred_check
      _
    $region10: #{_lambda_.7} parent=5 // pred_check_branch
      %201 = sbr.rel (%p198) target = $region12
    $region11: #{_lambda_.7} parent=5 // pred_region
      %s202 = ssub.s32 %s12, 1
      // Predicated region
      $region13: #{_lambda_.7} parent=11 // pred_check
        %p203 = pneg %p99
      $region14: #{_lambda_.7} parent=11 // pred_check_branch
        %205 = sbr.rel (%p203) target = $region16
      $region15: #{_lambda_.7} parent=11 // pred_region
        _
      $region16: #{_lambda_.7} parent=11 // pred_fallthru
        _
      // Predicated region
      $region17: #{_lambda_.7} parent=11 // pred_check
        %p206 = pneg %p120
      $region18: #{_lambda_.7} parent=11 // pred_check_branch
        %208 = sbr.rel (%p206) target = $region20
      $region19: #{_lambda_.7} parent=11 // pred_region
        _
      $region20: #{_lambda_.7} parent=11 // pred_fallthru
        _
      // Predicated region
      $region21: #{_lambda_.7} parent=11 // pred_check
        %p209 = pneg %p141
      $region22: #{_lambda_.7} parent=11 // pred_check_branch
        %211 = sbr.rel (%p209) target = $region24
      $region23: #{_lambda_.7} parent=11 // pred_region
        _
      $region24: #{_lambda_.7} parent=11 // pred_fallthru
        _
      // Predicated region
      $region25: #{_lambda_.7} parent=11 // pred_check
        %p212 = pneg %p162
      $region26: #{_lambda_.7} parent=11 // pred_check_branch
        %214 = sbr.rel (%p212) target = $region28
      $region27: #{_lambda_.7} parent=11 // pred_region
        _
      $region28: #{_lambda_.7} parent=11 // pred_fallthru
        _
    $region12: #{_lambda_.7} parent=5 // pred_fallthru
      _
    %p215 = scmp.lt.s32.totalorder %s12, 4
    // Predicated region
    $region29: #{_lambda_.7} parent=5 // pred_check
      %p216 = pneg %p215
    $region30: #{_lambda_.7} parent=5 // pred_check_branch
      %218 = sbr.rel (%p216) target = $region32
    $region31: #{_lambda_.7} parent=5 // pred_region
      // Predicated region
      $region33: #{_lambda_.7} parent=31 // pred_check
        %p219 = pneg %p46
      $region34: #{_lambda_.7} parent=31 // pred_check_branch
        %221 = sbr.rel (%p219) target = $region36
      $region35: #{_lambda_.7} parent=31 // pred_region
        %s222 = smul.u32 16, %s20
        %p223 = scmp.lt.s32.totalorder %s19, 1
        %s224 = scalar_select %p223, %s19, 1
        %p225 = scmp.lt.s32.totalorder %s222, 31
        %s226 = scalar_select %p225, %s222, 31
        %s227 = smul.addr %s224, 32
        %s228 = sadd.s32 %s226, %s227
        %s229 = smul.addr %s228, 4
        %s230 = scalar_lea.vmem %s0, %s229
        %s231 = smul.u32 16, %s20
      $region36: #{_lambda_.7} parent=31 // pred_fallthru
        _
      // Predicated region
      $region37: #{_lambda_.7} parent=31 // pred_check
        %p232 = pneg %p72
      $region38: #{_lambda_.7} parent=31 // pred_check_branch
        %234 = sbr.rel (%p232) target = $region40
      $region39: #{_lambda_.7} parent=31 // pred_region
        %p235 = scmp.lt.s32.totalorder %s19, 1
        %s236 = scalar_select %p235, %s19, 1
        %s237 = smul.addr %s236, 2
        %s238 = scalar_lea.vmem %s1, %s237
      $region40: #{_lambda_.7} parent=31 // pred_fallthru
        _
    $region32: #{_lambda_.7} parent=5 // pred_fallthru
      _
    %p239 = scmp.le.s32.totalorder 1, %s12
    %p240 = scmp.lt.s32.totalorder %s12, 5
    %p241 = pnand %p239, %p240
    %p242 = pneg %p241
    // Predicated region
    $region41: #{_lambda_.7} parent=5 // pred_check
      _
    $region42: #{_lambda_.7} parent=5 // pred_check_branch
      %244 = sbr.rel (%p241) target = $region44
    $region43: #{_lambda_.7} parent=5 // pred_region
      %s245 = ssub.s32 %s12, 1
      %s246 = smul.u32 16, %s22
      %p247 = scmp.lt.s32.totalorder %s21, 1
      %s248 = scalar_select %p247, %s21, 1
      %p249 = scmp.lt.s32.totalorder %s246, 31
      %s250 = scalar_select %p249, %s246, 31
      %s251 = smul.addr %s248, 32
      %s252 = sadd.s32 %s250, %s251
      %s253 = smul.addr %s252, 4
      %s254 = scalar_lea.vmem %s0, %s253
      %p255 = pneg %p52
      %p256 = pneg %p49
      %p257 = scmp.lt.s32.totalorder %s21, 1
      %s258 = scalar_select %p257, %s21, 1
      %s259 = smul.addr %s258, 2
      %s260 = scalar_lea.vmem %s1, %s259
      %p261 = pneg %p78
      %p262 = pneg %p75
      %p263 = pneg %p99
      %p264 = pneg %p96
      %p265 = pneg %p120
      %p266 = pneg %p117
      %p267 = pneg %p141
      %p268 = pneg %p138
      %p269 = pneg %p162
      %p270 = pneg %p159
      %p271 = pneg %p188
      %p272 = pneg %p185
      %p273 = scmp.lt.s32.totalorder %s21, 1
      %s274 = scalar_select %p273, %s21, 1
      %s275 = smul.addr %s274, 2
      %s276 = smul.addr %s275, 2
      %s277 = scalar_lea.vmem %s6, %s276
      %s278 = smul.u32 16, %s22
      %p279 = scmp.lt.s32.totalorder %s21, 1
      %s280 = scalar_select %p279, %s21, 1
      %p281 = scmp.lt.s32.totalorder %s278, 31
      %s282 = scalar_select %p281, %s278, 31
      %s283 = smul.addr %s280, 32
      %s284 = sadd.s32 %s282, %s283
      %s285 = smul.addr %s284, 4
      %s286 = scalar_lea.vmem %s0, %s285
      %s287 = smul.u32 16, %s22
      %p288 = scmp.lt.s32.totalorder %s21, 1
      %s289 = scalar_select %p288, %s21, 1
      %s290 = smul.addr %s289, 2
      %s291 = scalar_lea.vmem %s1, %s290
      %p292 = scmp.lt.s32.totalorder %s21, 1
      %s293 = scalar_select %p292, %s21, 1
      %s294 = smul.addr %s293, 2
      %s295 = smul.addr %s294, 2
      %s296 = scalar_lea.vmem %s6, %s295
      %p297 = scmp.eq.s32.totalorder %s22, 0
      // Predicated region
      $region45: #{_lambda_.7} parent=43 // pred_check
        %p298 = pneg %p297
      $region46: #{_lambda_.7} parent=43 // pred_check_branch
        %300 = sbr.rel (%p298) target = $region48
      $region47: #{_lambda_.7} parent=43 // pred_region
        %301 = vst [vmem:[%s296] sm:$0xf] 0.0
      $region48: #{_lambda_.7} parent=43 // pred_fallthru
        _
      %v302 = vld [vmem:[%s286] sm:$0xf]
      %v303 = vld [vmem:[%s286 + $0x4] sm:$0xf]
      %v304 = vld [vmem:[%s286 + $0x8] sm:$0xf]
      %v305 = vld [vmem:[%s286 + $0xc] sm:$0xf]
      %v306 = vld [vmem:[%s286 + $0x10] sm:$0xf]
      %v307 = vld [vmem:[%s286 + $0x14] sm:$0xf]
      %v308 = vld [vmem:[%s286 + $0x18] sm:$0xf]
      %v309 = vld [vmem:[%s286 + $0x1c] sm:$0xf]
      %v310 = vld [vmem:[%s286 + $0x20] sm:$0xf]
      %v311 = vld [vmem:[%s286 + $0x24] sm:$0xf]
      %v312 = vld [vmem:[%s286 + $0x28] sm:$0xf]
      %v313 = vld [vmem:[%s286 + $0x2c] sm:$0xf]
      %v314 = vld [vmem:[%s286 + $0x30] sm:$0xf]
      %v315 = vld [vmem:[%s286 + $0x34] sm:$0xf]
      %v316 = vld [vmem:[%s286 + $0x38] sm:$0xf]
      %v317 = vld [vmem:[%s286 + $0x3c] sm:$0xf]
      %v318 = vunpack.c.l.bf16 %v302
      %v319 = vunpack.c.l.bf16 %v303
      %v320 = vunpack.c.l.bf16 %v304
      %v321 = vunpack.c.l.bf16 %v305
      %v322 = vunpack.c.l.bf16 %v306
      %v323 = vunpack.c.l.bf16 %v307
      %v324 = vunpack.c.l.bf16 %v308
      %v325 = vunpack.c.l.bf16 %v309
      %v326 = vunpack.c.l.bf16 %v310
      %v327 = vunpack.c.l.bf16 %v311
      %v328 = vunpack.c.l.bf16 %v312
      %v329 = vunpack.c.l.bf16 %v313
      %v330 = vunpack.c.l.bf16 %v314
      %v331 = vunpack.c.l.bf16 %v315
      %v332 = vunpack.c.l.bf16 %v316
      %v333 = vunpack.c.l.bf16 %v317
      %v334 = vld [vmem:[%s291] sm:$0x3]
      %v335 = vld [vmem:[%s2] sm:$0x1]
      %v336 = vld [vmem:[%s3] sm:$0x1]
      %v337 = vld [vmem:[%s4] sm:$0xff]
      %v338 = vld [vmem:[%s4 + $0x8] sm:$0xff]
      %v339 = vld [vmem:[%s4 + $0x10] sm:$0xff]
      %v340 = vld [vmem:[%s4 + $0x18] sm:$0xff]
      %v341 = vld [vmem:[%s4 + $0x20] sm:$0xff]
      %v342 = vld [vmem:[%s4 + $0x28] sm:$0xff]
      %v343 = vld [vmem:[%s4 + $0x30] sm:$0xff]
      %v344 = vld [vmem:[%s4 + $0x38] sm:$0xff]
      %v345 = vld [vmem:[%s4 + $0x40] sm:$0xff]
      %v346 = vld [vmem:[%s4 + $0x48] sm:$0xff]
      %v347 = vld [vmem:[%s4 + $0x50] sm:$0xff]
      %v348 = vld [vmem:[%s4 + $0x58] sm:$0xff]
      %v349 = vld [vmem:[%s4 + $0x60] sm:$0xff]
      %v350 = vld [vmem:[%s4 + $0x68] sm:$0xff]
      %v351 = vld [vmem:[%s4 + $0x70] sm:$0xff]
      %v352 = vld [vmem:[%s4 + $0x78] sm:$0xff]
      %v353 = vld [vmem:[%s5] sm:$0x3]
      %vm354 = vcmask 1040384
      %v355 = vsel %vm354, %v334, 0.0
      %356 = vadd.xlane.f32.xlu0 %v355
      %v357 = vpop.xlane.xlu0 %356
      %v358 = vrot.slane %v357, 4
      %v359 = vadd.f32 %v357, %v358
      %v360 = vrot.slane %v359, 2
      %v361 = vadd.f32 %v359, %v360
      %v362 = vrot.slane %v361, 1
      %v363 = vadd.f32 %v361, %v362
      %s364 = vtos %v363
      %v365 = vstv %s364
      %v366 = vrcp.pop 1000.0
      %v367 = vmul.f32 1000.0, %v366
      %v368 = vsub.f32 1.0, %v367
      %v369 = vmul.f32 %v366, %v368
      %v370 = vadd.f32 %v366, %v369
      %vm371 = vweird.f32 %v366
      %v372 = vsel %vm371, %v366, %v370
      %v373 = vmul.f32 %v365, %v372
      %v375 = vrot.slane %v334, 1
      %v377 = vsel %vm354, %v375, 0.0
      %378 = vadd.xlane.f32.xlu0 %v377
      %v379 = vpop.xlane.xlu0 %378
      %v380 = vrot.slane %v379, 4
      %v381 = vadd.f32 %v379, %v380
      %v382 = vrot.slane %v381, 2
      %v383 = vadd.f32 %v381, %v382
      %v384 = vrot.slane %v383, 1
      %v385 = vadd.f32 %v383, %v384
      %s386 = vtos %v385
      %v387 = vstv %s386
      %v388 = vmul.f32 %v387, %v372
      %v389 = vmul.f32 %v373, %v373
      %v390 = vsub.f32 %v388, %v389
      %v391 = vmax.f32 %v390, 0.0
      %v392 = vadd.f32 %v391, 1e-05
      %v393 = vrsqrt.pop %v392
      %v394 = vmul.f32 %v393, %v392
      %v395 = vmul.f32 %v394, %v393
      %v396 = vmul.f32 0.5, %v395
      %v397 = vsub.f32 1.5, %v396
      %v398 = vmul.f32 %v393, %v397
      %vm399 = vweird.f32 %v392
      %vm400 = vweird.f32 %v393
      %vm401 = vmor %vm399, %vm400
      %v402 = vsel %vm401, %v393, %v398
      %v403 = vsub.f32 %v318, %v373
      %v404 = vsub.f32 %v319, %v373
      %v405 = vsub.f32 %v320, %v373
      %v406 = vsub.f32 %v321, %v373
      %v407 = vsub.f32 %v322, %v373
      %v408 = vsub.f32 %v323, %v373
      %v409 = vsub.f32 %v324, %v373
      %v410 = vsub.f32 %v325, %v373
      %v411 = vsub.f32 %v326, %v373
      %v412 = vsub.f32 %v327, %v373
      %v413 = vsub.f32 %v328, %v373
      %v414 = vsub.f32 %v329, %v373
      %v415 = vsub.f32 %v330, %v373
      %v416 = vsub.f32 %v331, %v373
      %v417 = vsub.f32 %v332, %v373
      %v418 = vsub.f32 %v333, %v373
      %v419 = vmul.f32 %v403, %v402
      %v420 = vmul.f32 %v404, %v402
      %v421 = vmul.f32 %v405, %v402
      %v422 = vmul.f32 %v406, %v402
      %v423 = vmul.f32 %v407, %v402
      %v424 = vmul.f32 %v408, %v402
      %v425 = vmul.f32 %v409, %v402
      %v426 = vmul.f32 %v410, %v402
      %v427 = vmul.f32 %v411, %v402
      %v428 = vmul.f32 %v412, %v402
      %v429 = vmul.f32 %v413, %v402
      %v430 = vmul.f32 %v414, %v402
      %v431 = vmul.f32 %v415, %v402
      %v432 = vmul.f32 %v416, %v402
      %v433 = vmul.f32 %v417, %v402
      %v434 = vmul.f32 %v418, %v402
      %v436 = vperm.slane %v335, 0
      %v438 = vmul.f32 %v419, %v436
      %v439 = vmul.f32 %v420, %v436
      %v440 = vmul.f32 %v421, %v436
      %v441 = vmul.f32 %v422, %v436
      %v442 = vmul.f32 %v423, %v436
      %v443 = vmul.f32 %v424, %v436
      %v444 = vmul.f32 %v425, %v436
      %v445 = vmul.f32 %v426, %v436
      %v446 = vmul.f32 %v427, %v436
      %v447 = vmul.f32 %v428, %v436
      %v448 = vmul.f32 %v429, %v436
      %v449 = vmul.f32 %v430, %v436
      %v450 = vmul.f32 %v431, %v436
      %v451 = vmul.f32 %v432, %v436
      %v452 = vmul.f32 %v433, %v436
      %v453 = vmul.f32 %v434, %v436
      %v455 = vperm.slane %v336, 0
      %v457 = vadd.f32 %v438, %v455
      %v458 = vadd.f32 %v439, %v455
      %v459 = vadd.f32 %v440, %v455
      %v460 = vadd.f32 %v441, %v455
      %v461 = vadd.f32 %v442, %v455
      %v462 = vadd.f32 %v443, %v455
      %v463 = vadd.f32 %v444, %v455
      %v464 = vadd.f32 %v445, %v455
      %v465 = vadd.f32 %v446, %v455
      %v466 = vadd.f32 %v447, %v455
      %v467 = vadd.f32 %v448, %v455
      %v468 = vadd.f32 %v449, %v455
      %v469 = vadd.f32 %v450, %v455
      %v470 = vadd.f32 %v451, %v455
      %v471 = vadd.f32 %v452, %v455
      %v472 = vadd.f32 %v453, %v455
      %v473 = vmul.f32 %v457, %v457
      %v474 = vmul.f32 %v458, %v458
      %v475 = vmul.f32 %v459, %v459
      %v476 = vmul.f32 %v460, %v460
      %v477 = vmul.f32 %v461, %v461
      %v478 = vmul.f32 %v462, %v462
      %v479 = vmul.f32 %v463, %v463
      %v480 = vmul.f32 %v464, %v464
      %v481 = vmul.f32 %v465, %v465
      %v482 = vmul.f32 %v466, %v466
      %v483 = vmul.f32 %v467, %v467
      %v484 = vmul.f32 %v468, %v468
      %v485 = vmul.f32 %v469, %v469
      %v486 = vmul.f32 %v470, %v470
      %v487 = vmul.f32 %v471, %v471
      %v488 = vmul.f32 %v472, %v472
      %v489 = vmul.f32 %v457, %v473
      %v490 = vmul.f32 %v458, %v474
      %v491 = vmul.f32 %v459, %v475
      %v492 = vmul.f32 %v460, %v476
      %v493 = vmul.f32 %v461, %v477
      %v494 = vmul.f32 %v462, %v478
      %v495 = vmul.f32 %v463, %v479
      %v496 = vmul.f32 %v464, %v480
      %v497 = vmul.f32 %v465, %v481
      %v498 = vmul.f32 %v466, %v482
      %v499 = vmul.f32 %v467, %v483
      %v500 = vmul.f32 %v468, %v484
      %v501 = vmul.f32 %v469, %v485
      %v502 = vmul.f32 %v470, %v486
      %v503 = vmul.f32 %v471, %v487
      %v504 = vmul.f32 %v472, %v488
      %v505 = vmul.f32 %v489, 0.044715
      %v506 = vmul.f32 %v490, 0.044715
      %v507 = vmul.f32 %v491, 0.044715
      %v508 = vmul.f32 %v492, 0.044715
      %v509 = vmul.f32 %v493, 0.044715
      %v510 = vmul.f32 %v494, 0.044715
      %v511 = vmul.f32 %v495, 0.044715
      %v512 = vmul.f32 %v496, 0.044715
      %v513 = vmul.f32 %v497, 0.044715
      %v514 = vmul.f32 %v498, 0.044715
      %v515 = vmul.f32 %v499, 0.044715
      %v516 = vmul.f32 %v500, 0.044715
      %v517 = vmul.f32 %v501, 0.044715
      %v518 = vmul.f32 %v502, 0.044715
      %v519 = vmul.f32 %v503, 0.044715
      %v520 = vmul.f32 %v504, 0.044715
      %v521 = vadd.f32 %v457, %v505
      %v522 = vadd.f32 %v458, %v506
      %v523 = vadd.f32 %v459, %v507
      %v524 = vadd.f32 %v460, %v508
      %v525 = vadd.f32 %v461, %v509
      %v526 = vadd.f32 %v462, %v510
      %v527 = vadd.f32 %v463, %v511
      %v528 = vadd.f32 %v464, %v512
      %v529 = vadd.f32 %v465, %v513
      %v530 = vadd.f32 %v466, %v514
      %v531 = vadd.f32 %v467, %v515
      %v532 = vadd.f32 %v468, %v516
      %v533 = vadd.f32 %v469, %v517
      %v534 = vadd.f32 %v470, %v518
      %v535 = vadd.f32 %v471, %v519
      %v536 = vadd.f32 %v472, %v520
      %v537 = vmul.f32 %v521, 0.7978846
      %v538 = vmul.f32 %v522, 0.7978846
      %v539 = vmul.f32 %v523, 0.7978846
      %v540 = vmul.f32 %v524, 0.7978846
      %v541 = vmul.f32 %v525, 0.7978846
      %v542 = vmul.f32 %v526, 0.7978846
      %v543 = vmul.f32 %v527, 0.7978846
      %v544 = vmul.f32 %v528, 0.7978846
      %v545 = vmul.f32 %v529, 0.7978846
      %v546 = vmul.f32 %v530, 0.7978846
      %v547 = vmul.f32 %v531, 0.7978846
      %v548 = vmul.f32 %v532, 0.7978846
      %v549 = vmul.f32 %v533, 0.7978846
      %v550 = vmul.f32 %v534, 0.7978846
      %v551 = vmul.f32 %v535, 0.7978846
      %v552 = vmul.f32 %v536, 0.7978846
      %v553 = vtanh.pop %v537
      %v554 = vtanh.pop %v538
      %v555 = vtanh.pop %v539
      %v556 = vtanh.pop %v540
      %v557 = vtanh.pop %v541
      %v558 = vtanh.pop %v542
      %v559 = vtanh.pop %v543
      %v560 = vtanh.pop %v544
      %v561 = vtanh.pop %v545
      %v562 = vtanh.pop %v546
      %v563 = vtanh.pop %v547
      %v564 = vtanh.pop %v548
      %v565 = vtanh.pop %v549
      %v566 = vtanh.pop %v550
      %v567 = vtanh.pop %v551
      %v568 = vtanh.pop %v552
      %v569 = vadd.f32 %v553, 1.0
      %v570 = vadd.f32 %v554, 1.0
      %v571 = vadd.f32 %v555, 1.0
      %v572 = vadd.f32 %v556, 1.0
      %v573 = vadd.f32 %v557, 1.0
      %v574 = vadd.f32 %v558, 1.0
      %v575 = vadd.f32 %v559, 1.0
      %v576 = vadd.f32 %v560, 1.0
      %v577 = vadd.f32 %v561, 1.0
      %v578 = vadd.f32 %v562, 1.0
      %v579 = vadd.f32 %v563, 1.0
      %v580 = vadd.f32 %v564, 1.0
      %v581 = vadd.f32 %v565, 1.0
      %v582 = vadd.f32 %v566, 1.0
      %v583 = vadd.f32 %v567, 1.0
      %v584 = vadd.f32 %v568, 1.0
      %v585 = vmul.f32 %v569, 0.5
      %v586 = vmul.f32 %v570, 0.5
      %v587 = vmul.f32 %v571, 0.5
      %v588 = vmul.f32 %v572, 0.5
      %v589 = vmul.f32 %v573, 0.5
      %v590 = vmul.f32 %v574, 0.5
      %v591 = vmul.f32 %v575, 0.5
      %v592 = vmul.f32 %v576, 0.5
      %v593 = vmul.f32 %v577, 0.5
      %v594 = vmul.f32 %v578, 0.5
      %v595 = vmul.f32 %v579, 0.5
      %v596 = vmul.f32 %v580, 0.5
      %v597 = vmul.f32 %v581, 0.5
      %v598 = vmul.f32 %v582, 0.5
      %v599 = vmul.f32 %v583, 0.5
      %v600 = vmul.f32 %v584, 0.5
      %v601 = vmul.f32 %v457, %v585
      %v602 = vmul.f32 %v458, %v586
      %v603 = vmul.f32 %v459, %v587
      %v604 = vmul.f32 %v460, %v588
      %v605 = vmul.f32 %v461, %v589
      %v606 = vmul.f32 %v462, %v590
      %v607 = vmul.f32 %v463, %v591
      %v608 = vmul.f32 %v464, %v592
      %v609 = vmul.f32 %v465, %v593
      %v610 = vmul.f32 %v466, %v594
      %v611 = vmul.f32 %v467, %v595
      %v612 = vmul.f32 %v468, %v596
      %v613 = vmul.f32 %v469, %v597
      %v614 = vmul.f32 %v470, %v598
      %v615 = vmul.f32 %v471, %v599
      %v616 = vmul.f32 %v472, %v600
      %v617 = vpack.c.bf16 %v602, %v601
      %v618 = vpack.c.bf16 %v604, %v603
      %v619 = vpack.c.bf16 %v606, %v605
      %v620 = vpack.c.bf16 %v608, %v607
      %v621 = vpack.c.bf16 %v610, %v609
      %v622 = vpack.c.bf16 %v612, %v611
      %v623 = vpack.c.bf16 %v614, %v613
      %v624 = vpack.c.bf16 %v616, %v615
      %v626 = vperm.slane %v353, 0
      %v627 = vperm.slane %v353, 1
      %v646 = vunpack.c.l.b16 %v337
      %v647 = vunpack.c.h.b16 %v337
      %v648 = vunpack.c.l.b16 %v338
      %v649 = vunpack.c.h.b16 %v338
      %v650 = vunpack.c.l.b16 %v339
      %v651 = vunpack.c.h.b16 %v339
      %v652 = vunpack.c.l.b16 %v340
      %v653 = vunpack.c.h.b16 %v340
      %v654 = vunpack.c.l.b16 %v341
      %v655 = vunpack.c.h.b16 %v341
      %v656 = vunpack.c.l.b16 %v342
      %v657 = vunpack.c.h.b16 %v342
      %v658 = vunpack.c.l.b16 %v343
      %v659 = vunpack.c.h.b16 %v343
      %v660 = vunpack.c.l.b16 %v344
      %v661 = vunpack.c.h.b16 %v344
      %v662 = vunpack.c.l.b16 %v345
      %v663 = vunpack.c.h.b16 %v345
      %v664 = vunpack.c.l.b16 %v346
      %v665 = vunpack.c.h.b16 %v346
      %v666 = vunpack.c.l.b16 %v347
      %v667 = vunpack.c.h.b16 %v347
      %v668 = vunpack.c.l.b16 %v348
      %v669 = vunpack.c.h.b16 %v348
      %v670 = vunpack.c.l.b16 %v349
      %v671 = vunpack.c.h.b16 %v349
      %v672 = vunpack.c.l.b16 %v350
      %v673 = vunpack.c.h.b16 %v350
      %v674 = vunpack.c.l.b16 %v351
      %v675 = vunpack.c.h.b16 %v351
      %v676 = vunpack.c.l.b16 %v352
      %v677 = vunpack.c.h.b16 %v352
      %v678 = vpack.c.b16 %v648, %v646
      %v679 = vpack.c.b16 %v649, %v647
      %v680 = vpack.c.b16 %v652, %v650
      %v681 = vpack.c.b16 %v653, %v651
      %v682 = vpack.c.b16 %v656, %v654
      %v683 = vpack.c.b16 %v657, %v655
      %v684 = vpack.c.b16 %v660, %v658
      %v685 = vpack.c.b16 %v661, %v659
      %v686 = vpack.c.b16 %v664, %v662
      %v687 = vpack.c.b16 %v665, %v663
      %v688 = vpack.c.b16 %v668, %v666
      %v689 = vpack.c.b16 %v669, %v667
      %v690 = vpack.c.b16 %v672, %v670
      %v691 = vpack.c.b16 %v673, %v671
      %v692 = vpack.c.b16 %v676, %v674
      %v693 = vpack.c.b16 %v677, %v675
      %710 = vmatpush.bf16.msra.mxu0 %v692
      %711 = vmatpush.bf16.msra.mxu0 %v690
      %712 = vmatpush.bf16.msra.mxu0 %v688
      %713 = vmatpush.bf16.msra.mxu0 %v686
      %714 = vmatpush.bf16.msra.mxu0 %v684
      %715 = vmatpush.bf16.msra.mxu0 %v682
      %716 = vmatpush.bf16.msra.mxu0 %v680
      %717 = vmatpush.bf16.msra.mxu0 %v678
      %718 = vmatmul.bf16.gmra.mxu0 %v617
      %v719 = vpop.f32.mrf.mxu0
      %v720 = vadd.f32 %v626, %v719
      %v721 = vpop.f32.mrf.mxu0
      %v722 = vadd.f32 %v626, %v721
      %723 = vmatmul.bf16.gmra.mxu0 %v618
      %v724 = vpop.f32.mrf.mxu0
      %v725 = vadd.f32 %v626, %v724
      %v726 = vpop.f32.mrf.mxu0
      %v727 = vadd.f32 %v626, %v726
      %728 = vmatmul.bf16.gmra.mxu0 %v619
      %v729 = vpop.f32.mrf.mxu0
      %v730 = vadd.f32 %v626, %v729
      %v731 = vpop.f32.mrf.mxu0
      %v732 = vadd.f32 %v626, %v731
      %733 = vmatmul.bf16.gmra.mxu0 %v620
      %v734 = vpop.f32.mrf.mxu0
      %v735 = vadd.f32 %v626, %v734
      %v736 = vpop.f32.mrf.mxu0
      %v737 = vadd.f32 %v626, %v736
      %738 = vmatmul.bf16.gmra.mxu0 %v621
      %v739 = vpop.f32.mrf.mxu0
      %v740 = vadd.f32 %v626, %v739
      %v741 = vpop.f32.mrf.mxu0
      %v742 = vadd.f32 %v626, %v741
      %743 = vmatmul.bf16.gmra.mxu0 %v622
      %v744 = vpop.f32.mrf.mxu0
      %v745 = vadd.f32 %v626, %v744
      %v746 = vpop.f32.mrf.mxu0
      %v747 = vadd.f32 %v626, %v746
      %748 = vmatmul.bf16.gmra.mxu0 %v623
      %v749 = vpop.f32.mrf.mxu0
      %v750 = vadd.f32 %v626, %v749
      %v751 = vpop.f32.mrf.mxu0
      %v752 = vadd.f32 %v626, %v751
      %753 = vmatmul.bf16.gmra.mxu0 %v624
      %v754 = vpop.f32.mrf.mxu0
      %v755 = vadd.f32 %v626, %v754
      %v756 = vpop.f32.mrf.mxu0
      %v757 = vadd.f32 %v626, %v756
      %758 = vdwg.mxu0
      %759 = vmatpush.bf16.msra.mxu0 %v693
      %760 = vmatpush.bf16.msra.mxu0 %v691
      %761 = vmatpush.bf16.msra.mxu0 %v689
      %762 = vmatpush.bf16.msra.mxu0 %v687
      %763 = vmatpush.bf16.msra.mxu0 %v685
      %764 = vmatpush.bf16.msra.mxu0 %v683
      %765 = vmatpush.bf16.msra.mxu0 %v681
      %766 = vmatpush.bf16.msra.mxu0 %v679
      %767 = vmatmul.bf16.gmra.mxu0 %v617
      %v768 = vpop.f32.mrf.mxu0
      %v769 = vadd.f32 %v627, %v768
      %v770 = vpop.f32.mrf.mxu0
      %v771 = vadd.f32 %v627, %v770
      %772 = vmatmul.bf16.gmra.mxu0 %v618
      %v773 = vpop.f32.mrf.mxu0
      %v774 = vadd.f32 %v627, %v773
      %v775 = vpop.f32.mrf.mxu0
      %v776 = vadd.f32 %v627, %v775
      %777 = vmatmul.bf16.gmra.mxu0 %v619
      %v778 = vpop.f32.mrf.mxu0
      %v779 = vadd.f32 %v627, %v778
      %v780 = vpop.f32.mrf.mxu0
      %v781 = vadd.f32 %v627, %v780
      %782 = vmatmul.bf16.gmra.mxu0 %v620
      %v783 = vpop.f32.mrf.mxu0
      %v784 = vadd.f32 %v627, %v783
      %v785 = vpop.f32.mrf.mxu0
      %v786 = vadd.f32 %v627, %v785
      %787 = vmatmul.bf16.gmra.mxu0 %v621
      %v788 = vpop.f32.mrf.mxu0
      %v789 = vadd.f32 %v627, %v788
      %v790 = vpop.f32.mrf.mxu0
      %v791 = vadd.f32 %v627, %v790
      %792 = vmatmul.bf16.gmra.mxu0 %v622
      %v793 = vpop.f32.mrf.mxu0
      %v794 = vadd.f32 %v627, %v793
      %v795 = vpop.f32.mrf.mxu0
      %v796 = vadd.f32 %v627, %v795
      %797 = vmatmul.bf16.gmra.mxu0 %v623
      %v798 = vpop.f32.mrf.mxu0
      %v799 = vadd.f32 %v627, %v798
      %v800 = vpop.f32.mrf.mxu0
      %v801 = vadd.f32 %v627, %v800
      %802 = vmatmul.bf16.gmra.mxu0 %v624
      %v803 = vpop.f32.mrf.mxu0
      %v804 = vadd.f32 %v627, %v803
      %v805 = vpop.f32.mrf.mxu0
      %v806 = vadd.f32 %v627, %v805
      %807 = vdwg.mxu0
      %s808 = smul.u32 %s22, 128
      %v809 = vlaneseq
      %v810 = vshrl.u32 %v809, 7
      %v811 = vadd.s32 %v810, 8
      %v812 = vadd.s32 %v810, 16
      %v813 = vadd.s32 %v810, 24
      %v814 = vadd.s32 %v810, 32
      %v815 = vadd.s32 %v810, 40
      %v816 = vadd.s32 %v810, 48
      %v817 = vadd.s32 %v810, 56
      %v818 = vadd.s32 %v810, 64
      %v819 = vadd.s32 %v810, 72
      %v820 = vadd.s32 %v810, 80
      %v821 = vadd.s32 %v810, 88
      %v822 = vadd.s32 %v810, 96
      %v823 = vadd.s32 %v810, 104
      %v824 = vadd.s32 %v810, 112
      %v825 = vadd.s32 %v810, 120
      %v826 = vstv %s808
      %v827 = vadd.s32 %v826, %v810
      %v828 = vadd.s32 %v826, %v811
      %v829 = vadd.s32 %v826, %v812
      %v830 = vadd.s32 %v826, %v813
      %v831 = vadd.s32 %v826, %v814
      %v832 = vadd.s32 %v826, %v815
      %v833 = vadd.s32 %v826, %v816
      %v834 = vadd.s32 %v826, %v817
      %v835 = vadd.s32 %v826, %v818
      %v836 = vadd.s32 %v826, %v819
      %v837 = vadd.s32 %v826, %v820
      %v838 = vadd.s32 %v826, %v821
      %v839 = vadd.s32 %v826, %v822
      %v840 = vadd.s32 %v826, %v823
      %v841 = vadd.s32 %v826, %v824
      %v842 = vadd.s32 %v826, %v825
      %vm843 = vcmp.lt.s32.totalorder %v827, 250
      %vm844 = vcmp.lt.s32.totalorder %v828, 250
      %vm845 = vcmp.lt.s32.totalorder %v829, 250
      %vm846 = vcmp.lt.s32.totalorder %v830, 250
      %vm847 = vcmp.lt.s32.totalorder %v831, 250
      %vm848 = vcmp.lt.s32.totalorder %v832, 250
      %vm849 = vcmp.lt.s32.totalorder %v833, 250
      %vm850 = vcmp.lt.s32.totalorder %v834, 250
      %vm851 = vcmp.lt.s32.totalorder %v835, 250
      %vm852 = vcmp.lt.s32.totalorder %v836, 250
      %vm853 = vcmp.lt.s32.totalorder %v837, 250
      %vm854 = vcmp.lt.s32.totalorder %v838, 250
      %vm855 = vcmp.lt.s32.totalorder %v839, 250
      %vm856 = vcmp.lt.s32.totalorder %v840, 250
      %vm857 = vcmp.lt.s32.totalorder %v841, 250
      %vm858 = vcmp.lt.s32.totalorder %v842, 250
      %v859 = vsel %vm843, 1, 0
      %v860 = vsel %vm844, 1, 0
      %v861 = vsel %vm845, 1, 0
      %v862 = vsel %vm846, 1, 0
      %v863 = vsel %vm847, 1, 0
      %v864 = vsel %vm848, 1, 0
      %v865 = vsel %vm849, 1, 0
      %v866 = vsel %vm850, 1, 0
      %v867 = vsel %vm851, 1, 0
      %v868 = vsel %vm852, 1, 0
      %v869 = vsel %vm853, 1, 0
      %v870 = vsel %vm854, 1, 0
      %v871 = vsel %vm855, 1, 0
      %v872 = vsel %vm856, 1, 0
      %v873 = vsel %vm857, 1, 0
      %v874 = vsel %vm858, 1, 0
      %vm875 = vcmp.eq.s32.totalorder %v859, 1
      %vm876 = vcmp.eq.s32.totalorder %v860, 1
      %vm877 = vcmp.eq.s32.totalorder %v861, 1
      %vm878 = vcmp.eq.s32.totalorder %v862, 1
      %vm879 = vcmp.eq.s32.totalorder %v863, 1
      %vm880 = vcmp.eq.s32.totalorder %v864, 1
      %vm881 = vcmp.eq.s32.totalorder %v865, 1
      %vm882 = vcmp.eq.s32.totalorder %v866, 1
      %vm883 = vcmp.eq.s32.totalorder %v867, 1
      %vm884 = vcmp.eq.s32.totalorder %v868, 1
      %vm885 = vcmp.eq.s32.totalorder %v869, 1
      %vm886 = vcmp.eq.s32.totalorder %v870, 1
      %vm887 = vcmp.eq.s32.totalorder %v871, 1
      %vm888 = vcmp.eq.s32.totalorder %v872, 1
      %vm889 = vcmp.eq.s32.totalorder %v873, 1
      %vm890 = vcmp.eq.s32.totalorder %v874, 1
      %v891 = vsel %vm875, %v720, 0.0
      %v892 = vsel %vm875, %v769, 0.0
      %v893 = vsel %vm876, %v722, 0.0
      %v894 = vsel %vm876, %v771, 0.0
      %v895 = vsel %vm877, %v725, 0.0
      %v896 = vsel %vm877, %v774, 0.0
      %v897 = vsel %vm878, %v727, 0.0
      %v898 = vsel %vm878, %v776, 0.0
      %v899 = vsel %vm879, %v730, 0.0
      %v900 = vsel %vm879, %v779, 0.0
      %v901 = vsel %vm880, %v732, 0.0
      %v902 = vsel %vm880, %v781, 0.0
      %v903 = vsel %vm881, %v735, 0.0
      %v904 = vsel %vm881, %v784, 0.0
      %v905 = vsel %vm882, %v737, 0.0
      %v906 = vsel %vm882, %v786, 0.0
      %v907 = vsel %vm883, %v740, 0.0
      %v908 = vsel %vm883, %v789, 0.0
      %v909 = vsel %vm884, %v742, 0.0
      %v910 = vsel %vm884, %v791, 0.0
      %v911 = vsel %vm885, %v745, 0.0
      %v912 = vsel %vm885, %v794, 0.0
      %v913 = vsel %vm886, %v747, 0.0
      %v914 = vsel %vm886, %v796, 0.0
      %v915 = vsel %vm887, %v750, 0.0
      %v916 = vsel %vm887, %v799, 0.0
      %v917 = vsel %vm888, %v752, 0.0
      %v918 = vsel %vm888, %v801, 0.0
      %v919 = vsel %vm889, %v755, 0.0
      %v920 = vsel %vm889, %v804, 0.0
      %v921 = vsel %vm890, %v757, 0.0
      %v922 = vsel %vm890, %v806, 0.0
      %v923 = vadd.f32 %v891, %v893
      %v924 = vadd.f32 %v923, %v895
      %v925 = vadd.f32 %v924, %v897
      %v926 = vadd.f32 %v925, %v899
      %v927 = vadd.f32 %v926, %v901
      %v928 = vadd.f32 %v927, %v903
      %v929 = vadd.f32 %v928, %v905
      %v930 = vadd.f32 %v929, %v907
      %v931 = vadd.f32 %v930, %v909
      %v932 = vadd.f32 %v931, %v911
      %v933 = vadd.f32 %v932, %v913
      %v934 = vadd.f32 %v933, %v915
      %v935 = vadd.f32 %v934, %v917
      %v936 = vadd.f32 %v935, %v919
      %v937 = vadd.f32 %v936, %v921
      %v938 = vrot.slane %v937, 4
      %v939 = vadd.f32 %v937, %v938
      %v940 = vrot.slane %v939, 2
      %v941 = vadd.f32 %v939, %v940
      %v942 = vrot.slane %v941, 1
      %v943 = vadd.f32 %v941, %v942
      %v944 = vadd.f32 %v892, %v894
      %v945 = vadd.f32 %v944, %v896
      %v946 = vadd.f32 %v945, %v898
      %v947 = vadd.f32 %v946, %v900
      %v948 = vadd.f32 %v947, %v902
      %v949 = vadd.f32 %v948, %v904
      %v950 = vadd.f32 %v949, %v906
      %v951 = vadd.f32 %v950, %v908
      %v952 = vadd.f32 %v951, %v910
      %v953 = vadd.f32 %v952, %v912
      %v954 = vadd.f32 %v953, %v914
      %v955 = vadd.f32 %v954, %v916
      %v956 = vadd.f32 %v955, %v918
      %v957 = vadd.f32 %v956, %v920
      %v958 = vadd.f32 %v957, %v922
      %v959 = vrot.slane %v958, 4
      %v960 = vadd.f32 %v958, %v959
      %v961 = vrot.slane %v960, 2
      %v962 = vadd.f32 %v960, %v961
      %v963 = vrot.slane %v962, 1
      %v964 = vadd.f32 %v962, %v963
      %v965 = vmul.f32 %v891, %v891
      %v966 = vmul.f32 %v892, %v892
      %v967 = vmul.f32 %v893, %v893
      %v968 = vmul.f32 %v894, %v894
      %v969 = vmul.f32 %v895, %v895
      %v970 = vmul.f32 %v896, %v896
      %v971 = vmul.f32 %v897, %v897
      %v972 = vmul.f32 %v898, %v898
      %v973 = vmul.f32 %v899, %v899
      %v974 = vmul.f32 %v900, %v900
      %v975 = vmul.f32 %v901, %v901
      %v976 = vmul.f32 %v902, %v902
      %v977 = vmul.f32 %v903, %v903
      %v978 = vmul.f32 %v904, %v904
      %v979 = vmul.f32 %v905, %v905
      %v980 = vmul.f32 %v906, %v906
      %v981 = vmul.f32 %v907, %v907
      %v982 = vmul.f32 %v908, %v908
      %v983 = vmul.f32 %v909, %v909
      %v984 = vmul.f32 %v910, %v910
      %v985 = vmul.f32 %v911, %v911
      %v986 = vmul.f32 %v912, %v912
      %v987 = vmul.f32 %v913, %v913
      %v988 = vmul.f32 %v914, %v914
      %v989 = vmul.f32 %v915, %v915
      %v990 = vmul.f32 %v916, %v916
      %v991 = vmul.f32 %v917, %v917
      %v992 = vmul.f32 %v918, %v918
      %v993 = vmul.f32 %v919, %v919
      %v994 = vmul.f32 %v920, %v920
      %v995 = vmul.f32 %v921, %v921
      %v996 = vmul.f32 %v922, %v922
      %v997 = vadd.f32 %v965, %v967
      %v998 = vadd.f32 %v997, %v969
      %v999 = vadd.f32 %v998, %v971
      %v1000 = vadd.f32 %v999, %v973
      %v1001 = vadd.f32 %v1000, %v975
      %v1002 = vadd.f32 %v1001, %v977
      %v1003 = vadd.f32 %v1002, %v979
      %v1004 = vadd.f32 %v1003, %v981
      %v1005 = vadd.f32 %v1004, %v983
      %v1006 = vadd.f32 %v1005, %v985
      %v1007 = vadd.f32 %v1006, %v987
      %v1008 = vadd.f32 %v1007, %v989
      %v1009 = vadd.f32 %v1008, %v991
      %v1010 = vadd.f32 %v1009, %v993
      %v1011 = vadd.f32 %v1010, %v995
      %v1012 = vrot.slane %v1011, 4
      %v1013 = vadd.f32 %v1011, %v1012
      %v1014 = vrot.slane %v1013, 2
      %v1015 = vadd.f32 %v1013, %v1014
      %v1016 = vrot.slane %v1015, 1
      %v1017 = vadd.f32 %v1015, %v1016
      %v1018 = vadd.f32 %v966, %v968
      %v1019 = vadd.f32 %v1018, %v970
      %v1020 = vadd.f32 %v1019, %v972
      %v1021 = vadd.f32 %v1020, %v974
      %v1022 = vadd.f32 %v1021, %v976
      %v1023 = vadd.f32 %v1022, %v978
      %v1024 = vadd.f32 %v1023, %v980
      %v1025 = vadd.f32 %v1024, %v982
      %v1026 = vadd.f32 %v1025, %v984
      %v1027 = vadd.f32 %v1026, %v986
      %v1028 = vadd.f32 %v1027, %v988
      %v1029 = vadd.f32 %v1028, %v990
      %v1030 = vadd.f32 %v1029, %v992
      %v1031 = vadd.f32 %v1030, %v994
      %v1032 = vadd.f32 %v1031, %v996
      %v1033 = vrot.slane %v1032, 4
      %v1034 = vadd.f32 %v1032, %v1033
      %v1035 = vrot.slane %v1034, 2
      %v1036 = vadd.f32 %v1034, %v1035
      %v1037 = vrot.slane %v1036, 1
      %v1038 = vadd.f32 %v1036, %v1037
      %v1039 = vsel %vm354, %v943, %v1017
      %v1040 = vsel %vm354, %v964, %v1038
      %v1041 = vld [vmem:[%s296] sm:$0xf]
      %v1044 = vrot.slane %v1040, 6
      %vm1045 = vcmask 1041408
      %v1046 = vsel %vm1045, %v1039, %v1044
      %v1048 = vadd.f32 %v1041, %v1046
      %1049 = vst [vmem:[%s296] sm:$0xf] %v1048
      %p1050 = scmp.lt.s32.totalorder %s21, 1
      %s1051 = scalar_select %p1050, %s21, 1
      %s1052 = smul.addr %s1051, 2
      %s1053 = smul.addr %s1052, 2
      %s1054 = scalar_lea.vmem %s6, %s1053
      // Predicated region
      $region49: #{_lambda_.7} parent=43 // pred_check
        %p1055 = pneg %p185
      $region50: #{_lambda_.7} parent=43 // pred_check_branch
        %1057 = sbr.rel (%p1055) target = $region52
      $region51: #{_lambda_.7} parent=43 // pred_region
        _
      $region52: #{_lambda_.7} parent=43 // pred_fallthru
        _
    $region44: #{_lambda_.7} parent=5 // pred_fallthru
      _
    %p1058 = scmp.le.s32.totalorder 2, %s12
    // Predicated region
    $region53: #{_lambda_.7} parent=5 // pred_check
      %p1059 = pneg %p1058
    $region54: #{_lambda_.7} parent=5 // pred_check_branch
      %1061 = sbr.rel (%p1059) target = $region56
    $region55: #{_lambda_.7} parent=5 // pred_region
      %s1062 = ssub.s32 %s12, 2
      // Predicated region
      $region57: #{_lambda_.7} parent=55 // pred_check
        %p1063 = pneg %p191
      $region58: #{_lambda_.7} parent=55 // pred_check_branch
        %1065 = sbr.rel (%p1063) target = $region60
      $region59: #{_lambda_.7} parent=55 // pred_region
        %p1066 = scmp.lt.s32.totalorder %s23, 1
        %s1067 = scalar_select %p1066, %s23, 1
        %s1068 = smul.addr %s1067, 2
        %s1069 = smul.addr %s1068, 2
        %s1070 = scalar_lea.vmem %s6, %s1069
      $region60: #{_lambda_.7} parent=55 // pred_fallthru
        _
    $region56: #{_lambda_.7} parent=5 // pred_fallthru
      _
  $region6: #{_lambda_.7} parent=0 // loop_footer
    %s16 = sadd.s32 1, %s12
  $region7: #{_lambda_.7} parent=0 // loop_footer_branch
    %11 = sbr.rel target = $region3
  $region8: #{_lambda_.7} parent=0 // loop_exit
    _

// kernel: _lambda_.8
$region0: #{_lambda_.8}
  #allocation0 [shape = 'u32[]', space=smem, size = 0x4, offset = 0x4, fixed_abs, tag = 'smem constant byte address 0x4 - core index']
  #allocation1 [shape = 'u32[72,128]{1,0:T(1,128)}', space=vmem, size = 0x9000, scoped, tag = 'internal scratch']
  %s0 = inlined_call_operand.vmem [shape: bf16[2,256,128], index: 0, kind: input, shape index: {}]
  %s1 = inlined_call_operand.vmem [shape: f32[2,2,128], index: 1, kind: input, shape index: {}]
  %s2 = inlined_call_operand.vmem [shape: f32[1,128], index: 2, kind: input, shape index: {}]
  %s3 = inlined_call_operand.vmem [shape: f32[1,128], index: 3, kind: input, shape index: {}]
  %s4 = inlined_call_operand.vmem [shape: bf16[128,256], index: 4, kind: input, shape index: {}]
  %s5 = inlined_call_operand.vmem [shape: f32[1,256], index: 5, kind: input, shape index: {}]
  %s6 = inlined_call_operand.vmem [shape: f32[2,2,256], index: 6, kind: input, shape index: {}]
  %s7 = inlined_call_operand.vmem [shape: f32[1,256], index: 7, kind: input, shape index: {}]
  %s8 = inlined_call_operand.vmem [shape: f32[1,256], index: 8, kind: input, shape index: {}]
  %s9 = inlined_call_operand.vmem [shape: f32[1,128], index: 9, kind: input, shape index: {}]
  %s10 = inlined_call_operand.vmem [shape: f32[2,512,128], index: 10, kind: input, shape index: {}, may-alias: {10,11}]
  %s11 = inlined_call_operand.vmem [shape: f32[2,512,128], index: 11, kind: output, shape index: {}, may-alias: {10,11}]
  %s12 = sld [smem:[#allocation0]]
  $region77: #{_lambda_.8} parent=0
    _
  %s14 = ssub.s32 1, %s12
  %s15 = scalar_select 0, %s14, %s12
  loop: start=0, step=1, limit=6
  $region2: #{_lambda_.8} parent=0 // loop_pre_header
    _
  $region3: #{_lambda_.8} parent=0 // loop_header
    %s17 = sphi 0, %s21
    %p18 = scmp.ge.s32.totalorder %s17, 6
    %s24 = sphi 0, %s36
    %s25 = sphi 0, %s32
    %s26 = sphi 0, %s24
    %s27 = sphi 0, %s25
    %s28 = sphi 0, %s26
    %s29 = sphi 0, %s27
    %s41 = sphi 0, %s43
    %s44 = sphi 0, %s41
    %s45 = sphi 0, %s44
    %s61 = sphi 0, %s45
    %s67 = sphi 0, %s69
    %s70 = sphi 0, %s67
    %s71 = sphi 0, %s70
    %s87 = sphi 0, %s71
    %s91 = sphi 0, %s91
    %s93 = sphi 0, %s91
    %s94 = sphi 0, %s93
    %s108 = sphi 0, %s94
    %s112 = sphi 0, %s112
    %s114 = sphi 0, %s112
    %s115 = sphi 0, %s114
    %s129 = sphi 0, %s115
    %s133 = sphi 0, %s133
    %s135 = sphi 0, %s133
    %s136 = sphi 0, %s135
    %s150 = sphi 0, %s136
    %s154 = sphi 0, %s154
    %s156 = sphi 0, %s154
    %s157 = sphi 0, %s156
    %s171 = sphi 0, %s157
    %s177 = sphi 0, %s179
    %s180 = sphi 0, %s177
    %s181 = sphi 0, %s180
    %s197 = sphi 0, %s181
    %s201 = sphi 0, %s201
    %s203 = sphi 0, %s201
    %s204 = sphi 0, %s203
    %s218 = sphi 0, %s204
    %s222 = sphi 0, %s222
    %s224 = sphi 0, %s222
    %s225 = sphi 0, %s224
    %s239 = sphi 0, %s225
    %s243 = sphi 0, %s243
    %s245 = sphi 0, %s243
    %s246 = sphi 0, %s245
    %s260 = sphi 0, %s246
    %s270 = sphi 0, %s272
    %s273 = sphi 0, %s270
    %s274 = sphi 0, %s273
    %s290 = sphi 0, %s274
    %s300 = sphi 0, %s302
    %s303 = sphi 0, %s300
    %s304 = sphi 0, %s303
    %s320 = sphi 0, %s304
  $region4: #{_lambda_.8} parent=0 // loop_header_branch
    %20 = sbr.rel (%p18) target = $region8
  $region5: #{_lambda_.8} parent=0 // loop_body
    %s22 = ssub.s32 %s17, 1
    %s23 = ssub.s32 %s17, 2
    %s30 = sadd.s32 1, %s25
    %p31 = scmp.ge.s32.totalorder %s30, 2
    %s32 = scalar_select %p31, 0, %s30
    %s33 = sadd.s32 1, %s24
    %s34 = scalar_select %p31, %s33, %s24
    %p35 = scmp.ge.s32.totalorder %s34, 2
    %s36 = scalar_select %p35, 0, %s34
    %s37 = ssub.s32 %s24, %s36
    %s38 = ssub.s32 %s25, %s32
    %s39 = sor.u32 %s37, %s38
    %p40 = scmp.eq.s32.totalorder %s39, 0
    %s42 = sadd.s32 %s41, 1
    %s43 = scalar_select %p40, %s41, %s42
    %p46 = pneg %p40
    %p47 = scmp.eq.s32.totalorder %s17, 3
    %p48 = por %p46, %p47
    %p49 = scmp.ne.s32.totalorder %s41, %s44
    %p50 = scmp.eq.s32.totalorder %s17, 0
    %p51 = por %p49, %p50
    %p52 = scmp.ne.s32.totalorder %s41, %s44
    %p53 = scmp.eq.s32.totalorder %s22, 3
    %p54 = por %p52, %p53
    %p55 = scmp.ne.s32.totalorder %s44, %s45
    %p56 = scmp.eq.s32.totalorder %s22, 0
    %p57 = por %p55, %p56
    %p58 = scmp.ne.s32.totalorder %s44, %s45
    %p59 = scmp.eq.s32.totalorder %s23, 3
    %p60 = por %p58, %p59
    %p62 = scmp.ne.s32.totalorder %s45, %s61
    %p63 = scmp.eq.s32.totalorder %s23, 0
    %p64 = por %p62, %p63
    %s65 = ssub.s32 %s24, %s36
    %p66 = scmp.eq.s32.totalorder %s65, 0
    %s68 = sadd.s32 %s67, 1
    %s69 = scalar_select %p66, %s67, %s68
    %p72 = pneg %p66
    %p73 = scmp.eq.s32.totalorder %s17, 3
    %p74 = por %p72, %p73
    %p75 = scmp.ne.s32.totalorder %s67, %s70
    %p76 = scmp.eq.s32.totalorder %s17, 0
    %p77 = por %p75, %p76
    %p78 = scmp.ne.s32.totalorder %s67, %s70
    %p79 = scmp.eq.s32.totalorder %s22, 3
    %p80 = por %p78, %p79
    %p81 = scmp.ne.s32.totalorder %s70, %s71
    %p82 = scmp.eq.s32.totalorder %s22, 0
    %p83 = por %p81, %p82
    %p84 = scmp.ne.s32.totalorder %s70, %s71
    %p85 = scmp.eq.s32.totalorder %s23, 3
    %p86 = por %p84, %p85
    %p88 = scmp.ne.s32.totalorder %s71, %s87
    %p89 = scmp.eq.s32.totalorder %s23, 0
    %p90 = por %p88, %p89
    %s92 = sadd.s32 %s91, 1
    %p95 = scmp.eq.s32.totalorder %s17, 3
    %p96 = scmp.ne.s32.totalorder %s91, %s93
    %p97 = scmp.eq.s32.totalorder %s17, 0
    %p98 = por %p96, %p97
    %p99 = scmp.ne.s32.totalorder %s91, %s93
    %p100 = scmp.eq.s32.totalorder %s22, 3
    %p101 = por %p99, %p100
    %p102 = scmp.ne.s32.totalorder %s93, %s94
    %p103 = scmp.eq.s32.totalorder %s22, 0
    %p104 = por %p102, %p103
    %p105 = scmp.ne.s32.totalorder %s93, %s94
    %p106 = scmp.eq.s32.totalorder %s23, 3
    %p107 = por %p105, %p106
    %p109 = scmp.ne.s32.totalorder %s94, %s108
    %p110 = scmp.eq.s32.totalorder %s23, 0
    %p111 = por %p109, %p110
    %s113 = sadd.s32 %s112, 1
    %p116 = scmp.eq.s32.totalorder %s17, 3
    %p117 = scmp.ne.s32.totalorder %s112, %s114
    %p118 = scmp.eq.s32.totalorder %s17, 0
    %p119 = por %p117, %p118
    %p120 = scmp.ne.s32.totalorder %s112, %s114
    %p121 = scmp.eq.s32.totalorder %s22, 3
    %p122 = por %p120, %p121
    %p123 = scmp.ne.s32.totalorder %s114, %s115
    %p124 = scmp.eq.s32.totalorder %s22, 0
    %p125 = por %p123, %p124
    %p126 = scmp.ne.s32.totalorder %s114, %s115
    %p127 = scmp.eq.s32.totalorder %s23, 3
    %p128 = por %p126, %p127
    %p130 = scmp.ne.s32.totalorder %s115, %s129
    %p131 = scmp.eq.s32.totalorder %s23, 0
    %p132 = por %p130, %p131
    %s134 = sadd.s32 %s133, 1
    %p137 = scmp.eq.s32.totalorder %s17, 3
    %p138 = scmp.ne.s32.totalorder %s133, %s135
    %p139 = scmp.eq.s32.totalorder %s17, 0
    %p140 = por %p138, %p139
    %p141 = scmp.ne.s32.totalorder %s133, %s135
    %p142 = scmp.eq.s32.totalorder %s22, 3
    %p143 = por %p141, %p142
    %p144 = scmp.ne.s32.totalorder %s135, %s136
    %p145 = scmp.eq.s32.totalorder %s22, 0
    %p146 = por %p144, %p145
    %p147 = scmp.ne.s32.totalorder %s135, %s136
    %p148 = scmp.eq.s32.totalorder %s23, 3
    %p149 = por %p147, %p148
    %p151 = scmp.ne.s32.totalorder %s136, %s150
    %p152 = scmp.eq.s32.totalorder %s23, 0
    %p153 = por %p151, %p152
    %s155 = sadd.s32 %s154, 1
    %p158 = scmp.eq.s32.totalorder %s17, 3
    %p159 = scmp.ne.s32.totalorder %s154, %s156
    %p160 = scmp.eq.s32.totalorder %s17, 0
    %p161 = por %p159, %p160
    %p162 = scmp.ne.s32.totalorder %s154, %s156
    %p163 = scmp.eq.s32.totalorder %s22, 3
    %p164 = por %p162, %p163
    %p165 = scmp.ne.s32.totalorder %s156, %s157
    %p166 = scmp.eq.s32.totalorder %s22, 0
    %p167 = por %p165, %p166
    %p168 = scmp.ne.s32.totalorder %s156, %s157
    %p169 = scmp.eq.s32.totalorder %s23, 3
    %p170 = por %p168, %p169
    %p172 = scmp.ne.s32.totalorder %s157, %s171
    %p173 = scmp.eq.s32.totalorder %s23, 0
    %p174 = por %p172, %p173
    %s175 = ssub.s32 %s24, %s36
    %p176 = scmp.eq.s32.totalorder %s175, 0
    %s178 = sadd.s32 %s177, 1
    %s179 = scalar_select %p176, %s177, %s178
    %p182 = pneg %p176
    %p183 = scmp.eq.s32.totalorder %s17, 3
    %p184 = por %p182, %p183
    %p185 = scmp.ne.s32.totalorder %s177, %s180
    %p186 = scmp.eq.s32.totalorder %s17, 0
    %p187 = por %p185, %p186
    %p188 = scmp.ne.s32.totalorder %s177, %s180
    %p189 = scmp.eq.s32.totalorder %s22, 3
    %p190 = por %p188, %p189
    %p191 = scmp.ne.s32.totalorder %s180, %s181
    %p192 = scmp.eq.s32.totalorder %s22, 0
    %p193 = por %p191, %p192
    %p194 = scmp.ne.s32.totalorder %s180, %s181
    %p195 = scmp.eq.s32.totalorder %s23, 3
    %p196 = por %p194, %p195
    %p198 = scmp.ne.s32.totalorder %s181, %s197
    %p199 = scmp.eq.s32.totalorder %s23, 0
    %p200 = por %p198, %p199
    %s202 = sadd.s32 %s201, 1
    %p205 = scmp.eq.s32.totalorder %s17, 3
    %p206 = scmp.ne.s32.totalorder %s201, %s203
    %p207 = scmp.eq.s32.totalorder %s17, 0
    %p208 = por %p206, %p207
    %p209 = scmp.ne.s32.totalorder %s201, %s203
    %p210 = scmp.eq.s32.totalorder %s22, 3
    %p211 = por %p209, %p210
    %p212 = scmp.ne.s32.totalorder %s203, %s204
    %p213 = scmp.eq.s32.totalorder %s22, 0
    %p214 = por %p212, %p213
    %p215 = scmp.ne.s32.totalorder %s203, %s204
    %p216 = scmp.eq.s32.totalorder %s23, 3
    %p217 = por %p215, %p216
    %p219 = scmp.ne.s32.totalorder %s204, %s218
    %p220 = scmp.eq.s32.totalorder %s23, 0
    %p221 = por %p219, %p220
    %s223 = sadd.s32 %s222, 1
    %p226 = scmp.eq.s32.totalorder %s17, 3
    %p227 = scmp.ne.s32.totalorder %s222, %s224
    %p228 = scmp.eq.s32.totalorder %s17, 0
    %p229 = por %p227, %p228
    %p230 = scmp.ne.s32.totalorder %s222, %s224
    %p231 = scmp.eq.s32.totalorder %s22, 3
    %p232 = por %p230, %p231
    %p233 = scmp.ne.s32.totalorder %s224, %s225
    %p234 = scmp.eq.s32.totalorder %s22, 0
    %p235 = por %p233, %p234
    %p236 = scmp.ne.s32.totalorder %s224, %s225
    %p237 = scmp.eq.s32.totalorder %s23, 3
    %p238 = por %p236, %p237
    %p240 = scmp.ne.s32.totalorder %s225, %s239
    %p241 = scmp.eq.s32.totalorder %s23, 0
    %p242 = por %p240, %p241
    %s244 = sadd.s32 %s243, 1
    %p247 = scmp.eq.s32.totalorder %s17, 3
    %p248 = scmp.ne.s32.totalorder %s243, %s245
    %p249 = scmp.eq.s32.totalorder %s17, 0
    %p250 = por %p248, %p249
    %p251 = scmp.ne.s32.totalorder %s243, %s245
    %p252 = scmp.eq.s32.totalorder %s22, 3
    %p253 = por %p251, %p252
    %p254 = scmp.ne.s32.totalorder %s245, %s246
    %p255 = scmp.eq.s32.totalorder %s22, 0
    %p256 = por %p254, %p255
    %p257 = scmp.ne.s32.totalorder %s245, %s246
    %p258 = scmp.eq.s32.totalorder %s23, 3
    %p259 = por %p257, %p258
    %p261 = scmp.ne.s32.totalorder %s246, %s260
    %p262 = scmp.eq.s32.totalorder %s23, 0
    %p263 = por %p261, %p262
    %s264 = sadd.s32 %s25, 1
    %s265 = sadd.s32 %s32, 1
    %s266 = ssub.s32 %s24, %s36
    %s267 = ssub.s32 %s264, %s265
    %s268 = sor.u32 %s266, %s267
    %p269 = scmp.eq.s32.totalorder %s268, 0
    %s271 = sadd.s32 %s270, 1
    %s272 = scalar_select %p269, %s270, %s271
    %p275 = pneg %p269
    %p276 = scmp.eq.s32.totalorder %s17, 3
    %p277 = por %p275, %p276
    %p278 = scmp.ne.s32.totalorder %s270, %s273
    %p279 = scmp.eq.s32.totalorder %s17, 0
    %p280 = por %p278, %p279
    %p281 = scmp.ne.s32.totalorder %s270, %s273
    %p282 = scmp.eq.s32.totalorder %s22, 3
    %p283 = por %p281, %p282
    %p284 = scmp.ne.s32.totalorder %s273, %s274
    %p285 = scmp.eq.s32.totalorder %s22, 0
    %p286 = por %p284, %p285
    %p287 = scmp.ne.s32.totalorder %s273, %s274
    %p288 = scmp.eq.s32.totalorder %s23, 3
    %p289 = por %p287, %p288
    %p291 = scmp.ne.s32.totalorder %s274, %s290
    %p292 = scmp.eq.s32.totalorder %s23, 0
    %p293 = por %p291, %p292
    %s294 = sadd.s32 %s25, 1
    %s295 = sadd.s32 %s32, 1
    %s296 = ssub.s32 %s24, %s36
    %s297 = ssub.s32 %s294, %s295
    %s298 = sor.u32 %s296, %s297
    %p299 = scmp.eq.s32.totalorder %s298, 0
    %s301 = sadd.s32 %s300, 1
    %s302 = scalar_select %p299, %s300, %s301
    %p305 = pneg %p299
    %p306 = scmp.eq.s32.totalorder %s17, 3
    %p307 = por %p305, %p306
    %p308 = scmp.ne.s32.totalorder %s300, %s303
    %p309 = scmp.eq.s32.totalorder %s17, 0
    %p310 = por %p308, %p309
    %p311 = scmp.ne.s32.totalorder %s300, %s303
    %p312 = scmp.eq.s32.totalorder %s22, 3
    %p313 = por %p311, %p312
    %p314 = scmp.ne.s32.totalorder %s303, %s304
    %p315 = scmp.eq.s32.totalorder %s22, 0
    %p316 = por %p314, %p315
    %p317 = scmp.ne.s32.totalorder %s303, %s304
    %p318 = scmp.eq.s32.totalorder %s23, 3
    %p319 = por %p317, %p318
    %p321 = scmp.ne.s32.totalorder %s304, %s320
    %p322 = scmp.eq.s32.totalorder %s23, 0
    %p323 = por %p321, %p322
    %p324 = scmp.le.s32.totalorder 1, %s17
    %p325 = scmp.lt.s32.totalorder %s17, 5
    %p326 = pnand %p324, %p325
    %p327 = pneg %p326
    // Predicated region
    $region9: #{_lambda_.8} parent=5 // pred_check
      _
    $region10: #{_lambda_.8} parent=5 // pred_check_branch
      %329 = sbr.rel (%p326) target = $region12
    $region11: #{_lambda_.8} parent=5 // pred_region
      %s330 = ssub.s32 %s17, 1
      // Predicated region
      $region13: #{_lambda_.8} parent=11 // pred_check
        %p331 = pneg %p104
      $region14: #{_lambda_.8} parent=11 // pred_check_branch
        %333 = sbr.rel (%p331) target = $region16
      $region15: #{_lambda_.8} parent=11 // pred_region
        _
      $region16: #{_lambda_.8} parent=11 // pred_fallthru
        _
      // Predicated region
      $region17: #{_lambda_.8} parent=11 // pred_check
        %p334 = pneg %p125
      $region18: #{_lambda_.8} parent=11 // pred_check_branch
        %336 = sbr.rel (%p334) target = $region20
      $region19: #{_lambda_.8} parent=11 // pred_region
        _
      $region20: #{_lambda_.8} parent=11 // pred_fallthru
        _
      // Predicated region
      $region21: #{_lambda_.8} parent=11 // pred_check
        %p337 = pneg %p146
      $region22: #{_lambda_.8} parent=11 // pred_check_branch
        %339 = sbr.rel (%p337) target = $region24
      $region23: #{_lambda_.8} parent=11 // pred_region
        _
      $region24: #{_lambda_.8} parent=11 // pred_fallthru
        _
      // Predicated region
      $region25: #{_lambda_.8} parent=11 // pred_check
        %p340 = pneg %p167
      $region26: #{_lambda_.8} parent=11 // pred_check_branch
        %342 = sbr.rel (%p340) target = $region28
      $region27: #{_lambda_.8} parent=11 // pred_region
        _
      $region28: #{_lambda_.8} parent=11 // pred_fallthru
        _
      // Predicated region
      $region29: #{_lambda_.8} parent=11 // pred_check
        %p343 = pneg %p214
      $region30: #{_lambda_.8} parent=11 // pred_check_branch
        %345 = sbr.rel (%p343) target = $region32
      $region31: #{_lambda_.8} parent=11 // pred_region
        _
      $region32: #{_lambda_.8} parent=11 // pred_fallthru
        _
      // Predicated region
      $region33: #{_lambda_.8} parent=11 // pred_check
        %p346 = pneg %p235
      $region34: #{_lambda_.8} parent=11 // pred_check_branch
        %348 = sbr.rel (%p346) target = $region36
      $region35: #{_lambda_.8} parent=11 // pred_region
        _
      $region36: #{_lambda_.8} parent=11 // pred_fallthru
        _
      // Predicated region
      $region37: #{_lambda_.8} parent=11 // pred_check
        %p349 = pneg %p256
      $region38: #{_lambda_.8} parent=11 // pred_check_branch
        %351 = sbr.rel (%p349) target = $region40
      $region39: #{_lambda_.8} parent=11 // pred_region
        _
      $region40: #{_lambda_.8} parent=11 // pred_fallthru
        _
    $region12: #{_lambda_.8} parent=5 // pred_fallthru
      _
    %p352 = scmp.lt.s32.totalorder %s17, 4
    // Predicated region
    $region41: #{_lambda_.8} parent=5 // pred_check
      %p353 = pneg %p352
    $region42: #{_lambda_.8} parent=5 // pred_check_branch
      %355 = sbr.rel (%p353) target = $region44
    $region43: #{_lambda_.8} parent=5 // pred_region
      // Predicated region
      $region45: #{_lambda_.8} parent=43 // pred_check
        %p356 = pneg %p51
      $region46: #{_lambda_.8} parent=43 // pred_check_branch
        %358 = sbr.rel (%p356) target = $region48
      $region47: #{_lambda_.8} parent=43 // pred_region
        %s359 = smul.u32 16, %s25
        %p360 = scmp.lt.s32.totalorder %s24, 1
        %s361 = scalar_select %p360, %s24, 1
        %p362 = scmp.lt.s32.totalorder %s359, 31
        %s363 = scalar_select %p362, %s359, 31
        %s364 = smul.addr %s361, 32
        %s365 = sadd.s32 %s363, %s364
        %s366 = smul.addr %s365, 4
        %s367 = scalar_lea.vmem %s0, %s366
        %s368 = smul.u32 16, %s25
      $region48: #{_lambda_.8} parent=43 // pred_fallthru
        _
      // Predicated region
      $region49: #{_lambda_.8} parent=43 // pred_check
        %p369 = pneg %p77
      $region50: #{_lambda_.8} parent=43 // pred_check_branch
        %371 = sbr.rel (%p369) target = $region52
      $region51: #{_lambda_.8} parent=43 // pred_region
        %p372 = scmp.lt.s32.totalorder %s24, 1
        %s373 = scalar_select %p372, %s24, 1
        %s374 = smul.addr %s373, 2
        %s375 = scalar_lea.vmem %s1, %s374
      $region52: #{_lambda_.8} parent=43 // pred_fallthru
        _
      // Predicated region
      $region53: #{_lambda_.8} parent=43 // pred_check
        %p376 = pneg %p187
      $region54: #{_lambda_.8} parent=43 // pred_check_branch
        %378 = sbr.rel (%p376) target = $region56
      $region55: #{_lambda_.8} parent=43 // pred_region
        %p379 = scmp.lt.s32.totalorder %s24, 1
        %s380 = scalar_select %p379, %s24, 1
        %s381 = smul.addr %s380, 2
        %s382 = smul.addr %s381, 2
        %s383 = scalar_lea.vmem %s6, %s382
      $region56: #{_lambda_.8} parent=43 // pred_fallthru
        _
      // Predicated region
      $region57: #{_lambda_.8} parent=43 // pred_check
        %p384 = pneg %p280
      $region58: #{_lambda_.8} parent=43 // pred_check_branch
        %386 = sbr.rel (%p384) target = $region60
      $region59: #{_lambda_.8} parent=43 // pred_region
        %s387 = sadd.s32 %s25, 1
        %s388 = smul.u32 16, %s387
        %p389 = scmp.lt.s32.totalorder %s24, 1
        %s390 = scalar_select %p389, %s24, 1
        %p391 = scmp.lt.s32.totalorder %s388, 63
        %s392 = scalar_select %p391, %s388, 63
        %s393 = smul.addr %s390, 64
        %s394 = sadd.s32 %s392, %s393
        %s395 = smul.addr %s394, 8
        %s396 = scalar_lea.vmem %s10, %s395
        %s397 = sadd.s32 %s25, 1
        %s398 = smul.u32 16, %s397
      $region60: #{_lambda_.8} parent=43 // pred_fallthru
        _
    $region44: #{_lambda_.8} parent=5 // pred_fallthru
      _
    %p399 = scmp.le.s32.totalorder 1, %s17
    %p400 = scmp.lt.s32.totalorder %s17, 5
    %p401 = pnand %p399, %p400
    %p402 = pneg %p401
    // Predicated region
    $region61: #{_lambda_.8} parent=5 // pred_check
      _
    $region62: #{_lambda_.8} parent=5 // pred_check_branch
      %404 = sbr.rel (%p401) target = $region64
    $region63: #{_lambda_.8} parent=5 // pred_region
      %s405 = ssub.s32 %s17, 1
      %s406 = smul.u32 16, %s27
      %p407 = scmp.lt.s32.totalorder %s26, 1
      %s408 = scalar_select %p407, %s26, 1
      %p409 = scmp.lt.s32.totalorder %s406, 31
      %s410 = scalar_select %p409, %s406, 31
      %s411 = smul.addr %s408, 32
      %s412 = sadd.s32 %s410, %s411
      %s413 = smul.addr %s412, 4
      %s414 = scalar_lea.vmem %s0, %s413
      %p415 = pneg %p57
      %p416 = pneg %p54
      %p417 = scmp.lt.s32.totalorder %s26, 1
      %s418 = scalar_select %p417, %s26, 1
      %s419 = smul.addr %s418, 2
      %s420 = scalar_lea.vmem %s1, %s419
      %p421 = pneg %p83
      %p422 = pneg %p80
      %p423 = pneg %p104
      %p424 = pneg %p101
      %p425 = pneg %p125
      %p426 = pneg %p122
      %p427 = pneg %p146
      %p428 = pneg %p143
      %p429 = pneg %p167
      %p430 = pneg %p164
      %p431 = scmp.lt.s32.totalorder %s26, 1
      %s432 = scalar_select %p431, %s26, 1
      %s433 = smul.addr %s432, 2
      %s434 = smul.addr %s433, 2
      %s435 = scalar_lea.vmem %s6, %s434
      %p436 = pneg %p193
      %p437 = pneg %p190
      %p438 = pneg %p214
      %p439 = pneg %p211
      %p440 = pneg %p235
      %p441 = pneg %p232
      %p442 = pneg %p256
      %p443 = pneg %p253
      %s444 = sadd.s32 %s27, 1
      %s445 = smul.u32 16, %s444
      %p446 = scmp.lt.s32.totalorder %s26, 1
      %s447 = scalar_select %p446, %s26, 1
      %p448 = scmp.lt.s32.totalorder %s445, 63
      %s449 = scalar_select %p448, %s445, 63
      %s450 = smul.addr %s447, 64
      %s451 = sadd.s32 %s449, %s450
      %s452 = smul.addr %s451, 8
      %s453 = scalar_lea.vmem %s10, %s452
      %p454 = pneg %p286
      %p455 = pneg %p283
      %p456 = pneg %p316
      %p457 = pneg %p313
      %s458 = sadd.s32 %s27, 1
      %s459 = smul.u32 16, %s458
      %p460 = scmp.lt.s32.totalorder %s26, 1
      %s461 = scalar_select %p460, %s26, 1
      %p462 = scmp.lt.s32.totalorder %s459, 63
      %s463 = scalar_select %p462, %s459, 63
      %s464 = smul.addr %s461, 64
      %s465 = sadd.s32 %s463, %s464
      %s466 = smul.addr %s465, 8
      %s467 = scalar_lea.vmem %s11, %s466
      %s468 = smul.u32 16, %s27
      %p469 = scmp.lt.s32.totalorder %s26, 1
      %s470 = scalar_select %p469, %s26, 1
      %p471 = scmp.lt.s32.totalorder %s468, 31
      %s472 = scalar_select %p471, %s468, 31
      %s473 = smul.addr %s470, 32
      %s474 = sadd.s32 %s472, %s473
      %s475 = smul.addr %s474, 4
      %s476 = scalar_lea.vmem %s0, %s475
      %s477 = smul.u32 16, %s27
      %p478 = scmp.lt.s32.totalorder %s26, 1
      %s479 = scalar_select %p478, %s26, 1
      %s480 = smul.addr %s479, 2
      %s481 = scalar_lea.vmem %s1, %s480
      %p482 = scmp.lt.s32.totalorder %s26, 1
      %s483 = scalar_select %p482, %s26, 1
      %s484 = smul.addr %s483, 2
      %s485 = smul.addr %s484, 2
      %s486 = scalar_lea.vmem %s6, %s485
      %s487 = sadd.s32 %s27, 1
      %s488 = smul.u32 16, %s487
      %p489 = scmp.lt.s32.totalorder %s26, 1
      %s490 = scalar_select %p489, %s26, 1
      %p491 = scmp.lt.s32.totalorder %s488, 63
      %s492 = scalar_select %p491, %s488, 63
      %s493 = smul.addr %s490, 64
      %s494 = sadd.s32 %s492, %s493
      %s495 = smul.addr %s494, 8
      %s496 = scalar_lea.vmem %s10, %s495
      %s497 = sadd.s32 %s27, 1
      %s498 = smul.u32 16, %s497
      %s499 = sadd.s32 %s27, 1
      %s500 = smul.u32 16, %s499
      %p501 = scmp.lt.s32.totalorder %s26, 1
      %s502 = scalar_select %p501, %s26, 1
      %p503 = scmp.lt.s32.totalorder %s500, 63
      %s504 = scalar_select %p503, %s500, 63
      %s505 = smul.addr %s502, 64
      %s506 = sadd.s32 %s504, %s505
      %s507 = smul.addr %s506, 8
      %s508 = scalar_lea.vmem %s11, %s507
      %s509 = sadd.s32 %s27, 1
      %s510 = smul.u32 16, %s509
      %v511 = vld [vmem:[%s476] sm:$0xf]
      %v512 = vld [vmem:[%s476 + $0x4] sm:$0xf]
      %v513 = vld [vmem:[%s476 + $0x8] sm:$0xf]
      %v514 = vld [vmem:[%s476 + $0xc] sm:$0xf]
      %v515 = vld [vmem:[%s476 + $0x10] sm:$0xf]
      %v516 = vld [vmem:[%s476 + $0x14] sm:$0xf]
      %v517 = vld [vmem:[%s476 + $0x18] sm:$0xf]
      %v518 = vld [vmem:[%s476 + $0x1c] sm:$0xf]
      %v519 = vld [vmem:[%s476 + $0x20] sm:$0xf]
      %v520 = vld [vmem:[%s476 + $0x24] sm:$0xf]
      %v521 = vld [vmem:[%s476 + $0x28] sm:$0xf]
      %v522 = vld [vmem:[%s476 + $0x2c] sm:$0xf]
      %v523 = vld [vmem:[%s476 + $0x30] sm:$0xf]
      %v524 = vld [vmem:[%s476 + $0x34] sm:$0xf]
      %v525 = vld [vmem:[%s476 + $0x38] sm:$0xf]
      %v526 = vld [vmem:[%s476 + $0x3c] sm:$0xf]
      %v527 = vunpack.c.l.bf16 %v511
      %v528 = vunpack.c.l.bf16 %v512
      %v529 = vunpack.c.l.bf16 %v513
      %v530 = vunpack.c.l.bf16 %v514
      %v531 = vunpack.c.l.bf16 %v515
      %v532 = vunpack.c.l.bf16 %v516
      %v533 = vunpack.c.l.bf16 %v517
      %v534 = vunpack.c.l.bf16 %v518
      %v535 = vunpack.c.l.bf16 %v519
      %v536 = vunpack.c.l.bf16 %v520
      %v537 = vunpack.c.l.bf16 %v521
      %v538 = vunpack.c.l.bf16 %v522
      %v539 = vunpack.c.l.bf16 %v523
      %v540 = vunpack.c.l.bf16 %v524
      %v541 = vunpack.c.l.bf16 %v525
      %v542 = vunpack.c.l.bf16 %v526
      %v543 = vld [vmem:[%s481] sm:$0x3]
      %v544 = vld [vmem:[%s2] sm:$0x1]
      %v545 = vld [vmem:[%s3] sm:$0x1]
      %v546 = vld [vmem:[%s4] sm:$0xff]
      %v547 = vld [vmem:[%s4 + $0x8] sm:$0xff]
      %v548 = vld [vmem:[%s4 + $0x10] sm:$0xff]
      %v549 = vld [vmem:[%s4 + $0x18] sm:$0xff]
      %v550 = vld [vmem:[%s4 + $0x20] sm:$0xff]
      %v551 = vld [vmem:[%s4 + $0x28] sm:$0xff]
      %v552 = vld [vmem:[%s4 + $0x30] sm:$0xff]
      %v553 = vld [vmem:[%s4 + $0x38] sm:$0xff]
      %v554 = vld [vmem:[%s4 + $0x40] sm:$0xff]
      %v555 = vld [vmem:[%s4 + $0x48] sm:$0xff]
      %v556 = vld [vmem:[%s4 + $0x50] sm:$0xff]
      %v557 = vld [vmem:[%s4 + $0x58] sm:$0xff]
      %v558 = vld [vmem:[%s4 + $0x60] sm:$0xff]
      %v559 = vld [vmem:[%s4 + $0x68] sm:$0xff]
      %v560 = vld [vmem:[%s4 + $0x70] sm:$0xff]
      %v561 = vld [vmem:[%s4 + $0x78] sm:$0xff]
      %v562 = vld [vmem:[%s5] sm:$0x3]
      %vm563 = vcmask 1040384
      %v564 = vsel %vm563, %v543, 0.0
      %565 = vadd.xlane.f32.xlu0 %v564
      %v566 = vpop.xlane.xlu0 %565
      %v567 = vrot.slane %v566, 4
      %v568 = vadd.f32 %v566, %v567
      %v569 = vrot.slane %v568, 2
      %v570 = vadd.f32 %v568, %v569
      %v571 = vrot.slane %v570, 1
      %v572 = vadd.f32 %v570, %v571
      %s573 = vtos %v572
      %v574 = vstv %s573
      %v575 = vrcp.pop 1000.0
      %v576 = vmul.f32 1000.0, %v575
      %v577 = vsub.f32 1.0, %v576
      %v578 = vmul.f32 %v575, %v577
      %v579 = vadd.f32 %v575, %v578
      %vm580 = vweird.f32 %v575
      %v581 = vsel %vm580, %v575, %v579
      %v582 = vmul.f32 %v574, %v581
      %v584 = vrot.slane %v543, 1
      %v586 = vsel %vm563, %v584, 0.0
      %587 = vadd.xlane.f32.xlu0 %v586
      %v588 = vpop.xlane.xlu0 %587
      %v589 = vrot.slane %v588, 4
      %v590 = vadd.f32 %v588, %v589
      %v591 = vrot.slane %v590, 2
      %v592 = vadd.f32 %v590, %v591
      %v593 = vrot.slane %v592, 1
      %v594 = vadd.f32 %v592, %v593
      %s595 = vtos %v594
      %v596 = vstv %s595
      %v597 = vmul.f32 %v596, %v581
      %v598 = vmul.f32 %v582, %v582
      %v599 = vsub.f32 %v597, %v598
      %v600 = vmax.f32 %v599, 0.0
      %v601 = vadd.f32 %v600, 1e-05
      %v602 = vrsqrt.pop %v601
      %v603 = vmul.f32 %v602, %v601
      %v604 = vmul.f32 %v603, %v602
      %v605 = vmul.f32 0.5, %v604
      %v606 = vsub.f32 1.5, %v605
      %v607 = vmul.f32 %v602, %v606
      %vm608 = vweird.f32 %v601
      %vm609 = vweird.f32 %v602
      %vm610 = vmor %vm608, %vm609
      %v611 = vsel %vm610, %v602, %v607
      %v612 = vsub.f32 %v527, %v582
      %v613 = vsub.f32 %v528, %v582
      %v614 = vsub.f32 %v529, %v582
      %v615 = vsub.f32 %v530, %v582
      %v616 = vsub.f32 %v531, %v582
      %v617 = vsub.f32 %v532, %v582
      %v618 = vsub.f32 %v533, %v582
      %v619 = vsub.f32 %v534, %v582
      %v620 = vsub.f32 %v535, %v582
      %v621 = vsub.f32 %v536, %v582
      %v622 = vsub.f32 %v537, %v582
      %v623 = vsub.f32 %v538, %v582
      %v624 = vsub.f32 %v539, %v582
      %v625 = vsub.f32 %v540, %v582
      %v626 = vsub.f32 %v541, %v582
      %v627 = vsub.f32 %v542, %v582
      %v628 = vmul.f32 %v612, %v611
      %v629 = vmul.f32 %v613, %v611
      %v630 = vmul.f32 %v614, %v611
      %v631 = vmul.f32 %v615, %v611
      %v632 = vmul.f32 %v616, %v611
      %v633 = vmul.f32 %v617, %v611
      %v634 = vmul.f32 %v618, %v611
      %v635 = vmul.f32 %v619, %v611
      %v636 = vmul.f32 %v620, %v611
      %v637 = vmul.f32 %v621, %v611
      %v638 = vmul.f32 %v622, %v611
      %v639 = vmul.f32 %v623, %v611
      %v640 = vmul.f32 %v624, %v611
      %v641 = vmul.f32 %v625, %v611
      %v642 = vmul.f32 %v626, %v611
      %v643 = vmul.f32 %v627, %v611
      %v645 = vperm.slane %v544, 0
      %v647 = vmul.f32 %v628, %v645
      %v648 = vmul.f32 %v629, %v645
      %v649 = vmul.f32 %v630, %v645
      %v650 = vmul.f32 %v631, %v645
      %v651 = vmul.f32 %v632, %v645
      %v652 = vmul.f32 %v633, %v645
      %v653 = vmul.f32 %v634, %v645
      %v654 = vmul.f32 %v635, %v645
      %v655 = vmul.f32 %v636, %v645
      %v656 = vmul.f32 %v637, %v645
      %v657 = vmul.f32 %v638, %v645
      %v658 = vmul.f32 %v639, %v645
      %v659 = vmul.f32 %v640, %v645
      %v660 = vmul.f32 %v641, %v645
      %v661 = vmul.f32 %v642, %v645
      %v662 = vmul.f32 %v643, %v645
      %v664 = vperm.slane %v545, 0
      %v666 = vadd.f32 %v647, %v664
      %v667 = vadd.f32 %v648, %v664
      %v668 = vadd.f32 %v649, %v664
      %v669 = vadd.f32 %v650, %v664
      %v670 = vadd.f32 %v651, %v664
      %v671 = vadd.f32 %v652, %v664
      %v672 = vadd.f32 %v653, %v664
      %v673 = vadd.f32 %v654, %v664
      %v674 = vadd.f32 %v655, %v664
      %v675 = vadd.f32 %v656, %v664
      %v676 = vadd.f32 %v657, %v664
      %v677 = vadd.f32 %v658, %v664
      %v678 = vadd.f32 %v659, %v664
      %v679 = vadd.f32 %v660, %v664
      %v680 = vadd.f32 %v661, %v664
      %v681 = vadd.f32 %v662, %v664
      %v682 = vmul.f32 %v666, %v666
      %v683 = vmul.f32 %v667, %v667
      %v684 = vmul.f32 %v668, %v668
      %v685 = vmul.f32 %v669, %v669
      %v686 = vmul.f32 %v670, %v670
      %v687 = vmul.f32 %v671, %v671
      %v688 = vmul.f32 %v672, %v672
      %v689 = vmul.f32 %v673, %v673
      %v690 = vmul.f32 %v674, %v674
      %v691 = vmul.f32 %v675, %v675
      %v692 = vmul.f32 %v676, %v676
      %v693 = vmul.f32 %v677, %v677
      %v694 = vmul.f32 %v678, %v678
      %v695 = vmul.f32 %v679, %v679
      %v696 = vmul.f32 %v680, %v680
      %v697 = vmul.f32 %v681, %v681
      %v698 = vmul.f32 %v666, %v682
      %v699 = vmul.f32 %v667, %v683
      %v700 = vmul.f32 %v668, %v684
      %v701 = vmul.f32 %v669, %v685
      %v702 = vmul.f32 %v670, %v686
      %v703 = vmul.f32 %v671, %v687
      %v704 = vmul.f32 %v672, %v688
      %v705 = vmul.f32 %v673, %v689
      %v706 = vmul.f32 %v674, %v690
      %v707 = vmul.f32 %v675, %v691
      %v708 = vmul.f32 %v676, %v692
      %v709 = vmul.f32 %v677, %v693
      %v710 = vmul.f32 %v678, %v694
      %v711 = vmul.f32 %v679, %v695
      %v712 = vmul.f32 %v680, %v696
      %v713 = vmul.f32 %v681, %v697
      %v714 = vmul.f32 %v698, 0.044715
      %v715 = vmul.f32 %v699, 0.044715
      %v716 = vmul.f32 %v700, 0.044715
      %v717 = vmul.f32 %v701, 0.044715
      %v718 = vmul.f32 %v702, 0.044715
      %v719 = vmul.f32 %v703, 0.044715
      %v720 = vmul.f32 %v704, 0.044715
      %v721 = vmul.f32 %v705, 0.044715
      %v722 = vmul.f32 %v706, 0.044715
      %v723 = vmul.f32 %v707, 0.044715
      %v724 = vmul.f32 %v708, 0.044715
      %v725 = vmul.f32 %v709, 0.044715
      %v726 = vmul.f32 %v710, 0.044715
      %v727 = vmul.f32 %v711, 0.044715
      %v728 = vmul.f32 %v712, 0.044715
      %v729 = vmul.f32 %v713, 0.044715
      %v730 = vadd.f32 %v666, %v714
      %v731 = vadd.f32 %v667, %v715
      %v732 = vadd.f32 %v668, %v716
      %v733 = vadd.f32 %v669, %v717
      %v734 = vadd.f32 %v670, %v718
      %v735 = vadd.f32 %v671, %v719
      %v736 = vadd.f32 %v672, %v720
      %v737 = vadd.f32 %v673, %v721
      %v738 = vadd.f32 %v674, %v722
      %v739 = vadd.f32 %v675, %v723
      %v740 = vadd.f32 %v676, %v724
      %v741 = vadd.f32 %v677, %v725
      %v742 = vadd.f32 %v678, %v726
      %v743 = vadd.f32 %v679, %v727
      %v744 = vadd.f32 %v680, %v728
      %v745 = vadd.f32 %v681, %v729
      %v746 = vmul.f32 %v730, 0.7978846
      %v747 = vmul.f32 %v731, 0.7978846
      %v748 = vmul.f32 %v732, 0.7978846
      %v749 = vmul.f32 %v733, 0.7978846
      %v750 = vmul.f32 %v734, 0.7978846
      %v751 = vmul.f32 %v735, 0.7978846
      %v752 = vmul.f32 %v736, 0.7978846
      %v753 = vmul.f32 %v737, 0.7978846
      %v754 = vmul.f32 %v738, 0.7978846
      %v755 = vmul.f32 %v739, 0.7978846
      %v756 = vmul.f32 %v740, 0.7978846
      %v757 = vmul.f32 %v741, 0.7978846
      %v758 = vmul.f32 %v742, 0.7978846
      %v759 = vmul.f32 %v743, 0.7978846
      %v760 = vmul.f32 %v744, 0.7978846
      %v761 = vmul.f32 %v745, 0.7978846
      %v762 = vtanh.pop %v746
      %v763 = vtanh.pop %v747
      %v764 = vtanh.pop %v748
      %v765 = vtanh.pop %v749
      %v766 = vtanh.pop %v750
      %v767 = vtanh.pop %v751
      %v768 = vtanh.pop %v752
      %v769 = vtanh.pop %v753
      %v770 = vtanh.pop %v754
      %v771 = vtanh.pop %v755
      %v772 = vtanh.pop %v756
      %v773 = vtanh.pop %v757
      %v774 = vtanh.pop %v758
      %v775 = vtanh.pop %v759
      %v776 = vtanh.pop %v760
      %v777 = vtanh.pop %v761
      %v778 = vadd.f32 %v762, 1.0
      %v779 = vadd.f32 %v763, 1.0
      %v780 = vadd.f32 %v764, 1.0
      %v781 = vadd.f32 %v765, 1.0
      %v782 = vadd.f32 %v766, 1.0
      %v783 = vadd.f32 %v767, 1.0
      %v784 = vadd.f32 %v768, 1.0
      %v785 = vadd.f32 %v769, 1.0
      %v786 = vadd.f32 %v770, 1.0
      %v787 = vadd.f32 %v771, 1.0
      %v788 = vadd.f32 %v772, 1.0
      %v789 = vadd.f32 %v773, 1.0
      %v790 = vadd.f32 %v774, 1.0
      %v791 = vadd.f32 %v775, 1.0
      %v792 = vadd.f32 %v776, 1.0
      %v793 = vadd.f32 %v777, 1.0
      %v794 = vmul.f32 %v778, 0.5
      %v795 = vmul.f32 %v779, 0.5
      %v796 = vmul.f32 %v780, 0.5
      %v797 = vmul.f32 %v781, 0.5
      %v798 = vmul.f32 %v782, 0.5
      %v799 = vmul.f32 %v783, 0.5
      %v800 = vmul.f32 %v784, 0.5
      %v801 = vmul.f32 %v785, 0.5
      %v802 = vmul.f32 %v786, 0.5
      %v803 = vmul.f32 %v787, 0.5
      %v804 = vmul.f32 %v788, 0.5
      %v805 = vmul.f32 %v789, 0.5
      %v806 = vmul.f32 %v790, 0.5
      %v807 = vmul.f32 %v791, 0.5
      %v808 = vmul.f32 %v792, 0.5
      %v809 = vmul.f32 %v793, 0.5
      %v810 = vmul.f32 %v666, %v794
      %v811 = vmul.f32 %v667, %v795
      %v812 = vmul.f32 %v668, %v796
      %v813 = vmul.f32 %v669, %v797
      %v814 = vmul.f32 %v670, %v798
      %v815 = vmul.f32 %v671, %v799
      %v816 = vmul.f32 %v672, %v800
      %v817 = vmul.f32 %v673, %v801
      %v818 = vmul.f32 %v674, %v802
      %v819 = vmul.f32 %v675, %v803
      %v820 = vmul.f32 %v676, %v804
      %v821 = vmul.f32 %v677, %v805
      %v822 = vmul.f32 %v678, %v806
      %v823 = vmul.f32 %v679, %v807
      %v824 = vmul.f32 %v680, %v808
      %v825 = vmul.f32 %v681, %v809
      %v826 = vpack.c.bf16 %v811, %v810
      %v827 = vpack.c.bf16 %v813, %v812
      %v828 = vpack.c.bf16 %v815, %v814
      %v829 = vpack.c.bf16 %v817, %v816
      %v830 = vpack.c.bf16 %v819, %v818
      %v831 = vpack.c.bf16 %v821, %v820
      %v832 = vpack.c.bf16 %v823, %v822
      %v833 = vpack.c.bf16 %v825, %v824
      %v835 = vperm.slane %v562, 0
      %v836 = vperm.slane %v562, 1
      %v855 = vunpack.c.l.b16 %v546
      %v856 = vunpack.c.h.b16 %v546
      %v857 = vunpack.c.l.b16 %v547
      %v858 = vunpack.c.h.b16 %v547
      %v859 = vunpack.c.l.b16 %v548
      %v860 = vunpack.c.h.b16 %v548
      %v861 = vunpack.c.l.b16 %v549
      %v862 = vunpack.c.h.b16 %v549
      %v863 = vunpack.c.l.b16 %v550
      %v864 = vunpack.c.h.b16 %v550
      %v865 = vunpack.c.l.b16 %v551
      %v866 = vunpack.c.h.b16 %v551
      %v867 = vunpack.c.l.b16 %v552
      %v868 = vunpack.c.h.b16 %v552
      %v869 = vunpack.c.l.b16 %v553
      %v870 = vunpack.c.h.b16 %v553
      %v871 = vunpack.c.l.b16 %v554
      %v872 = vunpack.c.h.b16 %v554
      %v873 = vunpack.c.l.b16 %v555
      %v874 = vunpack.c.h.b16 %v555
      %v875 = vunpack.c.l.b16 %v556
      %v876 = vunpack.c.h.b16 %v556
      %v877 = vunpack.c.l.b16 %v557
      %v878 = vunpack.c.h.b16 %v557
      %v879 = vunpack.c.l.b16 %v558
      %v880 = vunpack.c.h.b16 %v558
      %v881 = vunpack.c.l.b16 %v559
      %v882 = vunpack.c.h.b16 %v559
      %v883 = vunpack.c.l.b16 %v560
      %v884 = vunpack.c.h.b16 %v560
      %v885 = vunpack.c.l.b16 %v561
      %v886 = vunpack.c.h.b16 %v561
      %v887 = vpack.c.b16 %v857, %v855
      %v888 = vpack.c.b16 %v858, %v856
      %v889 = vpack.c.b16 %v861, %v859
      %v890 = vpack.c.b16 %v862, %v860
      %v891 = vpack.c.b16 %v865, %v863
      %v892 = vpack.c.b16 %v866, %v864
      %v893 = vpack.c.b16 %v869, %v867
      %v894 = vpack.c.b16 %v870, %v868
      %v895 = vpack.c.b16 %v873, %v871
      %v896 = vpack.c.b16 %v874, %v872
      %v897 = vpack.c.b16 %v877, %v875
      %v898 = vpack.c.b16 %v878, %v876
      %v899 = vpack.c.b16 %v881, %v879
      %v900 = vpack.c.b16 %v882, %v880
      %v901 = vpack.c.b16 %v885, %v883
      %v902 = vpack.c.b16 %v886, %v884
      %919 = vmatpush.bf16.msra.mxu0 %v901
      %920 = vmatpush.bf16.msra.mxu0 %v899
      %921 = vmatpush.bf16.msra.mxu0 %v897
      %922 = vmatpush.bf16.msra.mxu0 %v895
      %923 = vmatpush.bf16.msra.mxu0 %v893
      %924 = vmatpush.bf16.msra.mxu0 %v891
      %925 = vmatpush.bf16.msra.mxu0 %v889
      %926 = vmatpush.bf16.msra.mxu0 %v887
      %927 = vmatmul.bf16.gmra.mxu0 %v826
      %v928 = vpop.f32.mrf.mxu0
      %v929 = vadd.f32 %v835, %v928
      %v930 = vpop.f32.mrf.mxu0
      %v931 = vadd.f32 %v835, %v930
      %932 = vmatmul.bf16.gmra.mxu0 %v827
      %v933 = vpop.f32.mrf.mxu0
      %v934 = vadd.f32 %v835, %v933
      %v935 = vpop.f32.mrf.mxu0
      %v936 = vadd.f32 %v835, %v935
      %937 = vmatmul.bf16.gmra.mxu0 %v828
      %v938 = vpop.f32.mrf.mxu0
      %v939 = vadd.f32 %v835, %v938
      %v940 = vpop.f32.mrf.mxu0
      %v941 = vadd.f32 %v835, %v940
      %942 = vmatmul.bf16.gmra.mxu0 %v829
      %v943 = vpop.f32.mrf.mxu0
      %v944 = vadd.f32 %v835, %v943
      %v945 = vpop.f32.mrf.mxu0
      %v946 = vadd.f32 %v835, %v945
      %947 = vmatmul.bf16.gmra.mxu0 %v830
      %v948 = vpop.f32.mrf.mxu0
      %v949 = vadd.f32 %v835, %v948
      %v950 = vpop.f32.mrf.mxu0
      %v951 = vadd.f32 %v835, %v950
      %952 = vmatmul.bf16.gmra.mxu0 %v831
      %v953 = vpop.f32.mrf.mxu0
      %v954 = vadd.f32 %v835, %v953
      %v955 = vpop.f32.mrf.mxu0
      %v956 = vadd.f32 %v835, %v955
      %957 = vmatmul.bf16.gmra.mxu0 %v832
      %v958 = vpop.f32.mrf.mxu0
      %v959 = vadd.f32 %v835, %v958
      %v960 = vpop.f32.mrf.mxu0
      %v961 = vadd.f32 %v835, %v960
      %962 = vmatmul.bf16.gmra.mxu0 %v833
      %v963 = vpop.f32.mrf.mxu0
      %v964 = vadd.f32 %v835, %v963
      %v965 = vpop.f32.mrf.mxu0
      %v966 = vadd.f32 %v835, %v965
      %967 = vdwg.mxu0
      %968 = vmatpush.bf16.msra.mxu0 %v902
      %969 = vmatpush.bf16.msra.mxu0 %v900
      %970 = vmatpush.bf16.msra.mxu0 %v898
      %971 = vmatpush.bf16.msra.mxu0 %v896
      %972 = vmatpush.bf16.msra.mxu0 %v894
      %973 = vmatpush.bf16.msra.mxu0 %v892
      %974 = vmatpush.bf16.msra.mxu0 %v890
      %975 = vmatpush.bf16.msra.mxu0 %v888
      %976 = vmatmul.bf16.gmra.mxu0 %v826
      %v977 = vpop.f32.mrf.mxu0
      %v978 = vadd.f32 %v836, %v977
      %v979 = vpop.f32.mrf.mxu0
      %v980 = vadd.f32 %v836, %v979
      %981 = vmatmul.bf16.gmra.mxu0 %v827
      %v982 = vpop.f32.mrf.mxu0
      %v983 = vadd.f32 %v836, %v982
      %v984 = vpop.f32.mrf.mxu0
      %v985 = vadd.f32 %v836, %v984
      %986 = vmatmul.bf16.gmra.mxu0 %v828
      %v987 = vpop.f32.mrf.mxu0
      %v988 = vadd.f32 %v836, %v987
      %v989 = vpop.f32.mrf.mxu0
      %v990 = vadd.f32 %v836, %v989
      %991 = vmatmul.bf16.gmra.mxu0 %v829
      %v992 = vpop.f32.mrf.mxu0
      %v993 = vadd.f32 %v836, %v992
      %v994 = vpop.f32.mrf.mxu0
      %v995 = vadd.f32 %v836, %v994
      %996 = vmatmul.bf16.gmra.mxu0 %v830
      %v997 = vpop.f32.mrf.mxu0
      %v998 = vadd.f32 %v836, %v997
      %v999 = vpop.f32.mrf.mxu0
      %v1000 = vadd.f32 %v836, %v999
      %1001 = vmatmul.bf16.gmra.mxu0 %v831
      %v1002 = vpop.f32.mrf.mxu0
      %v1003 = vadd.f32 %v836, %v1002
      %v1004 = vpop.f32.mrf.mxu0
      %v1005 = vadd.f32 %v836, %v1004
      %1006 = vmatmul.bf16.gmra.mxu0 %v832
      %v1007 = vpop.f32.mrf.mxu0
      %v1008 = vadd.f32 %v836, %v1007
      %v1009 = vpop.f32.mrf.mxu0
      %v1010 = vadd.f32 %v836, %v1009
      %1011 = vmatmul.bf16.gmra.mxu0 %v833
      %v1012 = vpop.f32.mrf.mxu0
      %v1013 = vadd.f32 %v836, %v1012
      %v1014 = vpop.f32.mrf.mxu0
      %v1015 = vadd.f32 %v836, %v1014
      %1016 = vdwg.mxu0
      %v1017 = vld [vmem:[%s486] sm:$0xf]
      %v1019 = vperm.slane %v1017, 0
      %v1020 = vperm.slane %v1017, 2
      %v1023 = vsel %vm563, %v1019, 0.0
      %v1024 = vsel %vm563, %v1020, 0.0
      %v1025 = vadd.f32 %v1023, %v1024
      %1026 = vadd.xlane.f32.xlu0 %v1025
      %v1027 = vpop.xlane.xlu0 %1026
      %v1028 = vrot.slane %v1027, 4
      %v1029 = vadd.f32 %v1027, %v1028
      %v1030 = vrot.slane %v1029, 2
      %v1031 = vadd.f32 %v1029, %v1030
      %v1032 = vrot.slane %v1031, 1
      %v1033 = vadd.f32 %v1031, %v1032
      %s1034 = vtos %v1033
      %v1035 = vstv %s1034
      %v1036 = vrcp.pop 8000.0
      %v1037 = vmul.f32 8000.0, %v1036
      %v1038 = vsub.f32 1.0, %v1037
      %v1039 = vmul.f32 %v1036, %v1038
      %v1040 = vadd.f32 %v1036, %v1039
      %vm1041 = vweird.f32 %v1036
      %v1042 = vsel %vm1041, %v1036, %v1040
      %v1043 = vmul.f32 %v1035, %v1042
      %v1044 = vperm.slane %v1017, 1
      %v1045 = vperm.slane %v1017, 3
      %v1048 = vsel %vm563, %v1044, 0.0
      %v1049 = vsel %vm563, %v1045, 0.0
      %v1050 = vadd.f32 %v1048, %v1049
      %1051 = vadd.xlane.f32.xlu0 %v1050
      %v1052 = vpop.xlane.xlu0 %1051
      %v1053 = vrot.slane %v1052, 4
      %v1054 = vadd.f32 %v1052, %v1053
      %v1055 = vrot.slane %v1054, 2
      %v1056 = vadd.f32 %v1054, %v1055
      %v1057 = vrot.slane %v1056, 1
      %v1058 = vadd.f32 %v1056, %v1057
      %s1059 = vtos %v1058
      %v1060 = vstv %s1059
      %v1061 = vmul.f32 %v1060, %v1042
      %v1062 = vmul.f32 %v1043, %v1043
      %v1063 = vsub.f32 %v1061, %v1062
      %v1064 = vmax.f32 %v1063, 0.0
      %v1065 = vadd.f32 %v1064, 1e-05
      %v1066 = vrsqrt.pop %v1065
      %v1067 = vmul.f32 %v1066, %v1065
      %v1068 = vmul.f32 %v1067, %v1066
      %v1069 = vmul.f32 0.5, %v1068
      %v1070 = vsub.f32 1.5, %v1069
      %v1071 = vmul.f32 %v1066, %v1070
      %vm1072 = vweird.f32 %v1065
      %vm1073 = vweird.f32 %v1066
      %vm1074 = vmor %vm1072, %vm1073
      %v1075 = vsel %vm1074, %v1066, %v1071
      %v1076 = vsub.f32 %v929, %v1043
      %v1077 = vsub.f32 %v978, %v1043
      %v1078 = vsub.f32 %v931, %v1043
      %v1079 = vsub.f32 %v980, %v1043
      %v1080 = vsub.f32 %v934, %v1043
      %v1081 = vsub.f32 %v983, %v1043
      %v1082 = vsub.f32 %v936, %v1043
      %v1083 = vsub.f32 %v985, %v1043
      %v1084 = vsub.f32 %v939, %v1043
      %v1085 = vsub.f32 %v988, %v1043
      %v1086 = vsub.f32 %v941, %v1043
      %v1087 = vsub.f32 %v990, %v1043
      %v1088 = vsub.f32 %v944, %v1043
      %v1089 = vsub.f32 %v993, %v1043
      %v1090 = vsub.f32 %v946, %v1043
      %v1091 = vsub.f32 %v995, %v1043
      %v1092 = vsub.f32 %v949, %v1043
      %v1093 = vsub.f32 %v998, %v1043
      %v1094 = vsub.f32 %v951, %v1043
      %v1095 = vsub.f32 %v1000, %v1043
      %v1096 = vsub.f32 %v954, %v1043
      %v1097 = vsub.f32 %v1003, %v1043
      %v1098 = vsub.f32 %v956, %v1043
      %v1099 = vsub.f32 %v1005, %v1043
      %v1100 = vsub.f32 %v959, %v1043
      %v1101 = vsub.f32 %v1008, %v1043
      %v1102 = vsub.f32 %v961, %v1043
      %v1103 = vsub.f32 %v1010, %v1043
      %v1104 = vsub.f32 %v964, %v1043
      %v1105 = vsub.f32 %v1013, %v1043
      %v1106 = vsub.f32 %v966, %v1043
      %v1107 = vsub.f32 %v1015, %v1043
      %v1108 = vmul.f32 %v1076, %v1075
      %v1109 = vmul.f32 %v1077, %v1075
      %v1110 = vmul.f32 %v1078, %v1075
      %v1111 = vmul.f32 %v1079, %v1075
      %v1112 = vmul.f32 %v1080, %v1075
      %v1113 = vmul.f32 %v1081, %v1075
      %v1114 = vmul.f32 %v1082, %v1075
      %v1115 = vmul.f32 %v1083, %v1075
      %v1116 = vmul.f32 %v1084, %v1075
      %v1117 = vmul.f32 %v1085, %v1075
      %v1118 = vmul.f32 %v1086, %v1075
      %v1119 = vmul.f32 %v1087, %v1075
      %v1120 = vmul.f32 %v1088, %v1075
      %v1121 = vmul.f32 %v1089, %v1075
      %v1122 = vmul.f32 %v1090, %v1075
      %v1123 = vmul.f32 %v1091, %v1075
      %v1124 = vmul.f32 %v1092, %v1075
      %v1125 = vmul.f32 %v1093, %v1075
      %v1126 = vmul.f32 %v1094, %v1075
      %v1127 = vmul.f32 %v1095, %v1075
      %v1128 = vmul.f32 %v1096, %v1075
      %v1129 = vmul.f32 %v1097, %v1075
      %v1130 = vmul.f32 %v1098, %v1075
      %v1131 = vmul.f32 %v1099, %v1075
      %v1132 = vmul.f32 %v1100, %v1075
      %v1133 = vmul.f32 %v1101, %v1075
      %v1134 = vmul.f32 %v1102, %v1075
      %v1135 = vmul.f32 %v1103, %v1075
      %v1136 = vmul.f32 %v1104, %v1075
      %v1137 = vmul.f32 %v1105, %v1075
      %v1138 = vmul.f32 %v1106, %v1075
      %v1139 = vmul.f32 %v1107, %v1075
      %v1140 = vld [vmem:[%s7] sm:$0x3]
      %v1142 = vperm.slane %v1140, 0
      %v1143 = vperm.slane %v1140, 1
      %v1146 = vmul.f32 %v1108, %v1142
      %v1147 = vmul.f32 %v1109, %v1143
      %v1148 = vmul.f32 %v1110, %v1142
      %v1149 = vmul.f32 %v1111, %v1143
      %v1150 = vmul.f32 %v1112, %v1142
      %v1151 = vmul.f32 %v1113, %v1143
      %v1152 = vmul.f32 %v1114, %v1142
      %v1153 = vmul.f32 %v1115, %v1143
      %v1154 = vmul.f32 %v1116, %v1142
      %v1155 = vmul.f32 %v1117, %v1143
      %v1156 = vmul.f32 %v1118, %v1142
      %v1157 = vmul.f32 %v1119, %v1143
      %v1158 = vmul.f32 %v1120, %v1142
      %v1159 = vmul.f32 %v1121, %v1143
      %v1160 = vmul.f32 %v1122, %v1142
      %v1161 = vmul.f32 %v1123, %v1143
      %v1162 = vmul.f32 %v1124, %v1142
      %v1163 = vmul.f32 %v1125, %v1143
      %v1164 = vmul.f32 %v1126, %v1142
      %v1165 = vmul.f32 %v1127, %v1143
      %v1166 = vmul.f32 %v1128, %v1142
      %v1167 = vmul.f32 %v1129, %v1143
      %v1168 = vmul.f32 %v1130, %v1142
      %v1169 = vmul.f32 %v1131, %v1143
      %v1170 = vmul.f32 %v1132, %v1142
      %v1171 = vmul.f32 %v1133, %v1143
      %v1172 = vmul.f32 %v1134, %v1142
      %v1173 = vmul.f32 %v1135, %v1143
      %v1174 = vmul.f32 %v1136, %v1142
      %v1175 = vmul.f32 %v1137, %v1143
      %v1176 = vmul.f32 %v1138, %v1142
      %v1177 = vmul.f32 %v1139, %v1143
      %v1178 = vld [vmem:[%s8] sm:$0x3]
      %v1180 = vperm.slane %v1178, 0
      %v1181 = vperm.slane %v1178, 1
      %v1184 = vadd.f32 %v1146, %v1180
      %v1185 = vadd.f32 %v1147, %v1181
      %v1186 = vadd.f32 %v1148, %v1180
      %v1187 = vadd.f32 %v1149, %v1181
      %v1188 = vadd.f32 %v1150, %v1180
      %v1189 = vadd.f32 %v1151, %v1181
      %v1190 = vadd.f32 %v1152, %v1180
      %v1191 = vadd.f32 %v1153, %v1181
      %v1192 = vadd.f32 %v1154, %v1180
      %v1193 = vadd.f32 %v1155, %v1181
      %v1194 = vadd.f32 %v1156, %v1180
      %v1195 = vadd.f32 %v1157, %v1181
      %v1196 = vadd.f32 %v1158, %v1180
      %v1197 = vadd.f32 %v1159, %v1181
      %v1198 = vadd.f32 %v1160, %v1180
      %v1199 = vadd.f32 %v1161, %v1181
      %v1200 = vadd.f32 %v1162, %v1180
      %v1201 = vadd.f32 %v1163, %v1181
      %v1202 = vadd.f32 %v1164, %v1180
      %v1203 = vadd.f32 %v1165, %v1181
      %v1204 = vadd.f32 %v1166, %v1180
      %v1205 = vadd.f32 %v1167, %v1181
      %v1206 = vadd.f32 %v1168, %v1180
      %v1207 = vadd.f32 %v1169, %v1181
      %v1208 = vadd.f32 %v1170, %v1180
      %v1209 = vadd.f32 %v1171, %v1181
      %v1210 = vadd.f32 %v1172, %v1180
      %v1211 = vadd.f32 %v1173, %v1181
      %v1212 = vadd.f32 %v1174, %v1180
      %v1213 = vadd.f32 %v1175, %v1181
      %v1214 = vadd.f32 %v1176, %v1180
      %v1215 = vadd.f32 %v1177, %v1181
      %v1216 = vxor.u32 %v1185, 2147483648
      %v1217 = vxor.u32 %v1187, 2147483648
      %v1218 = vxor.u32 %v1189, 2147483648
      %v1219 = vxor.u32 %v1191, 2147483648
      %v1220 = vxor.u32 %v1193, 2147483648
      %v1221 = vxor.u32 %v1195, 2147483648
      %v1222 = vxor.u32 %v1197, 2147483648
      %v1223 = vxor.u32 %v1199, 2147483648
      %v1224 = vxor.u32 %v1201, 2147483648
      %v1225 = vxor.u32 %v1203, 2147483648
      %v1226 = vxor.u32 %v1205, 2147483648
      %v1227 = vxor.u32 %v1207, 2147483648
      %v1228 = vxor.u32 %v1209, 2147483648
      %v1229 = vxor.u32 %v1211, 2147483648
      %v1230 = vxor.u32 %v1213, 2147483648
      %v1231 = vxor.u32 %v1215, 2147483648
      %v1232 = vmul.f32 %v1216, 1.442695
      %v1233 = vpow.pop %v1232
      %v1234 = vmul.f32 %v1217, 1.442695
      %v1235 = vpow.pop %v1234
      %v1236 = vmul.f32 %v1218, 1.442695
      %v1237 = vpow.pop %v1236
      %v1238 = vmul.f32 %v1219, 1.442695
      %v1239 = vpow.pop %v1238
      %v1240 = vmul.f32 %v1220, 1.442695
      %v1241 = vpow.pop %v1240
      %v1242 = vmul.f32 %v1221, 1.442695
      %v1243 = vpow.pop %v1242
      %v1244 = vmul.f32 %v1222, 1.442695
      %v1245 = vpow.pop %v1244
      %v1246 = vmul.f32 %v1223, 1.442695
      %v1247 = vpow.pop %v1246
      %v1248 = vmul.f32 %v1224, 1.442695
      %v1249 = vpow.pop %v1248
      %v1250 = vmul.f32 %v1225, 1.442695
      %v1251 = vpow.pop %v1250
      %v1252 = vmul.f32 %v1226, 1.442695
      %v1253 = vpow.pop %v1252
      %v1254 = vmul.f32 %v1227, 1.442695
      %v1255 = vpow.pop %v1254
      %v1256 = vmul.f32 %v1228, 1.442695
      %v1257 = vpow.pop %v1256
      %v1258 = vmul.f32 %v1229, 1.442695
      %v1259 = vpow.pop %v1258
      %v1260 = vmul.f32 %v1230, 1.442695
      %v1261 = vpow.pop %v1260
      %v1262 = vmul.f32 %v1231, 1.442695
      %v1263 = vpow.pop %v1262
      %v1264 = vadd.f32 %v1233, 1.0
      %v1265 = vadd.f32 %v1235, 1.0
      %v1266 = vadd.f32 %v1237, 1.0
      %v1267 = vadd.f32 %v1239, 1.0
      %v1268 = vadd.f32 %v1241, 1.0
      %v1269 = vadd.f32 %v1243, 1.0
      %v1270 = vadd.f32 %v1245, 1.0
      %v1271 = vadd.f32 %v1247, 1.0
      %v1272 = vadd.f32 %v1249, 1.0
      %v1273 = vadd.f32 %v1251, 1.0
      %v1274 = vadd.f32 %v1253, 1.0
      %v1275 = vadd.f32 %v1255, 1.0
      %v1276 = vadd.f32 %v1257, 1.0
      %v1277 = vadd.f32 %v1259, 1.0
      %v1278 = vadd.f32 %v1261, 1.0
      %v1279 = vadd.f32 %v1263, 1.0
      %v1280 = vrcp.pop %v1264
      %v1281 = vmul.f32 %v1264, %v1280
      %v1282 = vsub.f32 1.0, %v1281
      %v1283 = vmul.f32 %v1280, %v1282
      %v1284 = vadd.f32 %v1280, %v1283
      %vm1285 = vweird.f32 %v1264
      %vm1286 = vweird.f32 %v1280
      %vm1287 = vmor %vm1285, %vm1286
      %v1288 = vsel %vm1287, %v1280, %v1284
      %v1289 = vand.u32 2147483647, %v1264
      %vm1290 = vcmp.eq.f32.partialorder %v1289, 8.507059e+37
      %v1291 = vand.u32 %v1264, 2147483648
      %v1292 = vor.u32 1.1754944e-38, %v1291
      %v1293 = vsel %vm1290, %v1292, %v1288
      %v1294 = vmul.f32 1.0, %v1293
      %v1295 = vrcp.pop %v1265
      %v1296 = vmul.f32 %v1265, %v1295
      %v1297 = vsub.f32 1.0, %v1296
      %v1298 = vmul.f32 %v1295, %v1297
      %v1299 = vadd.f32 %v1295, %v1298
      %vm1300 = vweird.f32 %v1265
      %vm1301 = vweird.f32 %v1295
      %vm1302 = vmor %vm1300, %vm1301
      %v1303 = vsel %vm1302, %v1295, %v1299
      %v1304 = vand.u32 2147483647, %v1265
      %vm1305 = vcmp.eq.f32.partialorder %v1304, 8.507059e+37
      %v1306 = vand.u32 %v1265, 2147483648
      %v1307 = vor.u32 1.1754944e-38, %v1306
      %v1308 = vsel %vm1305, %v1307, %v1303
      %v1309 = vmul.f32 1.0, %v1308
      %v1310 = vrcp.pop %v1266
      %v1311 = vmul.f32 %v1266, %v1310
      %v1312 = vsub.f32 1.0, %v1311
      %v1313 = vmul.f32 %v1310, %v1312
      %v1314 = vadd.f32 %v1310, %v1313
      %vm1315 = vweird.f32 %v1266
      %vm1316 = vweird.f32 %v1310
      %vm1317 = vmor %vm1315, %vm1316
      %v1318 = vsel %vm1317, %v1310, %v1314
      %v1319 = vand.u32 2147483647, %v1266
      %vm1320 = vcmp.eq.f32.partialorder %v1319, 8.507059e+37
      %v1321 = vand.u32 %v1266, 2147483648
      %v1322 = vor.u32 1.1754944e-38, %v1321
      %v1323 = vsel %vm1320, %v1322, %v1318
      %v1324 = vmul.f32 1.0, %v1323
      %v1325 = vrcp.pop %v1267
      %v1326 = vmul.f32 %v1267, %v1325
      %v1327 = vsub.f32 1.0, %v1326
      %v1328 = vmul.f32 %v1325, %v1327
      %v1329 = vadd.f32 %v1325, %v1328
      %vm1330 = vweird.f32 %v1267
      %vm1331 = vweird.f32 %v1325
      %vm1332 = vmor %vm1330, %vm1331
      %v1333 = vsel %vm1332, %v1325, %v1329
      %v1334 = vand.u32 2147483647, %v1267
      %vm1335 = vcmp.eq.f32.partialorder %v1334, 8.507059e+37
      %v1336 = vand.u32 %v1267, 2147483648
      %v1337 = vor.u32 1.1754944e-38, %v1336
      %v1338 = vsel %vm1335, %v1337, %v1333
      %v1339 = vmul.f32 1.0, %v1338
      %v1340 = vrcp.pop %v1268
      %v1341 = vmul.f32 %v1268, %v1340
      %v1342 = vsub.f32 1.0, %v1341
      %v1343 = vmul.f32 %v1340, %v1342
      %v1344 = vadd.f32 %v1340, %v1343
      %vm1345 = vweird.f32 %v1268
      %vm1346 = vweird.f32 %v1340
      %vm1347 = vmor %vm1345, %vm1346
      %v1348 = vsel %vm1347, %v1340, %v1344
      %v1349 = vand.u32 2147483647, %v1268
      %vm1350 = vcmp.eq.f32.partialorder %v1349, 8.507059e+37
      %v1351 = vand.u32 %v1268, 2147483648
      %v1352 = vor.u32 1.1754944e-38, %v1351
      %v1353 = vsel %vm1350, %v1352, %v1348
      %v1354 = vmul.f32 1.0, %v1353
      %v1355 = vrcp.pop %v1269
      %v1356 = vmul.f32 %v1269, %v1355
      %v1357 = vsub.f32 1.0, %v1356
      %v1358 = vmul.f32 %v1355, %v1357
      %v1359 = vadd.f32 %v1355, %v1358
      %vm1360 = vweird.f32 %v1269
      %vm1361 = vweird.f32 %v1355
      %vm1362 = vmor %vm1360, %vm1361
      %v1363 = vsel %vm1362, %v1355, %v1359
      %v1364 = vand.u32 2147483647, %v1269
      %vm1365 = vcmp.eq.f32.partialorder %v1364, 8.507059e+37
      %v1366 = vand.u32 %v1269, 2147483648
      %v1367 = vor.u32 1.1754944e-38, %v1366
      %v1368 = vsel %vm1365, %v1367, %v1363
      %v1369 = vmul.f32 1.0, %v1368
      %v1370 = vrcp.pop %v1270
      %v1371 = vmul.f32 %v1270, %v1370
      %v1372 = vsub.f32 1.0, %v1371
      %v1373 = vmul.f32 %v1370, %v1372
      %v1374 = vadd.f32 %v1370, %v1373
      %vm1375 = vweird.f32 %v1270
      %vm1376 = vweird.f32 %v1370
      %vm1377 = vmor %vm1375, %vm1376
      %v1378 = vsel %vm1377, %v1370, %v1374
      %v1379 = vand.u32 2147483647, %v1270
      %vm1380 = vcmp.eq.f32.partialorder %v1379, 8.507059e+37
      %v1381 = vand.u32 %v1270, 2147483648
      %v1382 = vor.u32 1.1754944e-38, %v1381
      %v1383 = vsel %vm1380, %v1382, %v1378
      %v1384 = vmul.f32 1.0, %v1383
      %v1385 = vrcp.pop %v1271
      %v1386 = vmul.f32 %v1271, %v1385
      %v1387 = vsub.f32 1.0, %v1386
      %v1388 = vmul.f32 %v1385, %v1387
      %v1389 = vadd.f32 %v1385, %v1388
      %vm1390 = vweird.f32 %v1271
      %vm1391 = vweird.f32 %v1385
      %vm1392 = vmor %vm1390, %vm1391
      %v1393 = vsel %vm1392, %v1385, %v1389
      %v1394 = vand.u32 2147483647, %v1271
      %vm1395 = vcmp.eq.f32.partialorder %v1394, 8.507059e+37
      %v1396 = vand.u32 %v1271, 2147483648
      %v1397 = vor.u32 1.1754944e-38, %v1396
      %v1398 = vsel %vm1395, %v1397, %v1393
      %v1399 = vmul.f32 1.0, %v1398
      %v1400 = vrcp.pop %v1272
      %v1401 = vmul.f32 %v1272, %v1400
      %v1402 = vsub.f32 1.0, %v1401
      %v1403 = vmul.f32 %v1400, %v1402
      %v1404 = vadd.f32 %v1400, %v1403
      %vm1405 = vweird.f32 %v1272
      %vm1406 = vweird.f32 %v1400
      %vm1407 = vmor %vm1405, %vm1406
      %v1408 = vsel %vm1407, %v1400, %v1404
      %v1409 = vand.u32 2147483647, %v1272
      %vm1410 = vcmp.eq.f32.partialorder %v1409, 8.507059e+37
      %v1411 = vand.u32 %v1272, 2147483648
      %v1412 = vor.u32 1.1754944e-38, %v1411
      %v1413 = vsel %vm1410, %v1412, %v1408
      %v1414 = vmul.f32 1.0, %v1413
      %v1415 = vrcp.pop %v1273
      %v1416 = vmul.f32 %v1273, %v1415
      %v1417 = vsub.f32 1.0, %v1416
      %v1418 = vmul.f32 %v1415, %v1417
      %v1419 = vadd.f32 %v1415, %v1418
      %vm1420 = vweird.f32 %v1273
      %vm1421 = vweird.f32 %v1415
      %vm1422 = vmor %vm1420, %vm1421
      %v1423 = vsel %vm1422, %v1415, %v1419
      %v1424 = vand.u32 2147483647, %v1273
      %vm1425 = vcmp.eq.f32.partialorder %v1424, 8.507059e+37
      %v1426 = vand.u32 %v1273, 2147483648
      %v1427 = vor.u32 1.1754944e-38, %v1426
      %v1428 = vsel %vm1425, %v1427, %v1423
      %v1429 = vmul.f32 1.0, %v1428
      %v1430 = vrcp.pop %v1274
      %v1431 = vmul.f32 %v1274, %v1430
      %v1432 = vsub.f32 1.0, %v1431
      %v1433 = vmul.f32 %v1430, %v1432
      %v1434 = vadd.f32 %v1430, %v1433
      %vm1435 = vweird.f32 %v1274
      %vm1436 = vweird.f32 %v1430
      %vm1437 = vmor %vm1435, %vm1436
      %v1438 = vsel %vm1437, %v1430, %v1434
      %v1439 = vand.u32 2147483647, %v1274
      %vm1440 = vcmp.eq.f32.partialorder %v1439, 8.507059e+37
      %v1441 = vand.u32 %v1274, 2147483648
      %v1442 = vor.u32 1.1754944e-38, %v1441
      %v1443 = vsel %vm1440, %v1442, %v1438
      %v1444 = vmul.f32 1.0, %v1443
      %v1445 = vrcp.pop %v1275
      %v1446 = vmul.f32 %v1275, %v1445
      %v1447 = vsub.f32 1.0, %v1446
      %v1448 = vmul.f32 %v1445, %v1447
      %v1449 = vadd.f32 %v1445, %v1448
      %vm1450 = vweird.f32 %v1275
      %vm1451 = vweird.f32 %v1445
      %vm1452 = vmor %vm1450, %vm1451
      %v1453 = vsel %vm1452, %v1445, %v1449
      %v1454 = vand.u32 2147483647, %v1275
      %vm1455 = vcmp.eq.f32.partialorder %v1454, 8.507059e+37
      %v1456 = vand.u32 %v1275, 2147483648
      %v1457 = vor.u32 1.1754944e-38, %v1456
      %v1458 = vsel %vm1455, %v1457, %v1453
      %v1459 = vmul.f32 1.0, %v1458
      %v1460 = vrcp.pop %v1276
      %v1461 = vmul.f32 %v1276, %v1460
      %v1462 = vsub.f32 1.0, %v1461
      %v1463 = vmul.f32 %v1460, %v1462
      %v1464 = vadd.f32 %v1460, %v1463
      %vm1465 = vweird.f32 %v1276
      %vm1466 = vweird.f32 %v1460
      %vm1467 = vmor %vm1465, %vm1466
      %v1468 = vsel %vm1467, %v1460, %v1464
      %v1469 = vand.u32 2147483647, %v1276
      %vm1470 = vcmp.eq.f32.partialorder %v1469, 8.507059e+37
      %v1471 = vand.u32 %v1276, 2147483648
      %v1472 = vor.u32 1.1754944e-38, %v1471
      %v1473 = vsel %vm1470, %v1472, %v1468
      %v1474 = vmul.f32 1.0, %v1473
      %v1475 = vrcp.pop %v1277
      %v1476 = vmul.f32 %v1277, %v1475
      %v1477 = vsub.f32 1.0, %v1476
      %v1478 = vmul.f32 %v1475, %v1477
      %v1479 = vadd.f32 %v1475, %v1478
      %vm1480 = vweird.f32 %v1277
      %vm1481 = vweird.f32 %v1475
      %vm1482 = vmor %vm1480, %vm1481
      %v1483 = vsel %vm1482, %v1475, %v1479
      %v1484 = vand.u32 2147483647, %v1277
      %vm1485 = vcmp.eq.f32.partialorder %v1484, 8.507059e+37
      %v1486 = vand.u32 %v1277, 2147483648
      %v1487 = vor.u32 1.1754944e-38, %v1486
      %v1488 = vsel %vm1485, %v1487, %v1483
      %v1489 = vmul.f32 1.0, %v1488
      %v1490 = vrcp.pop %v1278
      %v1491 = vmul.f32 %v1278, %v1490
      %v1492 = vsub.f32 1.0, %v1491
      %v1493 = vmul.f32 %v1490, %v1492
      %v1494 = vadd.f32 %v1490, %v1493
      %vm1495 = vweird.f32 %v1278
      %vm1496 = vweird.f32 %v1490
      %vm1497 = vmor %vm1495, %vm1496
      %v1498 = vsel %vm1497, %v1490, %v1494
      %v1499 = vand.u32 2147483647, %v1278
      %vm1500 = vcmp.eq.f32.partialorder %v1499, 8.507059e+37
      %v1501 = vand.u32 %v1278, 2147483648
      %v1502 = vor.u32 1.1754944e-38, %v1501
      %v1503 = vsel %vm1500, %v1502, %v1498
      %v1504 = vmul.f32 1.0, %v1503
      %v1505 = vrcp.pop %v1279
      %v1506 = vmul.f32 %v1279, %v1505
      %v1507 = vsub.f32 1.0, %v1506
      %v1508 = vmul.f32 %v1505, %v1507
      %v1509 = vadd.f32 %v1505, %v1508
      %vm1510 = vweird.f32 %v1279
      %vm1511 = vweird.f32 %v1505
      %vm1512 = vmor %vm1510, %vm1511
      %v1513 = vsel %vm1512, %v1505, %v1509
      %v1514 = vand.u32 2147483647, %v1279
      %vm1515 = vcmp.eq.f32.partialorder %v1514, 8.507059e+37
      %v1516 = vand.u32 %v1279, 2147483648
      %v1517 = vor.u32 1.1754944e-38, %v1516
      %v1518 = vsel %vm1515, %v1517, %v1513
      %v1519 = vmul.f32 1.0, %v1518
      %v1520 = vmul.f32 %v1184, %v1294
      %v1521 = vmul.f32 %v1186, %v1309
      %v1522 = vmul.f32 %v1188, %v1324
      %v1523 = vmul.f32 %v1190, %v1339
      %v1524 = vmul.f32 %v1192, %v1354
      %v1525 = vmul.f32 %v1194, %v1369
      %v1526 = vmul.f32 %v1196, %v1384
      %v1527 = vmul.f32 %v1198, %v1399
      %v1528 = vmul.f32 %v1200, %v1414
      %v1529 = vmul.f32 %v1202, %v1429
      %v1530 = vmul.f32 %v1204, %v1444
      %v1531 = vmul.f32 %v1206, %v1459
      %v1532 = vmul.f32 %v1208, %v1474
      %v1533 = vmul.f32 %v1210, %v1489
      %v1534 = vmul.f32 %v1212, %v1504
      %v1535 = vmul.f32 %v1214, %v1519
      %v1536 = vld [vmem:[%s496] sm:$0xff]
      %v1537 = vld [vmem:[%s496 + $0x8] sm:$0xff]
      %v1538 = vld [vmem:[%s496 + $0x10] sm:$0xff]
      %v1539 = vld [vmem:[%s496 + $0x18] sm:$0xff]
      %v1540 = vld [vmem:[%s496 + $0x20] sm:$0xff]
      %v1541 = vld [vmem:[%s496 + $0x28] sm:$0xff]
      %v1542 = vld [vmem:[%s496 + $0x30] sm:$0xff]
      %v1543 = vld [vmem:[%s496 + $0x38] sm:$0xff]
      %v1544 = vld [vmem:[%s496 + $0x40] sm:$0xff]
      %v1545 = vld [vmem:[%s496 + $0x48] sm:$0xff]
      %v1546 = vld [vmem:[%s496 + $0x50] sm:$0xff]
      %v1547 = vld [vmem:[%s496 + $0x58] sm:$0xff]
      %v1548 = vld [vmem:[%s496 + $0x60] sm:$0xff]
      %v1549 = vld [vmem:[%s496 + $0x68] sm:$0xff]
      %v1550 = vld [vmem:[%s496 + $0x70] sm:$0xff]
      %v1551 = vld [vmem:[%s496 + $0x78] sm:$0xff]
      %v1552 = vld [vmem:[%s9] sm:$0x1]
      %v1554 = vperm.slane %v1552, 0
      %v1556 = vmul.f32 %v1520, %v1554
      %v1557 = vmul.f32 %v1521, %v1554
      %v1558 = vmul.f32 %v1522, %v1554
      %v1559 = vmul.f32 %v1523, %v1554
      %v1560 = vmul.f32 %v1524, %v1554
      %v1561 = vmul.f32 %v1525, %v1554
      %v1562 = vmul.f32 %v1526, %v1554
      %v1563 = vmul.f32 %v1527, %v1554
      %v1564 = vmul.f32 %v1528, %v1554
      %v1565 = vmul.f32 %v1529, %v1554
      %v1566 = vmul.f32 %v1530, %v1554
      %v1567 = vmul.f32 %v1531, %v1554
      %v1568 = vmul.f32 %v1532, %v1554
      %v1569 = vmul.f32 %v1533, %v1554
      %v1570 = vmul.f32 %v1534, %v1554
      %v1571 = vmul.f32 %v1535, %v1554
      %v1572 = vadd.f32 %v1536, %v1556
      %v1573 = vadd.f32 %v1537, %v1557
      %v1574 = vadd.f32 %v1538, %v1558
      %v1575 = vadd.f32 %v1539, %v1559
      %v1576 = vadd.f32 %v1540, %v1560
      %v1577 = vadd.f32 %v1541, %v1561
      %v1578 = vadd.f32 %v1542, %v1562
      %v1579 = vadd.f32 %v1543, %v1563
      %v1580 = vadd.f32 %v1544, %v1564
      %v1581 = vadd.f32 %v1545, %v1565
      %v1582 = vadd.f32 %v1546, %v1566
      %v1583 = vadd.f32 %v1547, %v1567
      %v1584 = vadd.f32 %v1548, %v1568
      %v1585 = vadd.f32 %v1549, %v1569
      %v1586 = vadd.f32 %v1550, %v1570
      %v1587 = vadd.f32 %v1551, %v1571
      %s1588 = smul.u32 %s27, 128
      %v1589 = vlaneseq
      %v1590 = vshrl.u32 %v1589, 7
      %v1591 = vadd.s32 %v1590, 8
      %v1592 = vadd.s32 %v1590, 16
      %v1593 = vadd.s32 %v1590, 24
      %v1594 = vadd.s32 %v1590, 32
      %v1595 = vadd.s32 %v1590, 40
      %v1596 = vadd.s32 %v1590, 48
      %v1597 = vadd.s32 %v1590, 56
      %v1598 = vadd.s32 %v1590, 64
      %v1599 = vadd.s32 %v1590, 72
      %v1600 = vadd.s32 %v1590, 80
      %v1601 = vadd.s32 %v1590, 88
      %v1602 = vadd.s32 %v1590, 96
      %v1603 = vadd.s32 %v1590, 104
      %v1604 = vadd.s32 %v1590, 112
      %v1605 = vadd.s32 %v1590, 120
      %v1606 = vstv %s1588
      %v1607 = vadd.s32 %v1606, %v1590
      %v1608 = vadd.s32 %v1606, %v1591
      %v1609 = vadd.s32 %v1606, %v1592
      %v1610 = vadd.s32 %v1606, %v1593
      %v1611 = vadd.s32 %v1606, %v1594
      %v1612 = vadd.s32 %v1606, %v1595
      %v1613 = vadd.s32 %v1606, %v1596
      %v1614 = vadd.s32 %v1606, %v1597
      %v1615 = vadd.s32 %v1606, %v1598
      %v1616 = vadd.s32 %v1606, %v1599
      %v1617 = vadd.s32 %v1606, %v1600
      %v1618 = vadd.s32 %v1606, %v1601
      %v1619 = vadd.s32 %v1606, %v1602
      %v1620 = vadd.s32 %v1606, %v1603
      %v1621 = vadd.s32 %v1606, %v1604
      %v1622 = vadd.s32 %v1606, %v1605
      %vm1623 = vcmp.lt.s32.totalorder %v1607, 250
      %vm1624 = vcmp.lt.s32.totalorder %v1608, 250
      %vm1625 = vcmp.lt.s32.totalorder %v1609, 250
      %vm1626 = vcmp.lt.s32.totalorder %v1610, 250
      %vm1627 = vcmp.lt.s32.totalorder %v1611, 250
      %vm1628 = vcmp.lt.s32.totalorder %v1612, 250
      %vm1629 = vcmp.lt.s32.totalorder %v1613, 250
      %vm1630 = vcmp.lt.s32.totalorder %v1614, 250
      %vm1631 = vcmp.lt.s32.totalorder %v1615, 250
      %vm1632 = vcmp.lt.s32.totalorder %v1616, 250
      %vm1633 = vcmp.lt.s32.totalorder %v1617, 250
      %vm1634 = vcmp.lt.s32.totalorder %v1618, 250
      %vm1635 = vcmp.lt.s32.totalorder %v1619, 250
      %vm1636 = vcmp.lt.s32.totalorder %v1620, 250
      %vm1637 = vcmp.lt.s32.totalorder %v1621, 250
      %vm1638 = vcmp.lt.s32.totalorder %v1622, 250
      %v1639 = vsel %vm1623, 1, 0
      %v1640 = vsel %vm1624, 1, 0
      %v1641 = vsel %vm1625, 1, 0
      %v1642 = vsel %vm1626, 1, 0
      %v1643 = vsel %vm1627, 1, 0
      %v1644 = vsel %vm1628, 1, 0
      %v1645 = vsel %vm1629, 1, 0
      %v1646 = vsel %vm1630, 1, 0
      %v1647 = vsel %vm1631, 1, 0
      %v1648 = vsel %vm1632, 1, 0
      %v1649 = vsel %vm1633, 1, 0
      %v1650 = vsel %vm1634, 1, 0
      %v1651 = vsel %vm1635, 1, 0
      %v1652 = vsel %vm1636, 1, 0
      %v1653 = vsel %vm1637, 1, 0
      %v1654 = vsel %vm1638, 1, 0
      %vm1655 = vcmp.eq.s32.totalorder %v1639, 1
      %vm1656 = vcmp.eq.s32.totalorder %v1640, 1
      %vm1657 = vcmp.eq.s32.totalorder %v1641, 1
      %vm1658 = vcmp.eq.s32.totalorder %v1642, 1
      %vm1659 = vcmp.eq.s32.totalorder %v1643, 1
      %vm1660 = vcmp.eq.s32.totalorder %v1644, 1
      %vm1661 = vcmp.eq.s32.totalorder %v1645, 1
      %vm1662 = vcmp.eq.s32.totalorder %v1646, 1
      %vm1663 = vcmp.eq.s32.totalorder %v1647, 1
      %vm1664 = vcmp.eq.s32.totalorder %v1648, 1
      %vm1665 = vcmp.eq.s32.totalorder %v1649, 1
      %vm1666 = vcmp.eq.s32.totalorder %v1650, 1
      %vm1667 = vcmp.eq.s32.totalorder %v1651, 1
      %vm1668 = vcmp.eq.s32.totalorder %v1652, 1
      %vm1669 = vcmp.eq.s32.totalorder %v1653, 1
      %vm1670 = vcmp.eq.s32.totalorder %v1654, 1
      %v1671 = vsel %vm1655, %v1572, 0.0
      %v1672 = vsel %vm1656, %v1573, 0.0
      %v1673 = vsel %vm1657, %v1574, 0.0
      %v1674 = vsel %vm1658, %v1575, 0.0
      %v1675 = vsel %vm1659, %v1576, 0.0
      %v1676 = vsel %vm1660, %v1577, 0.0
      %v1677 = vsel %vm1661, %v1578, 0.0
      %v1678 = vsel %vm1662, %v1579, 0.0
      %v1679 = vsel %vm1663, %v1580, 0.0
      %v1680 = vsel %vm1664, %v1581, 0.0
      %v1681 = vsel %vm1665, %v1582, 0.0
      %v1682 = vsel %vm1666, %v1583, 0.0
      %v1683 = vsel %vm1667, %v1584, 0.0
      %v1684 = vsel %vm1668, %v1585, 0.0
      %v1685 = vsel %vm1669, %v1586, 0.0
      %v1686 = vsel %vm1670, %v1587, 0.0
      %1687 = vst [vmem:[%s508] sm:$0xff] %v1671
      %1688 = vst [vmem:[%s508 + $0x8] sm:$0xff] %v1672
      %1689 = vst [vmem:[%s508 + $0x10] sm:$0xff] %v1673
      %1690 = vst [vmem:[%s508 + $0x18] sm:$0xff] %v1674
      %1691 = vst [vmem:[%s508 + $0x20] sm:$0xff] %v1675
      %1692 = vst [vmem:[%s508 + $0x28] sm:$0xff] %v1676
      %1693 = vst [vmem:[%s508 + $0x30] sm:$0xff] %v1677
      %1694 = vst [vmem:[%s508 + $0x38] sm:$0xff] %v1678
      %1695 = vst [vmem:[%s508 + $0x40] sm:$0xff] %v1679
      %1696 = vst [vmem:[%s508 + $0x48] sm:$0xff] %v1680
      %1697 = vst [vmem:[%s508 + $0x50] sm:$0xff] %v1681
      %1698 = vst [vmem:[%s508 + $0x58] sm:$0xff] %v1682
      %1699 = vst [vmem:[%s508 + $0x60] sm:$0xff] %v1683
      %1700 = vst [vmem:[%s508 + $0x68] sm:$0xff] %v1684
      %1701 = vst [vmem:[%s508 + $0x70] sm:$0xff] %v1685
      %1702 = vst [vmem:[%s508 + $0x78] sm:$0xff] %v1686
      %s1703 = sadd.s32 %s27, 1
      %s1704 = smul.u32 16, %s1703
      %p1705 = scmp.lt.s32.totalorder %s26, 1
      %s1706 = scalar_select %p1705, %s26, 1
      %p1707 = scmp.lt.s32.totalorder %s1704, 63
      %s1708 = scalar_select %p1707, %s1704, 63
      %s1709 = smul.addr %s1706, 64
      %s1710 = sadd.s32 %s1708, %s1709
      %s1711 = smul.addr %s1710, 8
      %s1712 = scalar_lea.vmem %s11, %s1711
      // Predicated region
      $region65: #{_lambda_.8} parent=63 // pred_check
        %p1713 = pneg %p313
      $region66: #{_lambda_.8} parent=63 // pred_check_branch
        %1715 = sbr.rel (%p1713) target = $region68
      $region67: #{_lambda_.8} parent=63 // pred_region
        %s1716 = sadd.s32 %s27, 1
        %s1717 = smul.u32 16, %s1716
      $region68: #{_lambda_.8} parent=63 // pred_fallthru
        _
    $region64: #{_lambda_.8} parent=5 // pred_fallthru
      _
    %p1718 = scmp.le.s32.totalorder 2, %s17
    // Predicated region
    $region69: #{_lambda_.8} parent=5 // pred_check
      %p1719 = pneg %p1718
    $region70: #{_lambda_.8} parent=5 // pred_check_branch
      %1721 = sbr.rel (%p1719) target = $region72
    $region71: #{_lambda_.8} parent=5 // pred_region
      %s1722 = ssub.s32 %s17, 2
      // Predicated region
      $region73: #{_lambda_.8} parent=71 // pred_check
        %p1723 = pneg %p319
      $region74: #{_lambda_.8} parent=71 // pred_check_branch
        %1725 = sbr.rel (%p1723) target = $region76
      $region75: #{_lambda_.8} parent=71 // pred_region
        %s1726 = sadd.s32 %s29, 1
        %s1727 = smul.u32 16, %s1726
        %p1728 = scmp.lt.s32.totalorder %s28, 1
        %s1729 = scalar_select %p1728, %s28, 1
        %p1730 = scmp.lt.s32.totalorder %s1727, 63
        %s1731 = scalar_select %p1730, %s1727, 63
        %s1732 = smul.addr %s1729, 64
        %s1733 = sadd.s32 %s1731, %s1732
        %s1734 = smul.addr %s1733, 8
        %s1735 = scalar_lea.vmem %s11, %s1734
      $region76: #{_lambda_.8} parent=71 // pred_fallthru
        _
    $region72: #{_lambda_.8} parent=5 // pred_fallthru
      _
  $region6: #{_lambda_.8} parent=0 // loop_footer
    %s21 = sadd.s32 1, %s17
  $region7: #{_lambda_.8} parent=0 // loop_footer_branch
    %16 = sbr.rel target = $region3
  $region8: #{_lambda_.8} parent=0 // loop_exit
    _

// kernel: _lambda_.6
$region0: #{_lambda_.6}
  #allocation0 [shape = 'u32[]', space=smem, size = 0x4, offset = 0x4, fixed_abs, tag = 'smem constant byte address 0x4 - core index']
  #allocation1 [shape = 'u32[72,128]{1,0:T(1,128)}', space=vmem, size = 0x9000, scoped, tag = 'internal scratch']
  #allocation2 [shape = 'f32[2,130,128]{2,1,0:T(8,128)}', space=vmem, size = 0x22000, scoped, tag = 'scratch operand']
  #allocation3 [shape = 's32[2]{0}', space=sflag, size = 0x8, scoped, tag = 'scratch operand']
  #allocation4 [shape = 's32[]', space=sflag, size = 0x4, offset = 0, fixed_abs, tag = 'sflag constant byte address 0x0 - dummy sync flag']
  #allocation5 [shape = 's32[]', space=sflag, size = 0x4, offset = 0, fixed_abs, tag = 'sflag constant byte address 0x0 - dummy sync flag']
  %s0 = inlined_call_operand.vmem [shape: f32[2,512,128], index: 0, kind: input, shape index: {}]
  %s1 = inlined_call_operand.vmem [shape: bf16[384,128], index: 1, kind: input, shape index: {}]
  %s2 = inlined_call_operand.vmem [shape: f32[1,128], index: 2, kind: input, shape index: {}]
  %s3 = inlined_call_operand.vmem [shape: bf16[2,256,128], index: 3, kind: output, shape index: {0}]
  %s4 = inlined_call_operand.vmem [shape: f32[2,2,128], index: 4, kind: output, shape index: {1}]
  %5 = xla_tuple %s3, %s4
  %s6 = sld [smem:[#allocation0]]
  $region101: #{_lambda_.6} parent=0
    _
  %s8 = ssub.s32 1, %s6
  %s9 = scalar_select 0, %s8, %s6
  loop: start=0, step=1, limit=6
  $region2: #{_lambda_.6} parent=0 // loop_pre_header
    _
  $region3: #{_lambda_.6} parent=0 // loop_header
    %s11 = sphi 0, %s15
    %p12 = scmp.ge.s32.totalorder %s11, 6
    %s18 = sphi 0, %s30
    %s19 = sphi 0, %s26
    %s20 = sphi 0, %s18
    %s21 = sphi 0, %s19
    %s22 = sphi 0, %s20
    %s23 = sphi 0, %s21
    %s31 = sphi 0, %s31
    %s33 = sphi 0, %s31
    %s34 = sphi 0, %s33
    %s48 = sphi 0, %s34
    %s52 = sphi 0, %s52
    %s54 = sphi 0, %s52
    %s55 = sphi 0, %s54
    %s69 = sphi 0, %s55
    %s77 = sphi 0, %s79
    %s80 = sphi 0, %s77
    %s81 = sphi 0, %s80
    %s97 = sphi 0, %s81
    %s103 = sphi 0, %s105
    %s106 = sphi 0, %s103
    %s107 = sphi 0, %s106
    %s123 = sphi 0, %s107
  $region4: #{_lambda_.6} parent=0 // loop_header_branch
    %14 = sbr.rel (%p12) target = $region8
  $region5: #{_lambda_.6} parent=0 // loop_body
    %s16 = ssub.s32 %s11, 1
    %s17 = ssub.s32 %s11, 2
    %s24 = sadd.s32 1, %s19
    %p25 = scmp.ge.s32.totalorder %s24, 2
    %s26 = scalar_select %p25, 0, %s24
    %s27 = sadd.s32 1, %s18
    %s28 = scalar_select %p25, %s27, %s18
    %p29 = scmp.ge.s32.totalorder %s28, 2
    %s30 = scalar_select %p29, 0, %s28
    %s32 = sadd.s32 %s31, 1
    %p35 = scmp.eq.s32.totalorder %s11, 3
    %p36 = scmp.ne.s32.totalorder %s31, %s33
    %p37 = scmp.eq.s32.totalorder %s11, 0
    %p38 = por %p36, %p37
    %p39 = scmp.ne.s32.totalorder %s31, %s33
    %p40 = scmp.eq.s32.totalorder %s16, 3
    %p41 = por %p39, %p40
    %p42 = scmp.ne.s32.totalorder %s33, %s34
    %p43 = scmp.eq.s32.totalorder %s16, 0
    %p44 = por %p42, %p43
    %p45 = scmp.ne.s32.totalorder %s33, %s34
    %p46 = scmp.eq.s32.totalorder %s17, 3
    %p47 = por %p45, %p46
    %p49 = scmp.ne.s32.totalorder %s34, %s48
    %p50 = scmp.eq.s32.totalorder %s17, 0
    %p51 = por %p49, %p50
    %s53 = sadd.s32 %s52, 1
    %p56 = scmp.eq.s32.totalorder %s11, 3
    %p57 = scmp.ne.s32.totalorder %s52, %s54
    %p58 = scmp.eq.s32.totalorder %s11, 0
    %p59 = por %p57, %p58
    %p60 = scmp.ne.s32.totalorder %s52, %s54
    %p61 = scmp.eq.s32.totalorder %s16, 3
    %p62 = por %p60, %p61
    %p63 = scmp.ne.s32.totalorder %s54, %s55
    %p64 = scmp.eq.s32.totalorder %s16, 0
    %p65 = por %p63, %p64
    %p66 = scmp.ne.s32.totalorder %s54, %s55
    %p67 = scmp.eq.s32.totalorder %s17, 3
    %p68 = por %p66, %p67
    %p70 = scmp.ne.s32.totalorder %s55, %s69
    %p71 = scmp.eq.s32.totalorder %s17, 0
    %p72 = por %p70, %p71
    %s73 = ssub.s32 %s18, %s30
    %s74 = ssub.s32 %s19, %s26
    %s75 = sor.u32 %s73, %s74
    %p76 = scmp.eq.s32.totalorder %s75, 0
    %s78 = sadd.s32 %s77, 1
    %s79 = scalar_select %p76, %s77, %s78
    %p82 = pneg %p76
    %p83 = scmp.eq.s32.totalorder %s11, 3
    %p84 = por %p82, %p83
    %p85 = scmp.ne.s32.totalorder %s77, %s80
    %p86 = scmp.eq.s32.totalorder %s11, 0
    %p87 = por %p85, %p86
    %p88 = scmp.ne.s32.totalorder %s77, %s80
    %p89 = scmp.eq.s32.totalorder %s16, 3
    %p90 = por %p88, %p89
    %p91 = scmp.ne.s32.totalorder %s80, %s81
    %p92 = scmp.eq.s32.totalorder %s16, 0
    %p93 = por %p91, %p92
    %p94 = scmp.ne.s32.totalorder %s80, %s81
    %p95 = scmp.eq.s32.totalorder %s17, 3
    %p96 = por %p94, %p95
    %p98 = scmp.ne.s32.totalorder %s81, %s97
    %p99 = scmp.eq.s32.totalorder %s17, 0
    %p100 = por %p98, %p99
    %s101 = ssub.s32 %s18, %s30
    %p102 = scmp.eq.s32.totalorder %s101, 0
    %s104 = sadd.s32 %s103, 1
    %s105 = scalar_select %p102, %s103, %s104
    %p108 = pneg %p102
    %p109 = scmp.eq.s32.totalorder %s11, 3
    %p110 = por %p108, %p109
    %p111 = scmp.ne.s32.totalorder %s103, %s106
    %p112 = scmp.eq.s32.totalorder %s11, 0
    %p113 = por %p111, %p112
    %p114 = scmp.ne.s32.totalorder %s103, %s106
    %p115 = scmp.eq.s32.totalorder %s16, 3
    %p116 = por %p114, %p115
    %p117 = scmp.ne.s32.totalorder %s106, %s107
    %p118 = scmp.eq.s32.totalorder %s16, 0
    %p119 = por %p117, %p118
    %p120 = scmp.ne.s32.totalorder %s106, %s107
    %p121 = scmp.eq.s32.totalorder %s17, 3
    %p122 = por %p120, %p121
    %p124 = scmp.ne.s32.totalorder %s107, %s123
    %p125 = scmp.eq.s32.totalorder %s17, 0
    %p126 = por %p124, %p125
    %p127 = scmp.le.s32.totalorder 1, %s11
    %p128 = scmp.lt.s32.totalorder %s11, 5
    %p129 = pnand %p127, %p128
    %p130 = pneg %p129
    // Predicated region
    $region9: #{_lambda_.6} parent=5 // pred_check
      _
    $region10: #{_lambda_.6} parent=5 // pred_check_branch
      %132 = sbr.rel (%p129) target = $region12
    $region11: #{_lambda_.6} parent=5 // pred_region
      %s133 = ssub.s32 %s11, 1
      // Predicated region
      $region13: #{_lambda_.6} parent=11 // pred_check
        %p134 = pneg %p44
      $region14: #{_lambda_.6} parent=11 // pred_check_branch
        %136 = sbr.rel (%p134) target = $region16
      $region15: #{_lambda_.6} parent=11 // pred_region
        _
      $region16: #{_lambda_.6} parent=11 // pred_fallthru
        _
      // Predicated region
      $region17: #{_lambda_.6} parent=11 // pred_check
        %p137 = pneg %p65
      $region18: #{_lambda_.6} parent=11 // pred_check_branch
        %139 = sbr.rel (%p137) target = $region20
      $region19: #{_lambda_.6} parent=11 // pred_region
        _
      $region20: #{_lambda_.6} parent=11 // pred_fallthru
        _
    $region12: #{_lambda_.6} parent=5 // pred_fallthru
      _
    %p140 = scmp.lt.s32.totalorder %s11, 4
    // Predicated region
    $region21: #{_lambda_.6} parent=5 // pred_check
      %p141 = pneg %p140
    $region22: #{_lambda_.6} parent=5 // pred_check_branch
      %143 = sbr.rel (%p141) target = $region24
    $region23: #{_lambda_.6} parent=5 // pred_region
      _
    $region24: #{_lambda_.6} parent=5 // pred_fallthru
      _
    %p144 = scmp.le.s32.totalorder 1, %s11
    %p145 = scmp.lt.s32.totalorder %s11, 5
    %p146 = pnand %p144, %p145
    %p147 = pneg %p146
    // Predicated region
    $region25: #{_lambda_.6} parent=5 // pred_check
      _
    $region26: #{_lambda_.6} parent=5 // pred_check_branch
      %149 = sbr.rel (%p146) target = $region28
    $region27: #{_lambda_.6} parent=5 // pred_region
      %s150 = ssub.s32 %s11, 1
      %p151 = pneg %p44
      %p152 = pneg %p41
      %p153 = pneg %p65
      %p154 = pneg %p62
      %p155 = pneg %p93
      %p156 = pneg %p90
      %s157 = smul.u32 16, %s21
      %p158 = scmp.lt.s32.totalorder %s20, 1
      %s159 = scalar_select %p158, %s20, 1
      %p160 = scmp.lt.s32.totalorder %s157, 31
      %s161 = scalar_select %p160, %s157, 31
      %s162 = smul.addr %s159, 32
      %s163 = sadd.s32 %s161, %s162
      %s164 = smul.addr %s163, 4
      %s165 = scalar_lea.vmem %s3, %s164
      %p166 = pneg %p119
      %p167 = pneg %p116
      %p168 = scmp.lt.s32.totalorder %s20, 1
      %s169 = scalar_select %p168, %s20, 1
      %s170 = smul.addr %s169, 2
      %s171 = scalar_lea.vmem %s4, %s170
      %s172 = smul.u32 16, %s21
      %p173 = scmp.lt.s32.totalorder %s20, 1
      %s174 = scalar_select %p173, %s20, 1
      %p175 = scmp.lt.s32.totalorder %s172, 31
      %s176 = scalar_select %p175, %s172, 31
      %s177 = smul.addr %s174, 32
      %s178 = sadd.s32 %s176, %s177
      %s179 = smul.addr %s178, 4
      %s180 = scalar_lea.vmem %s3, %s179
      %s181 = smul.u32 16, %s21
      %p182 = scmp.lt.s32.totalorder %s20, 1
      %s183 = scalar_select %p182, %s20, 1
      %s184 = smul.addr %s183, 2
      %s185 = scalar_lea.vmem %s4, %s184
      %p186 = scmp.eq.s32.totalorder %s21, 0
      // Predicated region
      $region29: #{_lambda_.6} parent=27 // pred_check
        %p187 = pneg %p186
      $region30: #{_lambda_.6} parent=27 // pred_check_branch
        %189 = sbr.rel (%p187) target = $region32
      $region31: #{_lambda_.6} parent=27 // pred_region
        %s190 = smul.u32 %s20, 512
        %s191 = sadd.s32 127, %s190
        %s192 = scalar_lea.vmem %s0, %s191
        // Predicated region
        $region33: #{_lambda_.6} parent=31 // pred_check
          _
        $region34: #{_lambda_.6} parent=31 // pred_check_branch
          %194 = sbr.rel (0) target = $region36
        $region35: #{_lambda_.6} parent=31 // pred_region
          %s195 = scalar_lea.vmem %s192, 128
          %s196 = scalar_lea.vmem [#allocation2], 128
          loop: start=0, step=1, limit=1
          $region37: #{_lambda_.6} parent=35 // loop_pre_header
            _
          $region38: #{_lambda_.6} parent=35 // loop_header
            %s198 = sphi 0, %s202
            %p199 = scmp.ge.s32.totalorder %s198, 1
            %s203 = sphi %s192, %s192
            %s204 = sphi [#allocation2], [#allocation2]
          $region39: #{_lambda_.6} parent=35 // loop_header_branch
            %201 = sbr.rel (%p199) target = $region43
          $region40: #{_lambda_.6} parent=35 // loop_body
            %v205 = vld [vmem:[%s203] sm:$0xff]
            %206 = vst [vmem:[%s204] sm:$0xff] %v205
            %v207 = vld [vmem:[%s203 + $0x8] sm:$0xff]
            %208 = vst [vmem:[%s204 + $0x8] sm:$0xff] %v207
            %v209 = vld [vmem:[%s203 + $0x10] sm:$0xff]
            %210 = vst [vmem:[%s204 + $0x10] sm:$0xff] %v209
            %v211 = vld [vmem:[%s203 + $0x18] sm:$0xff]
            %212 = vst [vmem:[%s204 + $0x18] sm:$0xff] %v211
            %v213 = vld [vmem:[%s203 + $0x20] sm:$0xff]
            %214 = vst [vmem:[%s204 + $0x20] sm:$0xff] %v213
            %v215 = vld [vmem:[%s203 + $0x28] sm:$0xff]
            %216 = vst [vmem:[%s204 + $0x28] sm:$0xff] %v215
            %v217 = vld [vmem:[%s203 + $0x30] sm:$0xff]
            %218 = vst [vmem:[%s204 + $0x30] sm:$0xff] %v217
            %v219 = vld [vmem:[%s203 + $0x38] sm:$0xff]
            %220 = vst [vmem:[%s204 + $0x38] sm:$0xff] %v219
            %v221 = vld [vmem:[%s203 + $0x40] sm:$0xff]
            %222 = vst [vmem:[%s204 + $0x40] sm:$0xff] %v221
            %v223 = vld [vmem:[%s203 + $0x48] sm:$0xff]
            %224 = vst [vmem:[%s204 + $0x48] sm:$0xff] %v223
            %v225 = vld [vmem:[%s203 + $0x50] sm:$0xff]
            %226 = vst [vmem:[%s204 + $0x50] sm:$0xff] %v225
            %v227 = vld [vmem:[%s203 + $0x58] sm:$0xff]
            %228 = vst [vmem:[%s204 + $0x58] sm:$0xff] %v227
            %v229 = vld [vmem:[%s203 + $0x60] sm:$0xff]
            %230 = vst [vmem:[%s204 + $0x60] sm:$0xff] %v229
            %v231 = vld [vmem:[%s203 + $0x68] sm:$0xff]
            %232 = vst [vmem:[%s204 + $0x68] sm:$0xff] %v231
            %v233 = vld [vmem:[%s203 + $0x70] sm:$0xff]
            %234 = vst [vmem:[%s204 + $0x70] sm:$0xff] %v233
            %v235 = vld [vmem:[%s203 + $0x78] sm:$0xff]
            %236 = vst [vmem:[%s204 + $0x78] sm:$0xff] %v235
          $region41: #{_lambda_.6} parent=35 // loop_footer
            %s202 = sadd.s32 1, %s198
          $region42: #{_lambda_.6} parent=35 // loop_footer_branch
            %197 = sbr.rel target = $region38
          $region43: #{_lambda_.6} parent=35 // loop_exit
            _
          %s238 = ssub.s32 4, 1
          loop: start=0, step=1, limit=1
          $region44: #{_lambda_.6} parent=35 // loop_pre_header
            _
          $region45: #{_lambda_.6} parent=35 // loop_header
            %s240 = sphi 0, %s244
            %p241 = scmp.ge.s32.totalorder %s240, 1
            %s245 = sphi %s195, %s195
            %s246 = sphi %s196, %s196
          $region46: #{_lambda_.6} parent=35 // loop_header_branch
            %243 = sbr.rel (%p241) target = $region50
          $region47: #{_lambda_.6} parent=35 // loop_body
            %v247 = vld [vmem:[%s245] sm:%s238]
            %248 = vst [vmem:[%s246] sm:%s238] %v247
          $region48: #{_lambda_.6} parent=35 // loop_footer
            %s244 = sadd.s32 1, %s240
          $region49: #{_lambda_.6} parent=35 // loop_footer_branch
            %239 = sbr.rel target = $region45
          $region50: #{_lambda_.6} parent=35 // loop_exit
            _
        $region36: #{_lambda_.6} parent=31 // pred_fallthru
          _
        // Predicated region
        $region51: #{_lambda_.6} parent=31 // pred_check
          _
        $region52: #{_lambda_.6} parent=31 // pred_check_branch
          %251 = sbr.rel (0) target = $region54
        $region53: #{_lambda_.6} parent=31 // pred_region
          %252 = vsyncadd [#allocation3], 2080
        $region54: #{_lambda_.6} parent=31 // pred_fallthru
          _
        %253 = vst [vmem:[%s185] sm:$0x3] 0.0
      $region32: #{_lambda_.6} parent=27 // pred_fallthru
        _
      %p254 = scmp.lt.s32.totalorder %s21, 0
      %s255 = ssub.s32 0, %s21
      %s256 = scalar_select %p254, %s255, %s21
      %s257 = sand.u32 %s256, 1
      %s258 = ssub.s32 0, %s257
      %s259 = scalar_select %p254, %s258, %s257
      %p260 = scmp.ne.s32.totalorder %s259, 0
      %p261 = scmp.lt.s32.totalorder %s259, 0
      %p262 = pnand %p261, %p260
      %p263 = pneg %p262
      %s264 = sadd.s32 %s259, 2
      %s265 = scalar_select %p263, %s264, %s259
      %s266 = sadd.s32 %s21, 1
      %p267 = scmp.lt.s32.totalorder %s266, 2
      // Predicated region
      $region55: #{_lambda_.6} parent=27 // pred_check
        %p268 = pneg %p267
      $region56: #{_lambda_.6} parent=27 // pred_check_branch
        %270 = sbr.rel (%p268) target = $region58
      $region57: #{_lambda_.6} parent=27 // pred_region
        %p271 = scmp.lt.s32.totalorder %s266, 0
        %s272 = ssub.s32 0, %s266
        %s273 = scalar_select %p271, %s272, %s266
        %s274 = sand.u32 %s273, 1
        %s275 = ssub.s32 0, %s274
        %s276 = scalar_select %p271, %s275, %s274
        %p277 = scmp.ne.s32.totalorder %s276, 0
        %p278 = scmp.lt.s32.totalorder %s276, 0
        %p279 = pnand %p278, %p277
        %p280 = pneg %p279
        %s281 = sadd.s32 %s276, 2
        %s282 = scalar_select %p280, %s281, %s276
        %s283 = sadd.s32 %s21, 2
        %s284 = smul.u32 %s283, 128
        %s285 = ssub.s32 %s284, 1
        %s286 = smul.u32 %s20, 512
        %s287 = sadd.s32 %s285, %s286
        %s288 = scalar_lea.vmem %s0, %s287
        %s289 = smul.u32 %s282, 136
        %s290 = scalar_lea.vmem [#allocation2], %s289
        %s291 = scalar_lea.sflag [#allocation3], %s282
        // Predicated region
        $region59: #{_lambda_.6} parent=57 // pred_check
          _
        $region60: #{_lambda_.6} parent=57 // pred_check_branch
          %293 = sbr.rel (0) target = $region62
        $region61: #{_lambda_.6} parent=57 // pred_region
          %s294 = scalar_lea.vmem %s288, 128
          %s295 = scalar_lea.vmem %s290, 128 [#allocation2]
          loop: start=0, step=1, limit=1
          $region63: #{_lambda_.6} parent=61 // loop_pre_header
            _
          $region64: #{_lambda_.6} parent=61 // loop_header
            %s297 = sphi 0, %s301
            %p298 = scmp.ge.s32.totalorder %s297, 1
            %s302 = sphi %s288, %s288
            %s303 = sphi %s290, %s290
          $region65: #{_lambda_.6} parent=61 // loop_header_branch
            %300 = sbr.rel (%p298) target = $region69
          $region66: #{_lambda_.6} parent=61 // loop_body
            %v304 = vld [vmem:[%s302] sm:$0xff]
            %305 = vst [vmem:[%s303] sm:$0xff] %v304
            %v306 = vld [vmem:[%s302 + $0x8] sm:$0xff]
            %307 = vst [vmem:[%s303 + $0x8] sm:$0xff] %v306
            %v308 = vld [vmem:[%s302 + $0x10] sm:$0xff]
            %309 = vst [vmem:[%s303 + $0x10] sm:$0xff] %v308
            %v310 = vld [vmem:[%s302 + $0x18] sm:$0xff]
            %311 = vst [vmem:[%s303 + $0x18] sm:$0xff] %v310
            %v312 = vld [vmem:[%s302 + $0x20] sm:$0xff]
            %313 = vst [vmem:[%s303 + $0x20] sm:$0xff] %v312
            %v314 = vld [vmem:[%s302 + $0x28] sm:$0xff]
            %315 = vst [vmem:[%s303 + $0x28] sm:$0xff] %v314
            %v316 = vld [vmem:[%s302 + $0x30] sm:$0xff]
            %317 = vst [vmem:[%s303 + $0x30] sm:$0xff] %v316
            %v318 = vld [vmem:[%s302 + $0x38] sm:$0xff]
            %319 = vst [vmem:[%s303 + $0x38] sm:$0xff] %v318
            %v320 = vld [vmem:[%s302 + $0x40] sm:$0xff]
            %321 = vst [vmem:[%s303 + $0x40] sm:$0xff] %v320
            %v322 = vld [vmem:[%s302 + $0x48] sm:$0xff]
            %323 = vst [vmem:[%s303 + $0x48] sm:$0xff] %v322
            %v324 = vld [vmem:[%s302 + $0x50] sm:$0xff]
            %325 = vst [vmem:[%s303 + $0x50] sm:$0xff] %v324
            %v326 = vld [vmem:[%s302 + $0x58] sm:$0xff]
            %327 = vst [vmem:[%s303 + $0x58] sm:$0xff] %v326
            %v328 = vld [vmem:[%s302 + $0x60] sm:$0xff]
            %329 = vst [vmem:[%s303 + $0x60] sm:$0xff] %v328
            %v330 = vld [vmem:[%s302 + $0x68] sm:$0xff]
            %331 = vst [vmem:[%s303 + $0x68] sm:$0xff] %v330
            %v332 = vld [vmem:[%s302 + $0x70] sm:$0xff]
            %333 = vst [vmem:[%s303 + $0x70] sm:$0xff] %v332
            %v334 = vld [vmem:[%s302 + $0x78] sm:$0xff]
            %335 = vst [vmem:[%s303 + $0x78] sm:$0xff] %v334
          $region67: #{_lambda_.6} parent=61 // loop_footer
            %s301 = sadd.s32 1, %s297
          $region68: #{_lambda_.6} parent=61 // loop_footer_branch
            %296 = sbr.rel target = $region64
          $region69: #{_lambda_.6} parent=61 // loop_exit
            _
          %s337 = ssub.s32 4, 1
          loop: start=0, step=1, limit=1
          $region70: #{_lambda_.6} parent=61 // loop_pre_header
            _
          $region71: #{_lambda_.6} parent=61 // loop_header
            %s339 = sphi 0, %s343
            %p340 = scmp.ge.s32.totalorder %s339, 1
            %s344 = sphi %s294, %s294
            %s345 = sphi %s295, %s295
          $region72: #{_lambda_.6} parent=61 // loop_header_branch
            %342 = sbr.rel (%p340) target = $region76
          $region73: #{_lambda_.6} parent=61 // loop_body
            %v346 = vld [vmem:[%s344] sm:%s337]
            %347 = vst [vmem:[%s345] sm:%s337] %v346
          $region74: #{_lambda_.6} parent=61 // loop_footer
            %s343 = sadd.s32 1, %s339
          $region75: #{_lambda_.6} parent=61 // loop_footer_branch
            %338 = sbr.rel target = $region71
          $region76: #{_lambda_.6} parent=61 // loop_exit
            _
        $region62: #{_lambda_.6} parent=57 // pred_fallthru
          _
        // Predicated region
        $region77: #{_lambda_.6} parent=57 // pred_check
          _
        $region78: #{_lambda_.6} parent=57 // pred_check_branch
          %350 = sbr.rel (0) target = $region80
        $region79: #{_lambda_.6} parent=57 // pred_region
          %351 = vsyncadd %s291, 2080
        $region80: #{_lambda_.6} parent=57 // pred_fallthru
          _
      $region58: #{_lambda_.6} parent=27 // pred_fallthru
        _
      %s352 = smul.u32 %s265, 136
      %s353 = scalar_lea.vmem [#allocation2], %s352
      %s354 = scalar_lea.sflag [#allocation3], %s265
      %s355 = smul.u32 130, 1
      %s356 = sshll.u32 %s355, 4
      %357 = dma.done %s354, %s356
      %v358 = vld [vmem:[%s353] sm:$0xff]
      %v359 = vld [vmem:[%s353 + $0x8] sm:$0xff]
      %v360 = vld [vmem:[%s353 + $0x10] sm:$0xff]
      %v361 = vld [vmem:[%s353 + $0x18] sm:$0xff]
      %v362 = vld [vmem:[%s353 + $0x20] sm:$0xff]
      %v363 = vld [vmem:[%s353 + $0x28] sm:$0xff]
      %v364 = vld [vmem:[%s353 + $0x30] sm:$0xff]
      %v365 = vld [vmem:[%s353 + $0x38] sm:$0xff]
      %v366 = vld [vmem:[%s353 + $0x40] sm:$0xff]
      %v367 = vld [vmem:[%s353 + $0x48] sm:$0xff]
      %v368 = vld [vmem:[%s353 + $0x50] sm:$0xff]
      %v369 = vld [vmem:[%s353 + $0x58] sm:$0xff]
      %v370 = vld [vmem:[%s353 + $0x60] sm:$0xff]
      %v371 = vld [vmem:[%s353 + $0x68] sm:$0xff]
      %v372 = vld [vmem:[%s353 + $0x70] sm:$0xff]
      %v373 = vld [vmem:[%s353 + $0x78] sm:$0xff]
      %v374 = vld [vmem:[%s353 + $0x80] sm:$0x3]
      %v375 = vpack.c.bf16 %v358, %v358
      %v376 = vpack.c.bf16 %v359, %v359
      %v377 = vpack.c.bf16 %v360, %v360
      %v378 = vpack.c.bf16 %v361, %v361
      %v379 = vpack.c.bf16 %v362, %v362
      %v380 = vpack.c.bf16 %v363, %v363
      %v381 = vpack.c.bf16 %v364, %v364
      %v382 = vpack.c.bf16 %v365, %v365
      %v383 = vpack.c.bf16 %v366, %v366
      %v384 = vpack.c.bf16 %v367, %v367
      %v385 = vpack.c.bf16 %v368, %v368
      %v386 = vpack.c.bf16 %v369, %v369
      %v387 = vpack.c.bf16 %v370, %v370
      %v388 = vpack.c.bf16 %v371, %v371
      %v389 = vpack.c.bf16 %v372, %v372
      %v390 = vpack.c.bf16 %v373, %v373
      %v391 = vpack.c.bf16 %v374, %v374
      %v408 = vunpack.c.l.b16 %v375
      %v409 = vunpack.c.l.b16 %v376
      %v410 = vunpack.c.l.b16 %v377
      %v411 = vunpack.c.l.b16 %v378
      %v412 = vunpack.c.l.b16 %v379
      %v413 = vunpack.c.l.b16 %v380
      %v414 = vunpack.c.l.b16 %v381
      %v415 = vunpack.c.l.b16 %v382
      %v416 = vunpack.c.l.b16 %v383
      %v417 = vunpack.c.l.b16 %v384
      %v418 = vunpack.c.l.b16 %v385
      %v419 = vunpack.c.l.b16 %v386
      %v420 = vunpack.c.l.b16 %v387
      %v421 = vunpack.c.l.b16 %v388
      %v422 = vunpack.c.l.b16 %v389
      %v423 = vunpack.c.l.b16 %v390
      %v424 = vpack.c.b16 %v409, %v408
      %v425 = vpack.c.b16 %v411, %v410
      %v426 = vpack.c.b16 %v413, %v412
      %v427 = vpack.c.b16 %v415, %v414
      %v428 = vpack.c.b16 %v417, %v416
      %v429 = vpack.c.b16 %v419, %v418
      %v430 = vpack.c.b16 %v421, %v420
      %v431 = vpack.c.b16 %v423, %v422
      %v441 = vunpack.c.l.b16 %v391
      %v442 = vpack.c.b16 %v441, %v441
      %vm443 = vsmask.f32 7424
      %v445 = vshrl.u32 %v424, 16
      %v447 = vshll.u32 %v424, 16
      %v449 = vrot.slane %v447, 1
      %v450 = vor.u32 %v445, %v449
      %v452 = vshll.u32 %v425, 16
      %v454 = vrot.slane %v452, 1
      %v455 = vsel %vm443, %v450, %v454
      %v456 = vshrl.u32 %v425, 16
      %v458 = vor.u32 %v456, %v454
      %v460 = vshll.u32 %v426, 16
      %v462 = vrot.slane %v460, 1
      %v463 = vsel %vm443, %v458, %v462
      %v464 = vshrl.u32 %v426, 16
      %v466 = vor.u32 %v464, %v462
      %v468 = vshll.u32 %v427, 16
      %v470 = vrot.slane %v468, 1
      %v471 = vsel %vm443, %v466, %v470
      %v472 = vshrl.u32 %v427, 16
      %v474 = vor.u32 %v472, %v470
      %v476 = vshll.u32 %v428, 16
      %v478 = vrot.slane %v476, 1
      %v479 = vsel %vm443, %v474, %v478
      %v480 = vshrl.u32 %v428, 16
      %v482 = vor.u32 %v480, %v478
      %v484 = vshll.u32 %v429, 16
      %v486 = vrot.slane %v484, 1
      %v487 = vsel %vm443, %v482, %v486
      %v488 = vshrl.u32 %v429, 16
      %v490 = vor.u32 %v488, %v486
      %v492 = vshll.u32 %v430, 16
      %v494 = vrot.slane %v492, 1
      %v495 = vsel %vm443, %v490, %v494
      %v496 = vshrl.u32 %v430, 16
      %v498 = vor.u32 %v496, %v494
      %v500 = vshll.u32 %v431, 16
      %v502 = vrot.slane %v500, 1
      %v503 = vsel %vm443, %v498, %v502
      %v504 = vshrl.u32 %v431, 16
      %v506 = vor.u32 %v504, %v502
      %v508 = vshll.u32 %v442, 16
      %v510 = vrot.slane %v508, 1
      %v511 = vsel %vm443, %v506, %v510
      %vm520 = vcmask 1046528
      %v521 = vrot.slane %v424, 1
      %v522 = vrot.slane %v425, 1
      %v523 = vsel %vm520, %v521, %v522
      %v524 = vrot.slane %v426, 1
      %v525 = vsel %vm520, %v522, %v524
      %v526 = vrot.slane %v427, 1
      %v527 = vsel %vm520, %v524, %v526
      %v528 = vrot.slane %v428, 1
      %v529 = vsel %vm520, %v526, %v528
      %v530 = vrot.slane %v429, 1
      %v531 = vsel %vm520, %v528, %v530
      %v532 = vrot.slane %v430, 1
      %v533 = vsel %vm520, %v530, %v532
      %v534 = vrot.slane %v431, 1
      %v535 = vsel %vm520, %v532, %v534
      %v536 = vrot.slane %v442, 1
      %v537 = vsel %vm520, %v534, %v536
      %v546 = vld [vmem:[%s1] sm:$0xf]
      %v547 = vld [vmem:[%s1 + $0x4] sm:$0xf]
      %v548 = vld [vmem:[%s1 + $0x8] sm:$0xf]
      %v549 = vld [vmem:[%s1 + $0xc] sm:$0xf]
      %v550 = vld [vmem:[%s1 + $0x10] sm:$0xf]
      %v551 = vld [vmem:[%s1 + $0x14] sm:$0xf]
      %v552 = vld [vmem:[%s1 + $0x18] sm:$0xf]
      %v553 = vld [vmem:[%s1 + $0x1c] sm:$0xf]
      %v554 = vld [vmem:[%s1 + $0x20] sm:$0xf]
      %v555 = vld [vmem:[%s1 + $0x24] sm:$0xf]
      %v556 = vld [vmem:[%s1 + $0x28] sm:$0xf]
      %v557 = vld [vmem:[%s1 + $0x2c] sm:$0xf]
      %v558 = vld [vmem:[%s1 + $0x30] sm:$0xf]
      %v559 = vld [vmem:[%s1 + $0x34] sm:$0xf]
      %v560 = vld [vmem:[%s1 + $0x38] sm:$0xf]
      %v561 = vld [vmem:[%s1 + $0x3c] sm:$0xf]
      %v562 = vld [vmem:[%s1 + $0x40] sm:$0xf]
      %v563 = vld [vmem:[%s1 + $0x44] sm:$0xf]
      %v564 = vld [vmem:[%s1 + $0x48] sm:$0xf]
      %v565 = vld [vmem:[%s1 + $0x4c] sm:$0xf]
      %v566 = vld [vmem:[%s1 + $0x50] sm:$0xf]
      %v567 = vld [vmem:[%s1 + $0x54] sm:$0xf]
      %v568 = vld [vmem:[%s1 + $0x58] sm:$0xf]
      %v569 = vld [vmem:[%s1 + $0x5c] sm:$0xf]
      %v570 = vld [vmem:[%s1 + $0x60] sm:$0xf]
      %v571 = vld [vmem:[%s1 + $0x64] sm:$0xf]
      %v572 = vld [vmem:[%s1 + $0x68] sm:$0xf]
      %v573 = vld [vmem:[%s1 + $0x6c] sm:$0xf]
      %v574 = vld [vmem:[%s1 + $0x70] sm:$0xf]
      %v575 = vld [vmem:[%s1 + $0x74] sm:$0xf]
      %v576 = vld [vmem:[%s1 + $0x78] sm:$0xf]
      %v577 = vld [vmem:[%s1 + $0x7c] sm:$0xf]
      %v578 = vld [vmem:[%s1 + $0x80] sm:$0xf]
      %v579 = vld [vmem:[%s1 + $0x84] sm:$0xf]
      %v580 = vld [vmem:[%s1 + $0x88] sm:$0xf]
      %v581 = vld [vmem:[%s1 + $0x8c] sm:$0xf]
      %v582 = vld [vmem:[%s1 + $0x90] sm:$0xf]
      %v583 = vld [vmem:[%s1 + $0x94] sm:$0xf]
      %v584 = vld [vmem:[%s1 + $0x98] sm:$0xf]
      %v585 = vld [vmem:[%s1 + $0x9c] sm:$0xf]
      %v586 = vld [vmem:[%s1 + $0xa0] sm:$0xf]
      %v587 = vld [vmem:[%s1 + $0xa4] sm:$0xf]
      %v588 = vld [vmem:[%s1 + $0xa8] sm:$0xf]
      %v589 = vld [vmem:[%s1 + $0xac] sm:$0xf]
      %v590 = vld [vmem:[%s1 + $0xb0] sm:$0xf]
      %v591 = vld [vmem:[%s1 + $0xb4] sm:$0xf]
      %v592 = vld [vmem:[%s1 + $0xb8] sm:$0xf]
      %v593 = vld [vmem:[%s1 + $0xbc] sm:$0xf]
      %v594 = vld [vmem:[%s2] sm:$0x1]
      %v596 = vperm.slane %v594, 0
      %v646 = vunpack.c.l.b16 %v546
      %v647 = vunpack.c.l.b16 %v547
      %v648 = vunpack.c.l.b16 %v548
      %v649 = vunpack.c.l.b16 %v549
      %v650 = vunpack.c.l.b16 %v550
      %v651 = vunpack.c.l.b16 %v551
      %v652 = vunpack.c.l.b16 %v552
      %v653 = vunpack.c.l.b16 %v553
      %v654 = vunpack.c.l.b16 %v554
      %v655 = vunpack.c.l.b16 %v555
      %v656 = vunpack.c.l.b16 %v556
      %v657 = vunpack.c.l.b16 %v557
      %v658 = vunpack.c.l.b16 %v558
      %v659 = vunpack.c.l.b16 %v559
      %v660 = vunpack.c.l.b16 %v560
      %v661 = vunpack.c.l.b16 %v561
      %v662 = vunpack.c.l.b16 %v562
      %v663 = vunpack.c.l.b16 %v563
      %v664 = vunpack.c.l.b16 %v564
      %v665 = vunpack.c.l.b16 %v565
      %v666 = vunpack.c.l.b16 %v566
      %v667 = vunpack.c.l.b16 %v567
      %v668 = vunpack.c.l.b16 %v568
      %v669 = vunpack.c.l.b16 %v569
      %v670 = vunpack.c.l.b16 %v570
      %v671 = vunpack.c.l.b16 %v571
      %v672 = vunpack.c.l.b16 %v572
      %v673 = vunpack.c.l.b16 %v573
      %v674 = vunpack.c.l.b16 %v574
      %v675 = vunpack.c.l.b16 %v575
      %v676 = vunpack.c.l.b16 %v576
      %v677 = vunpack.c.l.b16 %v577
      %v678 = vunpack.c.l.b16 %v578
      %v679 = vunpack.c.l.b16 %v579
      %v680 = vunpack.c.l.b16 %v580
      %v681 = vunpack.c.l.b16 %v581
      %v682 = vunpack.c.l.b16 %v582
      %v683 = vunpack.c.l.b16 %v583
      %v684 = vunpack.c.l.b16 %v584
      %v685 = vunpack.c.l.b16 %v585
      %v686 = vunpack.c.l.b16 %v586
      %v687 = vunpack.c.l.b16 %v587
      %v688 = vunpack.c.l.b16 %v588
      %v689 = vunpack.c.l.b16 %v589
      %v690 = vunpack.c.l.b16 %v590
      %v691 = vunpack.c.l.b16 %v591
      %v692 = vunpack.c.l.b16 %v592
      %v693 = vunpack.c.l.b16 %v593
      %v694 = vpack.c.b16 %v647, %v646
      %v695 = vpack.c.b16 %v649, %v648
      %v696 = vpack.c.b16 %v651, %v650
      %v697 = vpack.c.b16 %v653, %v652
      %v698 = vpack.c.b16 %v655, %v654
      %v699 = vpack.c.b16 %v657, %v656
      %v700 = vpack.c.b16 %v659, %v658
      %v701 = vpack.c.b16 %v661, %v660
      %v702 = vpack.c.b16 %v663, %v662
      %v703 = vpack.c.b16 %v665, %v664
      %v704 = vpack.c.b16 %v667, %v666
      %v705 = vpack.c.b16 %v669, %v668
      %v706 = vpack.c.b16 %v671, %v670
      %v707 = vpack.c.b16 %v673, %v672
      %v708 = vpack.c.b16 %v675, %v674
      %v709 = vpack.c.b16 %v677, %v676
      %v710 = vpack.c.b16 %v679, %v678
      %v711 = vpack.c.b16 %v681, %v680
      %v712 = vpack.c.b16 %v683, %v682
      %v713 = vpack.c.b16 %v685, %v684
      %v714 = vpack.c.b16 %v687, %v686
      %v715 = vpack.c.b16 %v689, %v688
      %v716 = vpack.c.b16 %v691, %v690
      %v717 = vpack.c.b16 %v693, %v692
      %742 = vmatpush.bf16.msra.mxu0 %v701
      %743 = vmatpush.bf16.msra.mxu0 %v700
      %744 = vmatpush.bf16.msra.mxu0 %v699
      %745 = vmatpush.bf16.msra.mxu0 %v698
      %746 = vmatpush.bf16.msra.mxu0 %v697
      %747 = vmatpush.bf16.msra.mxu0 %v696
      %748 = vmatpush.bf16.msra.mxu0 %v695
      %749 = vmatpush.bf16.msra.mxu0 %v694
      %750 = vmatmul.bf16.gmra.mxu0 %v424
      %v751 = vpop.f32.mrf.mxu0
      %v752 = vadd.f32 %v596, %v751
      %v753 = vpop.f32.mrf.mxu0
      %v754 = vadd.f32 %v596, %v753
      %755 = vmatmul.bf16.gmra.mxu0 %v425
      %v756 = vpop.f32.mrf.mxu0
      %v757 = vadd.f32 %v596, %v756
      %v758 = vpop.f32.mrf.mxu0
      %v759 = vadd.f32 %v596, %v758
      %760 = vmatmul.bf16.gmra.mxu0 %v426
      %v761 = vpop.f32.mrf.mxu0
      %v762 = vadd.f32 %v596, %v761
      %v763 = vpop.f32.mrf.mxu0
      %v764 = vadd.f32 %v596, %v763
      %765 = vmatmul.bf16.gmra.mxu0 %v427
      %v766 = vpop.f32.mrf.mxu0
      %v767 = vadd.f32 %v596, %v766
      %v768 = vpop.f32.mrf.mxu0
      %v769 = vadd.f32 %v596, %v768
      %770 = vmatmul.bf16.gmra.mxu0 %v428
      %v771 = vpop.f32.mrf.mxu0
      %v772 = vadd.f32 %v596, %v771
      %v773 = vpop.f32.mrf.mxu0
      %v774 = vadd.f32 %v596, %v773
      %775 = vmatmul.bf16.gmra.mxu0 %v429
      %v776 = vpop.f32.mrf.mxu0
      %v777 = vadd.f32 %v596, %v776
      %v778 = vpop.f32.mrf.mxu0
      %v779 = vadd.f32 %v596, %v778
      %780 = vmatmul.bf16.gmra.mxu0 %v430
      %v781 = vpop.f32.mrf.mxu0
      %v782 = vadd.f32 %v596, %v781
      %v783 = vpop.f32.mrf.mxu0
      %v784 = vadd.f32 %v596, %v783
      %785 = vmatmul.bf16.gmra.mxu0 %v431
      %v786 = vpop.f32.mrf.mxu0
      %v787 = vadd.f32 %v596, %v786
      %v788 = vpop.f32.mrf.mxu0
      %v789 = vadd.f32 %v596, %v788
      %790 = vdwg.mxu0
      %791 = vmatpush.bf16.msra.mxu0 %v709
      %792 = vmatpush.bf16.msra.mxu0 %v708
      %793 = vmatpush.bf16.msra.mxu0 %v707
      %794 = vmatpush.bf16.msra.mxu0 %v706
      %795 = vmatpush.bf16.msra.mxu0 %v705
      %796 = vmatpush.bf16.msra.mxu0 %v704
      %797 = vmatpush.bf16.msra.mxu0 %v703
      %798 = vmatpush.bf16.msra.mxu0 %v702
      %799 = vmatmul.bf16.gmra.mxu0 %v455
      %v800 = vpop.f32.mrf.mxu0
      %v801 = vadd.f32 %v752, %v800
      %v802 = vpop.f32.mrf.mxu0
      %v803 = vadd.f32 %v754, %v802
      %804 = vmatmul.bf16.gmra.mxu0 %v463
      %v805 = vpop.f32.mrf.mxu0
      %v806 = vadd.f32 %v757, %v805
      %v807 = vpop.f32.mrf.mxu0
      %v808 = vadd.f32 %v759, %v807
      %809 = vmatmul.bf16.gmra.mxu0 %v471
      %v810 = vpop.f32.mrf.mxu0
      %v811 = vadd.f32 %v762, %v810
      %v812 = vpop.f32.mrf.mxu0
      %v813 = vadd.f32 %v764, %v812
      %814 = vmatmul.bf16.gmra.mxu0 %v479
      %v815 = vpop.f32.mrf.mxu0
      %v816 = vadd.f32 %v767, %v815
      %v817 = vpop.f32.mrf.mxu0
      %v818 = vadd.f32 %v769, %v817
      %819 = vmatmul.bf16.gmra.mxu0 %v487
      %v820 = vpop.f32.mrf.mxu0
      %v821 = vadd.f32 %v772, %v820
      %v822 = vpop.f32.mrf.mxu0
      %v823 = vadd.f32 %v774, %v822
      %824 = vmatmul.bf16.gmra.mxu0 %v495
      %v825 = vpop.f32.mrf.mxu0
      %v826 = vadd.f32 %v777, %v825
      %v827 = vpop.f32.mrf.mxu0
      %v828 = vadd.f32 %v779, %v827
      %829 = vmatmul.bf16.gmra.mxu0 %v503
      %v830 = vpop.f32.mrf.mxu0
      %v831 = vadd.f32 %v782, %v830
      %v832 = vpop.f32.mrf.mxu0
      %v833 = vadd.f32 %v784, %v832
      %834 = vmatmul.bf16.gmra.mxu0 %v511
      %v835 = vpop.f32.mrf.mxu0
      %v836 = vadd.f32 %v787, %v835
      %v837 = vpop.f32.mrf.mxu0
      %v838 = vadd.f32 %v789, %v837
      %839 = vdwg.mxu0
      %840 = vmatpush.bf16.msra.mxu0 %v717
      %841 = vmatpush.bf16.msra.mxu0 %v716
      %842 = vmatpush.bf16.msra.mxu0 %v715
      %843 = vmatpush.bf16.msra.mxu0 %v714
      %844 = vmatpush.bf16.msra.mxu0 %v713
      %845 = vmatpush.bf16.msra.mxu0 %v712
      %846 = vmatpush.bf16.msra.mxu0 %v711
      %847 = vmatpush.bf16.msra.mxu0 %v710
      %848 = vmatmul.bf16.gmra.mxu0 %v523
      %v849 = vpop.f32.mrf.mxu0
      %v850 = vadd.f32 %v801, %v849
      %v851 = vpop.f32.mrf.mxu0
      %v852 = vadd.f32 %v803, %v851
      %853 = vmatmul.bf16.gmra.mxu0 %v525
      %v854 = vpop.f32.mrf.mxu0
      %v855 = vadd.f32 %v806, %v854
      %v856 = vpop.f32.mrf.mxu0
      %v857 = vadd.f32 %v808, %v856
      %858 = vmatmul.bf16.gmra.mxu0 %v527
      %v859 = vpop.f32.mrf.mxu0
      %v860 = vadd.f32 %v811, %v859
      %v861 = vpop.f32.mrf.mxu0
      %v862 = vadd.f32 %v813, %v861
      %863 = vmatmul.bf16.gmra.mxu0 %v529
      %v864 = vpop.f32.mrf.mxu0
      %v865 = vadd.f32 %v816, %v864
      %v866 = vpop.f32.mrf.mxu0
      %v867 = vadd.f32 %v818, %v866
      %868 = vmatmul.bf16.gmra.mxu0 %v531
      %v869 = vpop.f32.mrf.mxu0
      %v870 = vadd.f32 %v821, %v869
      %v871 = vpop.f32.mrf.mxu0
      %v872 = vadd.f32 %v823, %v871
      %873 = vmatmul.bf16.gmra.mxu0 %v533
      %v874 = vpop.f32.mrf.mxu0
      %v875 = vadd.f32 %v826, %v874
      %v876 = vpop.f32.mrf.mxu0
      %v877 = vadd.f32 %v828, %v876
      %878 = vmatmul.bf16.gmra.mxu0 %v535
      %v879 = vpop.f32.mrf.mxu0
      %v880 = vadd.f32 %v831, %v879
      %v881 = vpop.f32.mrf.mxu0
      %v882 = vadd.f32 %v833, %v881
      %883 = vmatmul.bf16.gmra.mxu0 %v537
      %v884 = vpop.f32.mrf.mxu0
      %v885 = vadd.f32 %v836, %v884
      %v886 = vpop.f32.mrf.mxu0
      %v887 = vadd.f32 %v838, %v886
      %888 = vdwg.mxu0
      %v889 = vpack.c.bf16 %v850, %v850
      %v890 = vpack.c.bf16 %v852, %v852
      %v891 = vpack.c.bf16 %v855, %v855
      %v892 = vpack.c.bf16 %v857, %v857
      %v893 = vpack.c.bf16 %v860, %v860
      %v894 = vpack.c.bf16 %v862, %v862
      %v895 = vpack.c.bf16 %v865, %v865
      %v896 = vpack.c.bf16 %v867, %v867
      %v897 = vpack.c.bf16 %v870, %v870
      %v898 = vpack.c.bf16 %v872, %v872
      %v899 = vpack.c.bf16 %v875, %v875
      %v900 = vpack.c.bf16 %v877, %v877
      %v901 = vpack.c.bf16 %v880, %v880
      %v902 = vpack.c.bf16 %v882, %v882
      %v903 = vpack.c.bf16 %v885, %v885
      %v904 = vpack.c.bf16 %v887, %v887
      %905 = vst [vmem:[%s180] sm:$0xf] %v889
      %906 = vst [vmem:[%s180 + $0x4] sm:$0xf] %v890
      %907 = vst [vmem:[%s180 + $0x8] sm:$0xf] %v891
      %908 = vst [vmem:[%s180 + $0xc] sm:$0xf] %v892
      %909 = vst [vmem:[%s180 + $0x10] sm:$0xf] %v893
      %910 = vst [vmem:[%s180 + $0x14] sm:$0xf] %v894
      %911 = vst [vmem:[%s180 + $0x18] sm:$0xf] %v895
      %912 = vst [vmem:[%s180 + $0x1c] sm:$0xf] %v896
      %913 = vst [vmem:[%s180 + $0x20] sm:$0xf] %v897
      %914 = vst [vmem:[%s180 + $0x24] sm:$0xf] %v898
      %915 = vst [vmem:[%s180 + $0x28] sm:$0xf] %v899
      %916 = vst [vmem:[%s180 + $0x2c] sm:$0xf] %v900
      %917 = vst [vmem:[%s180 + $0x30] sm:$0xf] %v901
      %918 = vst [vmem:[%s180 + $0x34] sm:$0xf] %v902
      %919 = vst [vmem:[%s180 + $0x38] sm:$0xf] %v903
      %920 = vst [vmem:[%s180 + $0x3c] sm:$0xf] %v904
      %v921 = vunpack.c.l.bf16 %v889
      %v922 = vunpack.c.l.bf16 %v890
      %v923 = vunpack.c.l.bf16 %v891
      %v924 = vunpack.c.l.bf16 %v892
      %v925 = vunpack.c.l.bf16 %v893
      %v926 = vunpack.c.l.bf16 %v894
      %v927 = vunpack.c.l.bf16 %v895
      %v928 = vunpack.c.l.bf16 %v896
      %v929 = vunpack.c.l.bf16 %v897
      %v930 = vunpack.c.l.bf16 %v898
      %v931 = vunpack.c.l.bf16 %v899
      %v932 = vunpack.c.l.bf16 %v900
      %v933 = vunpack.c.l.bf16 %v901
      %v934 = vunpack.c.l.bf16 %v902
      %v935 = vunpack.c.l.bf16 %v903
      %v936 = vunpack.c.l.bf16 %v904
      %s937 = smul.u32 %s21, 128
      %v938 = vlaneseq
      %v939 = vshrl.u32 %v938, 7
      %v940 = vadd.s32 %v939, 8
      %v941 = vadd.s32 %v939, 16
      %v942 = vadd.s32 %v939, 24
      %v943 = vadd.s32 %v939, 32
      %v944 = vadd.s32 %v939, 40
      %v945 = vadd.s32 %v939, 48
      %v946 = vadd.s32 %v939, 56
      %v947 = vadd.s32 %v939, 64
      %v948 = vadd.s32 %v939, 72
      %v949 = vadd.s32 %v939, 80
      %v950 = vadd.s32 %v939, 88
      %v951 = vadd.s32 %v939, 96
      %v952 = vadd.s32 %v939, 104
      %v953 = vadd.s32 %v939, 112
      %v954 = vadd.s32 %v939, 120
      %v955 = vstv %s937
      %v956 = vadd.s32 %v955, %v939
      %v957 = vadd.s32 %v955, %v940
      %v958 = vadd.s32 %v955, %v941
      %v959 = vadd.s32 %v955, %v942
      %v960 = vadd.s32 %v955, %v943
      %v961 = vadd.s32 %v955, %v944
      %v962 = vadd.s32 %v955, %v945
      %v963 = vadd.s32 %v955, %v946
      %v964 = vadd.s32 %v955, %v947
      %v965 = vadd.s32 %v955, %v948
      %v966 = vadd.s32 %v955, %v949
      %v967 = vadd.s32 %v955, %v950
      %v968 = vadd.s32 %v955, %v951
      %v969 = vadd.s32 %v955, %v952
      %v970 = vadd.s32 %v955, %v953
      %v971 = vadd.s32 %v955, %v954
      %vm972 = vcmp.lt.s32.totalorder %v956, 250
      %vm973 = vcmp.lt.s32.totalorder %v957, 250
      %vm974 = vcmp.lt.s32.totalorder %v958, 250
      %vm975 = vcmp.lt.s32.totalorder %v959, 250
      %vm976 = vcmp.lt.s32.totalorder %v960, 250
      %vm977 = vcmp.lt.s32.totalorder %v961, 250
      %vm978 = vcmp.lt.s32.totalorder %v962, 250
      %vm979 = vcmp.lt.s32.totalorder %v963, 250
      %vm980 = vcmp.lt.s32.totalorder %v964, 250
      %vm981 = vcmp.lt.s32.totalorder %v965, 250
      %vm982 = vcmp.lt.s32.totalorder %v966, 250
      %vm983 = vcmp.lt.s32.totalorder %v967, 250
      %vm984 = vcmp.lt.s32.totalorder %v968, 250
      %vm985 = vcmp.lt.s32.totalorder %v969, 250
      %vm986 = vcmp.lt.s32.totalorder %v970, 250
      %vm987 = vcmp.lt.s32.totalorder %v971, 250
      %v988 = vsel %vm972, 1, 0
      %v989 = vsel %vm973, 1, 0
      %v990 = vsel %vm974, 1, 0
      %v991 = vsel %vm975, 1, 0
      %v992 = vsel %vm976, 1, 0
      %v993 = vsel %vm977, 1, 0
      %v994 = vsel %vm978, 1, 0
      %v995 = vsel %vm979, 1, 0
      %v996 = vsel %vm980, 1, 0
      %v997 = vsel %vm981, 1, 0
      %v998 = vsel %vm982, 1, 0
      %v999 = vsel %vm983, 1, 0
      %v1000 = vsel %vm984, 1, 0
      %v1001 = vsel %vm985, 1, 0
      %v1002 = vsel %vm986, 1, 0
      %v1003 = vsel %vm987, 1, 0
      %vm1004 = vcmp.eq.s32.totalorder %v988, 1
      %vm1005 = vcmp.eq.s32.totalorder %v989, 1
      %vm1006 = vcmp.eq.s32.totalorder %v990, 1
      %vm1007 = vcmp.eq.s32.totalorder %v991, 1
      %vm1008 = vcmp.eq.s32.totalorder %v992, 1
      %vm1009 = vcmp.eq.s32.totalorder %v993, 1
      %vm1010 = vcmp.eq.s32.totalorder %v994, 1
      %vm1011 = vcmp.eq.s32.totalorder %v995, 1
      %vm1012 = vcmp.eq.s32.totalorder %v996, 1
      %vm1013 = vcmp.eq.s32.totalorder %v997, 1
      %vm1014 = vcmp.eq.s32.totalorder %v998, 1
      %vm1015 = vcmp.eq.s32.totalorder %v999, 1
      %vm1016 = vcmp.eq.s32.totalorder %v1000, 1
      %vm1017 = vcmp.eq.s32.totalorder %v1001, 1
      %vm1018 = vcmp.eq.s32.totalorder %v1002, 1
      %vm1019 = vcmp.eq.s32.totalorder %v1003, 1
      %v1020 = vsel %vm1004, %v921, 0.0
      %v1021 = vsel %vm1005, %v922, 0.0
      %v1022 = vsel %vm1006, %v923, 0.0
      %v1023 = vsel %vm1007, %v924, 0.0
      %v1024 = vsel %vm1008, %v925, 0.0
      %v1025 = vsel %vm1009, %v926, 0.0
      %v1026 = vsel %vm1010, %v927, 0.0
      %v1027 = vsel %vm1011, %v928, 0.0
      %v1028 = vsel %vm1012, %v929, 0.0
      %v1029 = vsel %vm1013, %v930, 0.0
      %v1030 = vsel %vm1014, %v931, 0.0
      %v1031 = vsel %vm1015, %v932, 0.0
      %v1032 = vsel %vm1016, %v933, 0.0
      %v1033 = vsel %vm1017, %v934, 0.0
      %v1034 = vsel %vm1018, %v935, 0.0
      %v1035 = vsel %vm1019, %v936, 0.0
      %v1036 = vadd.f32 %v1020, %v1021
      %v1037 = vadd.f32 %v1036, %v1022
      %v1038 = vadd.f32 %v1037, %v1023
      %v1039 = vadd.f32 %v1038, %v1024
      %v1040 = vadd.f32 %v1039, %v1025
      %v1041 = vadd.f32 %v1040, %v1026
      %v1042 = vadd.f32 %v1041, %v1027
      %v1043 = vadd.f32 %v1042, %v1028
      %v1044 = vadd.f32 %v1043, %v1029
      %v1045 = vadd.f32 %v1044, %v1030
      %v1046 = vadd.f32 %v1045, %v1031
      %v1047 = vadd.f32 %v1046, %v1032
      %v1048 = vadd.f32 %v1047, %v1033
      %v1049 = vadd.f32 %v1048, %v1034
      %v1050 = vadd.f32 %v1049, %v1035
      %v1051 = vrot.slane %v1050, 4
      %v1052 = vadd.f32 %v1050, %v1051
      %v1053 = vrot.slane %v1052, 2
      %v1054 = vadd.f32 %v1052, %v1053
      %v1055 = vrot.slane %v1054, 1
      %v1056 = vadd.f32 %v1054, %v1055
      %v1057 = vmul.f32 %v1020, %v1020
      %v1058 = vmul.f32 %v1021, %v1021
      %v1059 = vmul.f32 %v1022, %v1022
      %v1060 = vmul.f32 %v1023, %v1023
      %v1061 = vmul.f32 %v1024, %v1024
      %v1062 = vmul.f32 %v1025, %v1025
      %v1063 = vmul.f32 %v1026, %v1026
      %v1064 = vmul.f32 %v1027, %v1027
      %v1065 = vmul.f32 %v1028, %v1028
      %v1066 = vmul.f32 %v1029, %v1029
      %v1067 = vmul.f32 %v1030, %v1030
      %v1068 = vmul.f32 %v1031, %v1031
      %v1069 = vmul.f32 %v1032, %v1032
      %v1070 = vmul.f32 %v1033, %v1033
      %v1071 = vmul.f32 %v1034, %v1034
      %v1072 = vmul.f32 %v1035, %v1035
      %v1073 = vadd.f32 %v1057, %v1058
      %v1074 = vadd.f32 %v1073, %v1059
      %v1075 = vadd.f32 %v1074, %v1060
      %v1076 = vadd.f32 %v1075, %v1061
      %v1077 = vadd.f32 %v1076, %v1062
      %v1078 = vadd.f32 %v1077, %v1063
      %v1079 = vadd.f32 %v1078, %v1064
      %v1080 = vadd.f32 %v1079, %v1065
      %v1081 = vadd.f32 %v1080, %v1066
      %v1082 = vadd.f32 %v1081, %v1067
      %v1083 = vadd.f32 %v1082, %v1068
      %v1084 = vadd.f32 %v1083, %v1069
      %v1085 = vadd.f32 %v1084, %v1070
      %v1086 = vadd.f32 %v1085, %v1071
      %v1087 = vadd.f32 %v1086, %v1072
      %v1088 = vrot.slane %v1087, 4
      %v1089 = vadd.f32 %v1087, %v1088
      %v1090 = vrot.slane %v1089, 2
      %v1091 = vadd.f32 %v1089, %v1090
      %v1092 = vrot.slane %v1091, 1
      %v1093 = vadd.f32 %v1091, %v1092
      %vm1094 = vcmask 1040384
      %v1095 = vsel %vm1094, %v1056, %v1093
      %v1096 = vld [vmem:[%s185] sm:$0x3]
      %v1097 = vadd.f32 %v1096, %v1095
      %1098 = vst [vmem:[%s185] sm:$0x3] %v1097
      %s1099 = smul.u32 16, %s21
      %p1100 = scmp.lt.s32.totalorder %s20, 1
      %s1101 = scalar_select %p1100, %s20, 1
      %p1102 = scmp.lt.s32.totalorder %s1099, 31
      %s1103 = scalar_select %p1102, %s1099, 31
      %s1104 = smul.addr %s1101, 32
      %s1105 = sadd.s32 %s1103, %s1104
      %s1106 = smul.addr %s1105, 4
      %s1107 = scalar_lea.vmem %s3, %s1106
      %p1108 = scmp.lt.s32.totalorder %s20, 1
      %s1109 = scalar_select %p1108, %s20, 1
      %s1110 = smul.addr %s1109, 2
      %s1111 = scalar_lea.vmem %s4, %s1110
      // Predicated region
      $region81: #{_lambda_.6} parent=27 // pred_check
        %p1112 = pneg %p90
      $region82: #{_lambda_.6} parent=27 // pred_check_branch
        %1114 = sbr.rel (%p1112) target = $region84
      $region83: #{_lambda_.6} parent=27 // pred_region
        %s1115 = smul.u32 16, %s21
      $region84: #{_lambda_.6} parent=27 // pred_fallthru
        _
      // Predicated region
      $region85: #{_lambda_.6} parent=27 // pred_check
        %p1116 = pneg %p116
      $region86: #{_lambda_.6} parent=27 // pred_check_branch
        %1118 = sbr.rel (%p1116) target = $region88
      $region87: #{_lambda_.6} parent=27 // pred_region
        _
      $region88: #{_lambda_.6} parent=27 // pred_fallthru
        _
    $region28: #{_lambda_.6} parent=5 // pred_fallthru
      _
    %p1119 = scmp.le.s32.totalorder 2, %s11
    // Predicated region
    $region89: #{_lambda_.6} parent=5 // pred_check
      %p1120 = pneg %p1119
    $region90: #{_lambda_.6} parent=5 // pred_check_branch
      %1122 = sbr.rel (%p1120) target = $region92
    $region91: #{_lambda_.6} parent=5 // pred_region
      %s1123 = ssub.s32 %s11, 2
      // Predicated region
      $region93: #{_lambda_.6} parent=91 // pred_check
        %p1124 = pneg %p96
      $region94: #{_lambda_.6} parent=91 // pred_check_branch
        %1126 = sbr.rel (%p1124) target = $region96
      $region95: #{_lambda_.6} parent=91 // pred_region
        %s1127 = smul.u32 16, %s23
        %p1128 = scmp.lt.s32.totalorder %s22, 1
        %s1129 = scalar_select %p1128, %s22, 1
        %p1130 = scmp.lt.s32.totalorder %s1127, 31
        %s1131 = scalar_select %p1130, %s1127, 31
        %s1132 = smul.addr %s1129, 32
        %s1133 = sadd.s32 %s1131, %s1132
        %s1134 = smul.addr %s1133, 4
        %s1135 = scalar_lea.vmem %s3, %s1134
      $region96: #{_lambda_.6} parent=91 // pred_fallthru
        _
      // Predicated region
      $region97: #{_lambda_.6} parent=91 // pred_check
        %p1136 = pneg %p122
      $region98: #{_lambda_.6} parent=91 // pred_check_branch
        %1138 = sbr.rel (%p1136) target = $region100
      $region99: #{_lambda_.6} parent=91 // pred_region
        %p1139 = scmp.lt.s32.totalorder %s22, 1
        %s1140 = scalar_select %p1139, %s22, 1
        %s1141 = smul.addr %s1140, 2
        %s1142 = scalar_lea.vmem %s4, %s1141
      $region100: #{_lambda_.6} parent=91 // pred_fallthru
        _
    $region92: #{_lambda_.6} parent=5 // pred_fallthru
      _
  $region6: #{_lambda_.6} parent=0 // loop_footer
    %s15 = sadd.s32 1, %s11
  $region7: #{_lambda_.6} parent=0 // loop_footer_branch
    %10 = sbr.rel target = $region3
  $region8: #{_lambda_.6} parent=0 // loop_exit
    _
  %1143 = vsyncmov [#allocation3]
  %s1144 = vpop.sfrf %1143
  %p1145 = scmp.eq.s32.totalorder %s1144, 0
  %p1146 = pneg %p1145
  %1148 = shalt.err (%p1146)
  %s1149 = scalar_lea.sflag [#allocation3], 1
  %1150 = vsyncmov %s1149
  %s1151 = vpop.sfrf %1150
  %p1152 = scmp.eq.s32.totalorder %s1151, 0
  %p1153 = pneg %p1152
  %1155 = shalt.err (%p1153)

// kernel: _lambda_.9
$region0: #{_lambda_.9}
  #allocation0 [shape = 'u32[]', space=smem, size = 0x4, offset = 0x4, fixed_abs, tag = 'smem constant byte address 0x4 - core index']
  #allocation1 [shape = 'u32[72,128]{1,0:T(1,128)}', space=vmem, size = 0x9000, scoped, tag = 'internal scratch']
  #allocation2 [shape = 'f32[2,132,128]{2,1,0:T(8,128)}', space=vmem, size = 0x22000, scoped, tag = 'scratch operand']
  #allocation3 [shape = 's32[2]{0}', space=sflag, size = 0x8, scoped, tag = 'scratch operand']
  #allocation4 [shape = 's32[]', space=sflag, size = 0x4, offset = 0, fixed_abs, tag = 'sflag constant byte address 0x0 - dummy sync flag']
  #allocation5 [shape = 's32[]', space=sflag, size = 0x4, offset = 0, fixed_abs, tag = 'sflag constant byte address 0x0 - dummy sync flag']
  %s0 = inlined_call_operand.vmem [shape: f32[2,512,128], index: 0, kind: input, shape index: {}]
  %s1 = inlined_call_operand.vmem [shape: bf16[384,128], index: 1, kind: input, shape index: {}]
  %s2 = inlined_call_operand.vmem [shape: f32[1,128], index: 2, kind: input, shape index: {}]
  %s3 = inlined_call_operand.vmem [shape: bf16[2,256,128], index: 3, kind: output, shape index: {0}]
  %s4 = inlined_call_operand.vmem [shape: f32[2,2,128], index: 4, kind: output, shape index: {1}]
  %5 = xla_tuple %s3, %s4
  %s6 = sld [smem:[#allocation0]]
  $region101: #{_lambda_.9} parent=0
    _
  %s8 = ssub.s32 1, %s6
  %s9 = scalar_select 0, %s8, %s6
  loop: start=0, step=1, limit=6
  $region2: #{_lambda_.9} parent=0 // loop_pre_header
    _
  $region3: #{_lambda_.9} parent=0 // loop_header
    %s11 = sphi 0, %s15
    %p12 = scmp.ge.s32.totalorder %s11, 6
    %s18 = sphi 0, %s30
    %s19 = sphi 0, %s26
    %s20 = sphi 0, %s18
    %s21 = sphi 0, %s19
    %s22 = sphi 0, %s20
    %s23 = sphi 0, %s21
    %s31 = sphi 0, %s31
    %s33 = sphi 0, %s31
    %s34 = sphi 0, %s33
    %s48 = sphi 0, %s34
    %s52 = sphi 0, %s52
    %s54 = sphi 0, %s52
    %s55 = sphi 0, %s54
    %s69 = sphi 0, %s55
    %s77 = sphi 0, %s79
    %s80 = sphi 0, %s77
    %s81 = sphi 0, %s80
    %s97 = sphi 0, %s81
    %s103 = sphi 0, %s105
    %s106 = sphi 0, %s103
    %s107 = sphi 0, %s106
    %s123 = sphi 0, %s107
  $region4: #{_lambda_.9} parent=0 // loop_header_branch
    %14 = sbr.rel (%p12) target = $region8
  $region5: #{_lambda_.9} parent=0 // loop_body
    %s16 = ssub.s32 %s11, 1
    %s17 = ssub.s32 %s11, 2
    %s24 = sadd.s32 1, %s19
    %p25 = scmp.ge.s32.totalorder %s24, 2
    %s26 = scalar_select %p25, 0, %s24
    %s27 = sadd.s32 1, %s18
    %s28 = scalar_select %p25, %s27, %s18
    %p29 = scmp.ge.s32.totalorder %s28, 2
    %s30 = scalar_select %p29, 0, %s28
    %s32 = sadd.s32 %s31, 1
    %p35 = scmp.eq.s32.totalorder %s11, 3
    %p36 = scmp.ne.s32.totalorder %s31, %s33
    %p37 = scmp.eq.s32.totalorder %s11, 0
    %p38 = por %p36, %p37
    %p39 = scmp.ne.s32.totalorder %s31, %s33
    %p40 = scmp.eq.s32.totalorder %s16, 3
    %p41 = por %p39, %p40
    %p42 = scmp.ne.s32.totalorder %s33, %s34
    %p43 = scmp.eq.s32.totalorder %s16, 0
    %p44 = por %p42, %p43
    %p45 = scmp.ne.s32.totalorder %s33, %s34
    %p46 = scmp.eq.s32.totalorder %s17, 3
    %p47 = por %p45, %p46
    %p49 = scmp.ne.s32.totalorder %s34, %s48
    %p50 = scmp.eq.s32.totalorder %s17, 0
    %p51 = por %p49, %p50
    %s53 = sadd.s32 %s52, 1
    %p56 = scmp.eq.s32.totalorder %s11, 3
    %p57 = scmp.ne.s32.totalorder %s52, %s54
    %p58 = scmp.eq.s32.totalorder %s11, 0
    %p59 = por %p57, %p58
    %p60 = scmp.ne.s32.totalorder %s52, %s54
    %p61 = scmp.eq.s32.totalorder %s16, 3
    %p62 = por %p60, %p61
    %p63 = scmp.ne.s32.totalorder %s54, %s55
    %p64 = scmp.eq.s32.totalorder %s16, 0
    %p65 = por %p63, %p64
    %p66 = scmp.ne.s32.totalorder %s54, %s55
    %p67 = scmp.eq.s32.totalorder %s17, 3
    %p68 = por %p66, %p67
    %p70 = scmp.ne.s32.totalorder %s55, %s69
    %p71 = scmp.eq.s32.totalorder %s17, 0
    %p72 = por %p70, %p71
    %s73 = ssub.s32 %s18, %s30
    %s74 = ssub.s32 %s19, %s26
    %s75 = sor.u32 %s73, %s74
    %p76 = scmp.eq.s32.totalorder %s75, 0
    %s78 = sadd.s32 %s77, 1
    %s79 = scalar_select %p76, %s77, %s78
    %p82 = pneg %p76
    %p83 = scmp.eq.s32.totalorder %s11, 3
    %p84 = por %p82, %p83
    %p85 = scmp.ne.s32.totalorder %s77, %s80
    %p86 = scmp.eq.s32.totalorder %s11, 0
    %p87 = por %p85, %p86
    %p88 = scmp.ne.s32.totalorder %s77, %s80
    %p89 = scmp.eq.s32.totalorder %s16, 3
    %p90 = por %p88, %p89
    %p91 = scmp.ne.s32.totalorder %s80, %s81
    %p92 = scmp.eq.s32.totalorder %s16, 0
    %p93 = por %p91, %p92
    %p94 = scmp.ne.s32.totalorder %s80, %s81
    %p95 = scmp.eq.s32.totalorder %s17, 3
    %p96 = por %p94, %p95
    %p98 = scmp.ne.s32.totalorder %s81, %s97
    %p99 = scmp.eq.s32.totalorder %s17, 0
    %p100 = por %p98, %p99
    %s101 = ssub.s32 %s18, %s30
    %p102 = scmp.eq.s32.totalorder %s101, 0
    %s104 = sadd.s32 %s103, 1
    %s105 = scalar_select %p102, %s103, %s104
    %p108 = pneg %p102
    %p109 = scmp.eq.s32.totalorder %s11, 3
    %p110 = por %p108, %p109
    %p111 = scmp.ne.s32.totalorder %s103, %s106
    %p112 = scmp.eq.s32.totalorder %s11, 0
    %p113 = por %p111, %p112
    %p114 = scmp.ne.s32.totalorder %s103, %s106
    %p115 = scmp.eq.s32.totalorder %s16, 3
    %p116 = por %p114, %p115
    %p117 = scmp.ne.s32.totalorder %s106, %s107
    %p118 = scmp.eq.s32.totalorder %s16, 0
    %p119 = por %p117, %p118
    %p120 = scmp.ne.s32.totalorder %s106, %s107
    %p121 = scmp.eq.s32.totalorder %s17, 3
    %p122 = por %p120, %p121
    %p124 = scmp.ne.s32.totalorder %s107, %s123
    %p125 = scmp.eq.s32.totalorder %s17, 0
    %p126 = por %p124, %p125
    %p127 = scmp.le.s32.totalorder 1, %s11
    %p128 = scmp.lt.s32.totalorder %s11, 5
    %p129 = pnand %p127, %p128
    %p130 = pneg %p129
    // Predicated region
    $region9: #{_lambda_.9} parent=5 // pred_check
      _
    $region10: #{_lambda_.9} parent=5 // pred_check_branch
      %132 = sbr.rel (%p129) target = $region12
    $region11: #{_lambda_.9} parent=5 // pred_region
      %s133 = ssub.s32 %s11, 1
      // Predicated region
      $region13: #{_lambda_.9} parent=11 // pred_check
        %p134 = pneg %p44
      $region14: #{_lambda_.9} parent=11 // pred_check_branch
        %136 = sbr.rel (%p134) target = $region16
      $region15: #{_lambda_.9} parent=11 // pred_region
        _
      $region16: #{_lambda_.9} parent=11 // pred_fallthru
        _
      // Predicated region
      $region17: #{_lambda_.9} parent=11 // pred_check
        %p137 = pneg %p65
      $region18: #{_lambda_.9} parent=11 // pred_check_branch
        %139 = sbr.rel (%p137) target = $region20
      $region19: #{_lambda_.9} parent=11 // pred_region
        _
      $region20: #{_lambda_.9} parent=11 // pred_fallthru
        _
    $region12: #{_lambda_.9} parent=5 // pred_fallthru
      _
    %p140 = scmp.lt.s32.totalorder %s11, 4
    // Predicated region
    $region21: #{_lambda_.9} parent=5 // pred_check
      %p141 = pneg %p140
    $region22: #{_lambda_.9} parent=5 // pred_check_branch
      %143 = sbr.rel (%p141) target = $region24
    $region23: #{_lambda_.9} parent=5 // pred_region
      _
    $region24: #{_lambda_.9} parent=5 // pred_fallthru
      _
    %p144 = scmp.le.s32.totalorder 1, %s11
    %p145 = scmp.lt.s32.totalorder %s11, 5
    %p146 = pnand %p144, %p145
    %p147 = pneg %p146
    // Predicated region
    $region25: #{_lambda_.9} parent=5 // pred_check
      _
    $region26: #{_lambda_.9} parent=5 // pred_check_branch
      %149 = sbr.rel (%p146) target = $region28
    $region27: #{_lambda_.9} parent=5 // pred_region
      %s150 = ssub.s32 %s11, 1
      %p151 = pneg %p44
      %p152 = pneg %p41
      %p153 = pneg %p65
      %p154 = pneg %p62
      %p155 = pneg %p93
      %p156 = pneg %p90
      %s157 = smul.u32 16, %s21
      %p158 = scmp.lt.s32.totalorder %s20, 1
      %s159 = scalar_select %p158, %s20, 1
      %p160 = scmp.lt.s32.totalorder %s157, 31
      %s161 = scalar_select %p160, %s157, 31
      %s162 = smul.addr %s159, 32
      %s163 = sadd.s32 %s161, %s162
      %s164 = smul.addr %s163, 4
      %s165 = scalar_lea.vmem %s3, %s164
      %p166 = pneg %p119
      %p167 = pneg %p116
      %p168 = scmp.lt.s32.totalorder %s20, 1
      %s169 = scalar_select %p168, %s20, 1
      %s170 = smul.addr %s169, 2
      %s171 = scalar_lea.vmem %s4, %s170
      %s172 = smul.u32 16, %s21
      %p173 = scmp.lt.s32.totalorder %s20, 1
      %s174 = scalar_select %p173, %s20, 1
      %p175 = scmp.lt.s32.totalorder %s172, 31
      %s176 = scalar_select %p175, %s172, 31
      %s177 = smul.addr %s174, 32
      %s178 = sadd.s32 %s176, %s177
      %s179 = smul.addr %s178, 4
      %s180 = scalar_lea.vmem %s3, %s179
      %s181 = smul.u32 16, %s21
      %p182 = scmp.lt.s32.totalorder %s20, 1
      %s183 = scalar_select %p182, %s20, 1
      %s184 = smul.addr %s183, 2
      %s185 = scalar_lea.vmem %s4, %s184
      %p186 = scmp.eq.s32.totalorder %s21, 0
      // Predicated region
      $region29: #{_lambda_.9} parent=27 // pred_check
        %p187 = pneg %p186
      $region30: #{_lambda_.9} parent=27 // pred_check_branch
        %189 = sbr.rel (%p187) target = $region32
      $region31: #{_lambda_.9} parent=27 // pred_region
        %s190 = smul.u32 %s20, 512
        %s191 = sadd.s32 126, %s190
        %s192 = scalar_lea.vmem %s0, %s191
        // Predicated region
        $region33: #{_lambda_.9} parent=31 // pred_check
          _
        $region34: #{_lambda_.9} parent=31 // pred_check_branch
          %194 = sbr.rel (0) target = $region36
        $region35: #{_lambda_.9} parent=31 // pred_region
          %s195 = scalar_lea.vmem %s192, 128
          %s196 = scalar_lea.vmem [#allocation2], 128
          loop: start=0, step=1, limit=1
          $region37: #{_lambda_.9} parent=35 // loop_pre_header
            _
          $region38: #{_lambda_.9} parent=35 // loop_header
            %s198 = sphi 0, %s202
            %p199 = scmp.ge.s32.totalorder %s198, 1
            %s203 = sphi %s192, %s192
            %s204 = sphi [#allocation2], [#allocation2]
          $region39: #{_lambda_.9} parent=35 // loop_header_branch
            %201 = sbr.rel (%p199) target = $region43
          $region40: #{_lambda_.9} parent=35 // loop_body
            %v205 = vld [vmem:[%s203] sm:$0xff]
            %206 = vst [vmem:[%s204] sm:$0xff] %v205
            %v207 = vld [vmem:[%s203 + $0x8] sm:$0xff]
            %208 = vst [vmem:[%s204 + $0x8] sm:$0xff] %v207
            %v209 = vld [vmem:[%s203 + $0x10] sm:$0xff]
            %210 = vst [vmem:[%s204 + $0x10] sm:$0xff] %v209
            %v211 = vld [vmem:[%s203 + $0x18] sm:$0xff]
            %212 = vst [vmem:[%s204 + $0x18] sm:$0xff] %v211
            %v213 = vld [vmem:[%s203 + $0x20] sm:$0xff]
            %214 = vst [vmem:[%s204 + $0x20] sm:$0xff] %v213
            %v215 = vld [vmem:[%s203 + $0x28] sm:$0xff]
            %216 = vst [vmem:[%s204 + $0x28] sm:$0xff] %v215
            %v217 = vld [vmem:[%s203 + $0x30] sm:$0xff]
            %218 = vst [vmem:[%s204 + $0x30] sm:$0xff] %v217
            %v219 = vld [vmem:[%s203 + $0x38] sm:$0xff]
            %220 = vst [vmem:[%s204 + $0x38] sm:$0xff] %v219
            %v221 = vld [vmem:[%s203 + $0x40] sm:$0xff]
            %222 = vst [vmem:[%s204 + $0x40] sm:$0xff] %v221
            %v223 = vld [vmem:[%s203 + $0x48] sm:$0xff]
            %224 = vst [vmem:[%s204 + $0x48] sm:$0xff] %v223
            %v225 = vld [vmem:[%s203 + $0x50] sm:$0xff]
            %226 = vst [vmem:[%s204 + $0x50] sm:$0xff] %v225
            %v227 = vld [vmem:[%s203 + $0x58] sm:$0xff]
            %228 = vst [vmem:[%s204 + $0x58] sm:$0xff] %v227
            %v229 = vld [vmem:[%s203 + $0x60] sm:$0xff]
            %230 = vst [vmem:[%s204 + $0x60] sm:$0xff] %v229
            %v231 = vld [vmem:[%s203 + $0x68] sm:$0xff]
            %232 = vst [vmem:[%s204 + $0x68] sm:$0xff] %v231
            %v233 = vld [vmem:[%s203 + $0x70] sm:$0xff]
            %234 = vst [vmem:[%s204 + $0x70] sm:$0xff] %v233
            %v235 = vld [vmem:[%s203 + $0x78] sm:$0xff]
            %236 = vst [vmem:[%s204 + $0x78] sm:$0xff] %v235
          $region41: #{_lambda_.9} parent=35 // loop_footer
            %s202 = sadd.s32 1, %s198
          $region42: #{_lambda_.9} parent=35 // loop_footer_branch
            %197 = sbr.rel target = $region38
          $region43: #{_lambda_.9} parent=35 // loop_exit
            _
          %s238 = ssub.s32 16, 1
          loop: start=0, step=1, limit=1
          $region44: #{_lambda_.9} parent=35 // loop_pre_header
            _
          $region45: #{_lambda_.9} parent=35 // loop_header
            %s240 = sphi 0, %s244
            %p241 = scmp.ge.s32.totalorder %s240, 1
            %s245 = sphi %s195, %s195
            %s246 = sphi %s196, %s196
          $region46: #{_lambda_.9} parent=35 // loop_header_branch
            %243 = sbr.rel (%p241) target = $region50
          $region47: #{_lambda_.9} parent=35 // loop_body
            %v247 = vld [vmem:[%s245] sm:%s238]
            %248 = vst [vmem:[%s246] sm:%s238] %v247
          $region48: #{_lambda_.9} parent=35 // loop_footer
            %s244 = sadd.s32 1, %s240
          $region49: #{_lambda_.9} parent=35 // loop_footer_branch
            %239 = sbr.rel target = $region45
          $region50: #{_lambda_.9} parent=35 // loop_exit
            _
        $region36: #{_lambda_.9} parent=31 // pred_fallthru
          _
        // Predicated region
        $region51: #{_lambda_.9} parent=31 // pred_check
          _
        $region52: #{_lambda_.9} parent=31 // pred_check_branch
          %251 = sbr.rel (0) target = $region54
        $region53: #{_lambda_.9} parent=31 // pred_region
          %252 = vsyncadd [#allocation3], 2112
        $region54: #{_lambda_.9} parent=31 // pred_fallthru
          _
        %253 = vst [vmem:[%s185] sm:$0x3] 0.0
      $region32: #{_lambda_.9} parent=27 // pred_fallthru
        _
      %p254 = scmp.lt.s32.totalorder %s21, 0
      %s255 = ssub.s32 0, %s21
      %s256 = scalar_select %p254, %s255, %s21
      %s257 = sand.u32 %s256, 1
      %s258 = ssub.s32 0, %s257
      %s259 = scalar_select %p254, %s258, %s257
      %p260 = scmp.ne.s32.totalorder %s259, 0
      %p261 = scmp.lt.s32.totalorder %s259, 0
      %p262 = pnand %p261, %p260
      %p263 = pneg %p262
      %s264 = sadd.s32 %s259, 2
      %s265 = scalar_select %p263, %s264, %s259
      %s266 = sadd.s32 %s21, 1
      %p267 = scmp.lt.s32.totalorder %s266, 2
      // Predicated region
      $region55: #{_lambda_.9} parent=27 // pred_check
        %p268 = pneg %p267
      $region56: #{_lambda_.9} parent=27 // pred_check_branch
        %270 = sbr.rel (%p268) target = $region58
      $region57: #{_lambda_.9} parent=27 // pred_region
        %p271 = scmp.lt.s32.totalorder %s266, 0
        %s272 = ssub.s32 0, %s266
        %s273 = scalar_select %p271, %s272, %s266
        %s274 = sand.u32 %s273, 1
        %s275 = ssub.s32 0, %s274
        %s276 = scalar_select %p271, %s275, %s274
        %p277 = scmp.ne.s32.totalorder %s276, 0
        %p278 = scmp.lt.s32.totalorder %s276, 0
        %p279 = pnand %p278, %p277
        %p280 = pneg %p279
        %s281 = sadd.s32 %s276, 2
        %s282 = scalar_select %p280, %s281, %s276
        %s283 = sadd.s32 %s21, 2
        %s284 = smul.u32 %s283, 128
        %s285 = ssub.s32 %s284, 2
        %s286 = smul.u32 %s20, 512
        %s287 = sadd.s32 %s285, %s286
        %s288 = scalar_lea.vmem %s0, %s287
        %s289 = smul.u32 %s282, 136
        %s290 = scalar_lea.vmem [#allocation2], %s289
        %s291 = scalar_lea.sflag [#allocation3], %s282
        // Predicated region
        $region59: #{_lambda_.9} parent=57 // pred_check
          _
        $region60: #{_lambda_.9} parent=57 // pred_check_branch
          %293 = sbr.rel (0) target = $region62
        $region61: #{_lambda_.9} parent=57 // pred_region
          %s294 = scalar_lea.vmem %s288, 128
          %s295 = scalar_lea.vmem %s290, 128 [#allocation2]
          loop: start=0, step=1, limit=1
          $region63: #{_lambda_.9} parent=61 // loop_pre_header
            _
          $region64: #{_lambda_.9} parent=61 // loop_header
            %s297 = sphi 0, %s301
            %p298 = scmp.ge.s32.totalorder %s297, 1
            %s302 = sphi %s288, %s288
            %s303 = sphi %s290, %s290
          $region65: #{_lambda_.9} parent=61 // loop_header_branch
            %300 = sbr.rel (%p298) target = $region69
          $region66: #{_lambda_.9} parent=61 // loop_body
            %v304 = vld [vmem:[%s302] sm:$0xff]
            %305 = vst [vmem:[%s303] sm:$0xff] %v304
            %v306 = vld [vmem:[%s302 + $0x8] sm:$0xff]
            %307 = vst [vmem:[%s303 + $0x8] sm:$0xff] %v306
            %v308 = vld [vmem:[%s302 + $0x10] sm:$0xff]
            %309 = vst [vmem:[%s303 + $0x10] sm:$0xff] %v308
            %v310 = vld [vmem:[%s302 + $0x18] sm:$0xff]
            %311 = vst [vmem:[%s303 + $0x18] sm:$0xff] %v310
            %v312 = vld [vmem:[%s302 + $0x20] sm:$0xff]
            %313 = vst [vmem:[%s303 + $0x20] sm:$0xff] %v312
            %v314 = vld [vmem:[%s302 + $0x28] sm:$0xff]
            %315 = vst [vmem:[%s303 + $0x28] sm:$0xff] %v314
            %v316 = vld [vmem:[%s302 + $0x30] sm:$0xff]
            %317 = vst [vmem:[%s303 + $0x30] sm:$0xff] %v316
            %v318 = vld [vmem:[%s302 + $0x38] sm:$0xff]
            %319 = vst [vmem:[%s303 + $0x38] sm:$0xff] %v318
            %v320 = vld [vmem:[%s302 + $0x40] sm:$0xff]
            %321 = vst [vmem:[%s303 + $0x40] sm:$0xff] %v320
            %v322 = vld [vmem:[%s302 + $0x48] sm:$0xff]
            %323 = vst [vmem:[%s303 + $0x48] sm:$0xff] %v322
            %v324 = vld [vmem:[%s302 + $0x50] sm:$0xff]
            %325 = vst [vmem:[%s303 + $0x50] sm:$0xff] %v324
            %v326 = vld [vmem:[%s302 + $0x58] sm:$0xff]
            %327 = vst [vmem:[%s303 + $0x58] sm:$0xff] %v326
            %v328 = vld [vmem:[%s302 + $0x60] sm:$0xff]
            %329 = vst [vmem:[%s303 + $0x60] sm:$0xff] %v328
            %v330 = vld [vmem:[%s302 + $0x68] sm:$0xff]
            %331 = vst [vmem:[%s303 + $0x68] sm:$0xff] %v330
            %v332 = vld [vmem:[%s302 + $0x70] sm:$0xff]
            %333 = vst [vmem:[%s303 + $0x70] sm:$0xff] %v332
            %v334 = vld [vmem:[%s302 + $0x78] sm:$0xff]
            %335 = vst [vmem:[%s303 + $0x78] sm:$0xff] %v334
          $region67: #{_lambda_.9} parent=61 // loop_footer
            %s301 = sadd.s32 1, %s297
          $region68: #{_lambda_.9} parent=61 // loop_footer_branch
            %296 = sbr.rel target = $region64
          $region69: #{_lambda_.9} parent=61 // loop_exit
            _
          %s337 = ssub.s32 16, 1
          loop: start=0, step=1, limit=1
          $region70: #{_lambda_.9} parent=61 // loop_pre_header
            _
          $region71: #{_lambda_.9} parent=61 // loop_header
            %s339 = sphi 0, %s343
            %p340 = scmp.ge.s32.totalorder %s339, 1
            %s344 = sphi %s294, %s294
            %s345 = sphi %s295, %s295
          $region72: #{_lambda_.9} parent=61 // loop_header_branch
            %342 = sbr.rel (%p340) target = $region76
          $region73: #{_lambda_.9} parent=61 // loop_body
            %v346 = vld [vmem:[%s344] sm:%s337]
            %347 = vst [vmem:[%s345] sm:%s337] %v346
          $region74: #{_lambda_.9} parent=61 // loop_footer
            %s343 = sadd.s32 1, %s339
          $region75: #{_lambda_.9} parent=61 // loop_footer_branch
            %338 = sbr.rel target = $region71
          $region76: #{_lambda_.9} parent=61 // loop_exit
            _
        $region62: #{_lambda_.9} parent=57 // pred_fallthru
          _
        // Predicated region
        $region77: #{_lambda_.9} parent=57 // pred_check
          _
        $region78: #{_lambda_.9} parent=57 // pred_check_branch
          %350 = sbr.rel (0) target = $region80
        $region79: #{_lambda_.9} parent=57 // pred_region
          %351 = vsyncadd %s291, 2112
        $region80: #{_lambda_.9} parent=57 // pred_fallthru
          _
      $region58: #{_lambda_.9} parent=27 // pred_fallthru
        _
      %s352 = smul.u32 %s265, 136
      %s353 = scalar_lea.vmem [#allocation2], %s352
      %s354 = scalar_lea.sflag [#allocation3], %s265
      %s355 = smul.u32 132, 1
      %s356 = sshll.u32 %s355, 4
      %357 = dma.done %s354, %s356
      %v358 = vld [vmem:[%s353] sm:$0xff]
      %v359 = vld [vmem:[%s353 + $0x8] sm:$0xff]
      %v360 = vld [vmem:[%s353 + $0x10] sm:$0xff]
      %v361 = vld [vmem:[%s353 + $0x18] sm:$0xff]
      %v362 = vld [vmem:[%s353 + $0x20] sm:$0xff]
      %v363 = vld [vmem:[%s353 + $0x28] sm:$0xff]
      %v364 = vld [vmem:[%s353 + $0x30] sm:$0xff]
      %v365 = vld [vmem:[%s353 + $0x38] sm:$0xff]
      %v366 = vld [vmem:[%s353 + $0x40] sm:$0xff]
      %v367 = vld [vmem:[%s353 + $0x48] sm:$0xff]
      %v368 = vld [vmem:[%s353 + $0x50] sm:$0xff]
      %v369 = vld [vmem:[%s353 + $0x58] sm:$0xff]
      %v370 = vld [vmem:[%s353 + $0x60] sm:$0xff]
      %v371 = vld [vmem:[%s353 + $0x68] sm:$0xff]
      %v372 = vld [vmem:[%s353 + $0x70] sm:$0xff]
      %v373 = vld [vmem:[%s353 + $0x78] sm:$0xff]
      %v374 = vld [vmem:[%s353 + $0x80] sm:$0xf]
      %v375 = vpack.c.bf16 %v358, %v358
      %v376 = vpack.c.bf16 %v359, %v359
      %v377 = vpack.c.bf16 %v360, %v360
      %v378 = vpack.c.bf16 %v361, %v361
      %v379 = vpack.c.bf16 %v362, %v362
      %v380 = vpack.c.bf16 %v363, %v363
      %v381 = vpack.c.bf16 %v364, %v364
      %v382 = vpack.c.bf16 %v365, %v365
      %v383 = vpack.c.bf16 %v366, %v366
      %v384 = vpack.c.bf16 %v367, %v367
      %v385 = vpack.c.bf16 %v368, %v368
      %v386 = vpack.c.bf16 %v369, %v369
      %v387 = vpack.c.bf16 %v370, %v370
      %v388 = vpack.c.bf16 %v371, %v371
      %v389 = vpack.c.bf16 %v372, %v372
      %v390 = vpack.c.bf16 %v373, %v373
      %v391 = vpack.c.bf16 %v374, %v374
      %v408 = vunpack.c.l.b16 %v375
      %v409 = vunpack.c.l.b16 %v376
      %v410 = vunpack.c.l.b16 %v377
      %v411 = vunpack.c.l.b16 %v378
      %v412 = vunpack.c.l.b16 %v379
      %v413 = vunpack.c.l.b16 %v380
      %v414 = vunpack.c.l.b16 %v381
      %v415 = vunpack.c.l.b16 %v382
      %v416 = vunpack.c.l.b16 %v383
      %v417 = vunpack.c.l.b16 %v384
      %v418 = vunpack.c.l.b16 %v385
      %v419 = vunpack.c.l.b16 %v386
      %v420 = vunpack.c.l.b16 %v387
      %v421 = vunpack.c.l.b16 %v388
      %v422 = vunpack.c.l.b16 %v389
      %v423 = vunpack.c.l.b16 %v390
      %v424 = vpack.c.b16 %v409, %v408
      %v425 = vpack.c.b16 %v411, %v410
      %v426 = vpack.c.b16 %v413, %v412
      %v427 = vpack.c.b16 %v415, %v414
      %v428 = vpack.c.b16 %v417, %v416
      %v429 = vpack.c.b16 %v419, %v418
      %v430 = vpack.c.b16 %v421, %v420
      %v431 = vpack.c.b16 %v423, %v422
      %v441 = vunpack.c.l.b16 %v391
      %v442 = vpack.c.b16 %v441, %v441
      %vm443 = vcmask 1046528
      %v444 = vrot.slane %v424, 1
      %v445 = vrot.slane %v425, 1
      %v446 = vsel %vm443, %v444, %v445
      %v447 = vrot.slane %v426, 1
      %v448 = vsel %vm443, %v445, %v447
      %v449 = vrot.slane %v427, 1
      %v450 = vsel %vm443, %v447, %v449
      %v451 = vrot.slane %v428, 1
      %v452 = vsel %vm443, %v449, %v451
      %v453 = vrot.slane %v429, 1
      %v454 = vsel %vm443, %v451, %v453
      %v455 = vrot.slane %v430, 1
      %v456 = vsel %vm443, %v453, %v455
      %v457 = vrot.slane %v431, 1
      %v458 = vsel %vm443, %v455, %v457
      %v459 = vrot.slane %v442, 1
      %v460 = vsel %vm443, %v457, %v459
      %vm469 = vcmask 1045504
      %v470 = vrot.slane %v424, 2
      %v471 = vrot.slane %v425, 2
      %v472 = vsel %vm469, %v470, %v471
      %v473 = vrot.slane %v426, 2
      %v474 = vsel %vm469, %v471, %v473
      %v475 = vrot.slane %v427, 2
      %v476 = vsel %vm469, %v473, %v475
      %v477 = vrot.slane %v428, 2
      %v478 = vsel %vm469, %v475, %v477
      %v479 = vrot.slane %v429, 2
      %v480 = vsel %vm469, %v477, %v479
      %v481 = vrot.slane %v430, 2
      %v482 = vsel %vm469, %v479, %v481
      %v483 = vrot.slane %v431, 2
      %v484 = vsel %vm469, %v481, %v483
      %v485 = vrot.slane %v442, 2
      %v486 = vsel %vm469, %v483, %v485
      %v495 = vld [vmem:[%s1] sm:$0xf]
      %v496 = vld [vmem:[%s1 + $0x4] sm:$0xf]
      %v497 = vld [vmem:[%s1 + $0x8] sm:$0xf]
      %v498 = vld [vmem:[%s1 + $0xc] sm:$0xf]
      %v499 = vld [vmem:[%s1 + $0x10] sm:$0xf]
      %v500 = vld [vmem:[%s1 + $0x14] sm:$0xf]
      %v501 = vld [vmem:[%s1 + $0x18] sm:$0xf]
      %v502 = vld [vmem:[%s1 + $0x1c] sm:$0xf]
      %v503 = vld [vmem:[%s1 + $0x20] sm:$0xf]
      %v504 = vld [vmem:[%s1 + $0x24] sm:$0xf]
      %v505 = vld [vmem:[%s1 + $0x28] sm:$0xf]
      %v506 = vld [vmem:[%s1 + $0x2c] sm:$0xf]
      %v507 = vld [vmem:[%s1 + $0x30] sm:$0xf]
      %v508 = vld [vmem:[%s1 + $0x34] sm:$0xf]
      %v509 = vld [vmem:[%s1 + $0x38] sm:$0xf]
      %v510 = vld [vmem:[%s1 + $0x3c] sm:$0xf]
      %v511 = vld [vmem:[%s1 + $0x40] sm:$0xf]
      %v512 = vld [vmem:[%s1 + $0x44] sm:$0xf]
      %v513 = vld [vmem:[%s1 + $0x48] sm:$0xf]
      %v514 = vld [vmem:[%s1 + $0x4c] sm:$0xf]
      %v515 = vld [vmem:[%s1 + $0x50] sm:$0xf]
      %v516 = vld [vmem:[%s1 + $0x54] sm:$0xf]
      %v517 = vld [vmem:[%s1 + $0x58] sm:$0xf]
      %v518 = vld [vmem:[%s1 + $0x5c] sm:$0xf]
      %v519 = vld [vmem:[%s1 + $0x60] sm:$0xf]
      %v520 = vld [vmem:[%s1 + $0x64] sm:$0xf]
      %v521 = vld [vmem:[%s1 + $0x68] sm:$0xf]
      %v522 = vld [vmem:[%s1 + $0x6c] sm:$0xf]
      %v523 = vld [vmem:[%s1 + $0x70] sm:$0xf]
      %v524 = vld [vmem:[%s1 + $0x74] sm:$0xf]
      %v525 = vld [vmem:[%s1 + $0x78] sm:$0xf]
      %v526 = vld [vmem:[%s1 + $0x7c] sm:$0xf]
      %v527 = vld [vmem:[%s1 + $0x80] sm:$0xf]
      %v528 = vld [vmem:[%s1 + $0x84] sm:$0xf]
      %v529 = vld [vmem:[%s1 + $0x88] sm:$0xf]
      %v530 = vld [vmem:[%s1 + $0x8c] sm:$0xf]
      %v531 = vld [vmem:[%s1 + $0x90] sm:$0xf]
      %v532 = vld [vmem:[%s1 + $0x94] sm:$0xf]
      %v533 = vld [vmem:[%s1 + $0x98] sm:$0xf]
      %v534 = vld [vmem:[%s1 + $0x9c] sm:$0xf]
      %v535 = vld [vmem:[%s1 + $0xa0] sm:$0xf]
      %v536 = vld [vmem:[%s1 + $0xa4] sm:$0xf]
      %v537 = vld [vmem:[%s1 + $0xa8] sm:$0xf]
      %v538 = vld [vmem:[%s1 + $0xac] sm:$0xf]
      %v539 = vld [vmem:[%s1 + $0xb0] sm:$0xf]
      %v540 = vld [vmem:[%s1 + $0xb4] sm:$0xf]
      %v541 = vld [vmem:[%s1 + $0xb8] sm:$0xf]
      %v542 = vld [vmem:[%s1 + $0xbc] sm:$0xf]
      %v543 = vld [vmem:[%s2] sm:$0x1]
      %v545 = vperm.slane %v543, 0
      %v595 = vunpack.c.l.b16 %v495
      %v596 = vunpack.c.l.b16 %v496
      %v597 = vunpack.c.l.b16 %v497
      %v598 = vunpack.c.l.b16 %v498
      %v599 = vunpack.c.l.b16 %v499
      %v600 = vunpack.c.l.b16 %v500
      %v601 = vunpack.c.l.b16 %v501
      %v602 = vunpack.c.l.b16 %v502
      %v603 = vunpack.c.l.b16 %v503
      %v604 = vunpack.c.l.b16 %v504
      %v605 = vunpack.c.l.b16 %v505
      %v606 = vunpack.c.l.b16 %v506
      %v607 = vunpack.c.l.b16 %v507
      %v608 = vunpack.c.l.b16 %v508
      %v609 = vunpack.c.l.b16 %v509
      %v610 = vunpack.c.l.b16 %v510
      %v611 = vunpack.c.l.b16 %v511
      %v612 = vunpack.c.l.b16 %v512
      %v613 = vunpack.c.l.b16 %v513
      %v614 = vunpack.c.l.b16 %v514
      %v615 = vunpack.c.l.b16 %v515
      %v616 = vunpack.c.l.b16 %v516
      %v617 = vunpack.c.l.b16 %v517
      %v618 = vunpack.c.l.b16 %v518
      %v619 = vunpack.c.l.b16 %v519
      %v620 = vunpack.c.l.b16 %v520
      %v621 = vunpack.c.l.b16 %v521
      %v622 = vunpack.c.l.b16 %v522
      %v623 = vunpack.c.l.b16 %v523
      %v624 = vunpack.c.l.b16 %v524
      %v625 = vunpack.c.l.b16 %v525
      %v626 = vunpack.c.l.b16 %v526
      %v627 = vunpack.c.l.b16 %v527
      %v628 = vunpack.c.l.b16 %v528
      %v629 = vunpack.c.l.b16 %v529
      %v630 = vunpack.c.l.b16 %v530
      %v631 = vunpack.c.l.b16 %v531
      %v632 = vunpack.c.l.b16 %v532
      %v633 = vunpack.c.l.b16 %v533
      %v634 = vunpack.c.l.b16 %v534
      %v635 = vunpack.c.l.b16 %v535
      %v636 = vunpack.c.l.b16 %v536
      %v637 = vunpack.c.l.b16 %v537
      %v638 = vunpack.c.l.b16 %v538
      %v639 = vunpack.c.l.b16 %v539
      %v640 = vunpack.c.l.b16 %v540
      %v641 = vunpack.c.l.b16 %v541
      %v642 = vunpack.c.l.b16 %v542
      %v643 = vpack.c.b16 %v596, %v595
      %v644 = vpack.c.b16 %v598, %v597
      %v645 = vpack.c.b16 %v600, %v599
      %v646 = vpack.c.b16 %v602, %v601
      %v647 = vpack.c.b16 %v604, %v603
      %v648 = vpack.c.b16 %v606, %v605
      %v649 = vpack.c.b16 %v608, %v607
      %v650 = vpack.c.b16 %v610, %v609
      %v651 = vpack.c.b16 %v612, %v611
      %v652 = vpack.c.b16 %v614, %v613
      %v653 = vpack.c.b16 %v616, %v615
      %v654 = vpack.c.b16 %v618, %v617
      %v655 = vpack.c.b16 %v620, %v619
      %v656 = vpack.c.b16 %v622, %v621
      %v657 = vpack.c.b16 %v624, %v623
      %v658 = vpack.c.b16 %v626, %v625
      %v659 = vpack.c.b16 %v628, %v627
      %v660 = vpack.c.b16 %v630, %v629
      %v661 = vpack.c.b16 %v632, %v631
      %v662 = vpack.c.b16 %v634, %v633
      %v663 = vpack.c.b16 %v636, %v635
      %v664 = vpack.c.b16 %v638, %v637
      %v665 = vpack.c.b16 %v640, %v639
      %v666 = vpack.c.b16 %v642, %v641
      %691 = vmatpush.bf16.msra.mxu0 %v650
      %692 = vmatpush.bf16.msra.mxu0 %v649
      %693 = vmatpush.bf16.msra.mxu0 %v648
      %694 = vmatpush.bf16.msra.mxu0 %v647
      %695 = vmatpush.bf16.msra.mxu0 %v646
      %696 = vmatpush.bf16.msra.mxu0 %v645
      %697 = vmatpush.bf16.msra.mxu0 %v644
      %698 = vmatpush.bf16.msra.mxu0 %v643
      %699 = vmatmul.bf16.gmra.mxu0 %v424
      %v700 = vpop.f32.mrf.mxu0
      %v701 = vadd.f32 %v545, %v700
      %v702 = vpop.f32.mrf.mxu0
      %v703 = vadd.f32 %v545, %v702
      %704 = vmatmul.bf16.gmra.mxu0 %v425
      %v705 = vpop.f32.mrf.mxu0
      %v706 = vadd.f32 %v545, %v705
      %v707 = vpop.f32.mrf.mxu0
      %v708 = vadd.f32 %v545, %v707
      %709 = vmatmul.bf16.gmra.mxu0 %v426
      %v710 = vpop.f32.mrf.mxu0
      %v711 = vadd.f32 %v545, %v710
      %v712 = vpop.f32.mrf.mxu0
      %v713 = vadd.f32 %v545, %v712
      %714 = vmatmul.bf16.gmra.mxu0 %v427
      %v715 = vpop.f32.mrf.mxu0
      %v716 = vadd.f32 %v545, %v715
      %v717 = vpop.f32.mrf.mxu0
      %v718 = vadd.f32 %v545, %v717
      %719 = vmatmul.bf16.gmra.mxu0 %v428
      %v720 = vpop.f32.mrf.mxu0
      %v721 = vadd.f32 %v545, %v720
      %v722 = vpop.f32.mrf.mxu0
      %v723 = vadd.f32 %v545, %v722
      %724 = vmatmul.bf16.gmra.mxu0 %v429
      %v725 = vpop.f32.mrf.mxu0
      %v726 = vadd.f32 %v545, %v725
      %v727 = vpop.f32.mrf.mxu0
      %v728 = vadd.f32 %v545, %v727
      %729 = vmatmul.bf16.gmra.mxu0 %v430
      %v730 = vpop.f32.mrf.mxu0
      %v731 = vadd.f32 %v545, %v730
      %v732 = vpop.f32.mrf.mxu0
      %v733 = vadd.f32 %v545, %v732
      %734 = vmatmul.bf16.gmra.mxu0 %v431
      %v735 = vpop.f32.mrf.mxu0
      %v736 = vadd.f32 %v545, %v735
      %v737 = vpop.f32.mrf.mxu0
      %v738 = vadd.f32 %v545, %v737
      %739 = vdwg.mxu0
      %740 = vmatpush.bf16.msra.mxu0 %v658
      %741 = vmatpush.bf16.msra.mxu0 %v657
      %742 = vmatpush.bf16.msra.mxu0 %v656
      %743 = vmatpush.bf16.msra.mxu0 %v655
      %744 = vmatpush.bf16.msra.mxu0 %v654
      %745 = vmatpush.bf16.msra.mxu0 %v653
      %746 = vmatpush.bf16.msra.mxu0 %v652
      %747 = vmatpush.bf16.msra.mxu0 %v651
      %748 = vmatmul.bf16.gmra.mxu0 %v446
      %v749 = vpop.f32.mrf.mxu0
      %v750 = vadd.f32 %v701, %v749
      %v751 = vpop.f32.mrf.mxu0
      %v752 = vadd.f32 %v703, %v751
      %753 = vmatmul.bf16.gmra.mxu0 %v448
      %v754 = vpop.f32.mrf.mxu0
      %v755 = vadd.f32 %v706, %v754
      %v756 = vpop.f32.mrf.mxu0
      %v757 = vadd.f32 %v708, %v756
      %758 = vmatmul.bf16.gmra.mxu0 %v450
      %v759 = vpop.f32.mrf.mxu0
      %v760 = vadd.f32 %v711, %v759
      %v761 = vpop.f32.mrf.mxu0
      %v762 = vadd.f32 %v713, %v761
      %763 = vmatmul.bf16.gmra.mxu0 %v452
      %v764 = vpop.f32.mrf.mxu0
      %v765 = vadd.f32 %v716, %v764
      %v766 = vpop.f32.mrf.mxu0
      %v767 = vadd.f32 %v718, %v766
      %768 = vmatmul.bf16.gmra.mxu0 %v454
      %v769 = vpop.f32.mrf.mxu0
      %v770 = vadd.f32 %v721, %v769
      %v771 = vpop.f32.mrf.mxu0
      %v772 = vadd.f32 %v723, %v771
      %773 = vmatmul.bf16.gmra.mxu0 %v456
      %v774 = vpop.f32.mrf.mxu0
      %v775 = vadd.f32 %v726, %v774
      %v776 = vpop.f32.mrf.mxu0
      %v777 = vadd.f32 %v728, %v776
      %778 = vmatmul.bf16.gmra.mxu0 %v458
      %v779 = vpop.f32.mrf.mxu0
      %v780 = vadd.f32 %v731, %v779
      %v781 = vpop.f32.mrf.mxu0
      %v782 = vadd.f32 %v733, %v781
      %783 = vmatmul.bf16.gmra.mxu0 %v460
      %v784 = vpop.f32.mrf.mxu0
      %v785 = vadd.f32 %v736, %v784
      %v786 = vpop.f32.mrf.mxu0
      %v787 = vadd.f32 %v738, %v786
      %788 = vdwg.mxu0
      %789 = vmatpush.bf16.msra.mxu0 %v666
      %790 = vmatpush.bf16.msra.mxu0 %v665
      %791 = vmatpush.bf16.msra.mxu0 %v664
      %792 = vmatpush.bf16.msra.mxu0 %v663
      %793 = vmatpush.bf16.msra.mxu0 %v662
      %794 = vmatpush.bf16.msra.mxu0 %v661
      %795 = vmatpush.bf16.msra.mxu0 %v660
      %796 = vmatpush.bf16.msra.mxu0 %v659
      %797 = vmatmul.bf16.gmra.mxu0 %v472
      %v798 = vpop.f32.mrf.mxu0
      %v799 = vadd.f32 %v750, %v798
      %v800 = vpop.f32.mrf.mxu0
      %v801 = vadd.f32 %v752, %v800
      %802 = vmatmul.bf16.gmra.mxu0 %v474
      %v803 = vpop.f32.mrf.mxu0
      %v804 = vadd.f32 %v755, %v803
      %v805 = vpop.f32.mrf.mxu0
      %v806 = vadd.f32 %v757, %v805
      %807 = vmatmul.bf16.gmra.mxu0 %v476
      %v808 = vpop.f32.mrf.mxu0
      %v809 = vadd.f32 %v760, %v808
      %v810 = vpop.f32.mrf.mxu0
      %v811 = vadd.f32 %v762, %v810
      %812 = vmatmul.bf16.gmra.mxu0 %v478
      %v813 = vpop.f32.mrf.mxu0
      %v814 = vadd.f32 %v765, %v813
      %v815 = vpop.f32.mrf.mxu0
      %v816 = vadd.f32 %v767, %v815
      %817 = vmatmul.bf16.gmra.mxu0 %v480
      %v818 = vpop.f32.mrf.mxu0
      %v819 = vadd.f32 %v770, %v818
      %v820 = vpop.f32.mrf.mxu0
      %v821 = vadd.f32 %v772, %v820
      %822 = vmatmul.bf16.gmra.mxu0 %v482
      %v823 = vpop.f32.mrf.mxu0
      %v824 = vadd.f32 %v775, %v823
      %v825 = vpop.f32.mrf.mxu0
      %v826 = vadd.f32 %v777, %v825
      %827 = vmatmul.bf16.gmra.mxu0 %v484
      %v828 = vpop.f32.mrf.mxu0
      %v829 = vadd.f32 %v780, %v828
      %v830 = vpop.f32.mrf.mxu0
      %v831 = vadd.f32 %v782, %v830
      %832 = vmatmul.bf16.gmra.mxu0 %v486
      %v833 = vpop.f32.mrf.mxu0
      %v834 = vadd.f32 %v785, %v833
      %v835 = vpop.f32.mrf.mxu0
      %v836 = vadd.f32 %v787, %v835
      %837 = vdwg.mxu0
      %v838 = vpack.c.bf16 %v799, %v799
      %v839 = vpack.c.bf16 %v801, %v801
      %v840 = vpack.c.bf16 %v804, %v804
      %v841 = vpack.c.bf16 %v806, %v806
      %v842 = vpack.c.bf16 %v809, %v809
      %v843 = vpack.c.bf16 %v811, %v811
      %v844 = vpack.c.bf16 %v814, %v814
      %v845 = vpack.c.bf16 %v816, %v816
      %v846 = vpack.c.bf16 %v819, %v819
      %v847 = vpack.c.bf16 %v821, %v821
      %v848 = vpack.c.bf16 %v824, %v824
      %v849 = vpack.c.bf16 %v826, %v826
      %v850 = vpack.c.bf16 %v829, %v829
      %v851 = vpack.c.bf16 %v831, %v831
      %v852 = vpack.c.bf16 %v834, %v834
      %v853 = vpack.c.bf16 %v836, %v836
      %854 = vst [vmem:[%s180] sm:$0xf] %v838
      %855 = vst [vmem:[%s180 + $0x4] sm:$0xf] %v839
      %856 = vst [vmem:[%s180 + $0x8] sm:$0xf] %v840
      %857 = vst [vmem:[%s180 + $0xc] sm:$0xf] %v841
      %858 = vst [vmem:[%s180 + $0x10] sm:$0xf] %v842
      %859 = vst [vmem:[%s180 + $0x14] sm:$0xf] %v843
      %860 = vst [vmem:[%s180 + $0x18] sm:$0xf] %v844
      %861 = vst [vmem:[%s180 + $0x1c] sm:$0xf] %v845
      %862 = vst [vmem:[%s180 + $0x20] sm:$0xf] %v846
      %863 = vst [vmem:[%s180 + $0x24] sm:$0xf] %v847
      %864 = vst [vmem:[%s180 + $0x28] sm:$0xf] %v848
      %865 = vst [vmem:[%s180 + $0x2c] sm:$0xf] %v849
      %866 = vst [vmem:[%s180 + $0x30] sm:$0xf] %v850
      %867 = vst [vmem:[%s180 + $0x34] sm:$0xf] %v851
      %868 = vst [vmem:[%s180 + $0x38] sm:$0xf] %v852
      %869 = vst [vmem:[%s180 + $0x3c] sm:$0xf] %v853
      %v870 = vunpack.c.l.bf16 %v838
      %v871 = vunpack.c.l.bf16 %v839
      %v872 = vunpack.c.l.bf16 %v840
      %v873 = vunpack.c.l.bf16 %v841
      %v874 = vunpack.c.l.bf16 %v842
      %v875 = vunpack.c.l.bf16 %v843
      %v876 = vunpack.c.l.bf16 %v844
      %v877 = vunpack.c.l.bf16 %v845
      %v878 = vunpack.c.l.bf16 %v846
      %v879 = vunpack.c.l.bf16 %v847
      %v880 = vunpack.c.l.bf16 %v848
      %v881 = vunpack.c.l.bf16 %v849
      %v882 = vunpack.c.l.bf16 %v850
      %v883 = vunpack.c.l.bf16 %v851
      %v884 = vunpack.c.l.bf16 %v852
      %v885 = vunpack.c.l.bf16 %v853
      %s886 = smul.u32 %s21, 128
      %v887 = vlaneseq
      %v888 = vshrl.u32 %v887, 7
      %v889 = vadd.s32 %v888, 8
      %v890 = vadd.s32 %v888, 16
      %v891 = vadd.s32 %v888, 24
      %v892 = vadd.s32 %v888, 32
      %v893 = vadd.s32 %v888, 40
      %v894 = vadd.s32 %v888, 48
      %v895 = vadd.s32 %v888, 56
      %v896 = vadd.s32 %v888, 64
      %v897 = vadd.s32 %v888, 72
      %v898 = vadd.s32 %v888, 80
      %v899 = vadd.s32 %v888, 88
      %v900 = vadd.s32 %v888, 96
      %v901 = vadd.s32 %v888, 104
      %v902 = vadd.s32 %v888, 112
      %v903 = vadd.s32 %v888, 120
      %v904 = vstv %s886
      %v905 = vadd.s32 %v904, %v888
      %v906 = vadd.s32 %v904, %v889
      %v907 = vadd.s32 %v904, %v890
      %v908 = vadd.s32 %v904, %v891
      %v909 = vadd.s32 %v904, %v892
      %v910 = vadd.s32 %v904, %v893
      %v911 = vadd.s32 %v904, %v894
      %v912 = vadd.s32 %v904, %v895
      %v913 = vadd.s32 %v904, %v896
      %v914 = vadd.s32 %v904, %v897
      %v915 = vadd.s32 %v904, %v898
      %v916 = vadd.s32 %v904, %v899
      %v917 = vadd.s32 %v904, %v900
      %v918 = vadd.s32 %v904, %v901
      %v919 = vadd.s32 %v904, %v902
      %v920 = vadd.s32 %v904, %v903
      %vm921 = vcmp.lt.s32.totalorder %v905, 250
      %vm922 = vcmp.lt.s32.totalorder %v906, 250
      %vm923 = vcmp.lt.s32.totalorder %v907, 250
      %vm924 = vcmp.lt.s32.totalorder %v908, 250
      %vm925 = vcmp.lt.s32.totalorder %v909, 250
      %vm926 = vcmp.lt.s32.totalorder %v910, 250
      %vm927 = vcmp.lt.s32.totalorder %v911, 250
      %vm928 = vcmp.lt.s32.totalorder %v912, 250
      %vm929 = vcmp.lt.s32.totalorder %v913, 250
      %vm930 = vcmp.lt.s32.totalorder %v914, 250
      %vm931 = vcmp.lt.s32.totalorder %v915, 250
      %vm932 = vcmp.lt.s32.totalorder %v916, 250
      %vm933 = vcmp.lt.s32.totalorder %v917, 250
      %vm934 = vcmp.lt.s32.totalorder %v918, 250
      %vm935 = vcmp.lt.s32.totalorder %v919, 250
      %vm936 = vcmp.lt.s32.totalorder %v920, 250
      %v937 = vsel %vm921, 1, 0
      %v938 = vsel %vm922, 1, 0
      %v939 = vsel %vm923, 1, 0
      %v940 = vsel %vm924, 1, 0
      %v941 = vsel %vm925, 1, 0
      %v942 = vsel %vm926, 1, 0
      %v943 = vsel %vm927, 1, 0
      %v944 = vsel %vm928, 1, 0
      %v945 = vsel %vm929, 1, 0
      %v946 = vsel %vm930, 1, 0
      %v947 = vsel %vm931, 1, 0
      %v948 = vsel %vm932, 1, 0
      %v949 = vsel %vm933, 1, 0
      %v950 = vsel %vm934, 1, 0
      %v951 = vsel %vm935, 1, 0
      %v952 = vsel %vm936, 1, 0
      %vm953 = vcmp.eq.s32.totalorder %v937, 1
      %vm954 = vcmp.eq.s32.totalorder %v938, 1
      %vm955 = vcmp.eq.s32.totalorder %v939, 1
      %vm956 = vcmp.eq.s32.totalorder %v940, 1
      %vm957 = vcmp.eq.s32.totalorder %v941, 1
      %vm958 = vcmp.eq.s32.totalorder %v942, 1
      %vm959 = vcmp.eq.s32.totalorder %v943, 1
      %vm960 = vcmp.eq.s32.totalorder %v944, 1
      %vm961 = vcmp.eq.s32.totalorder %v945, 1
      %vm962 = vcmp.eq.s32.totalorder %v946, 1
      %vm963 = vcmp.eq.s32.totalorder %v947, 1
      %vm964 = vcmp.eq.s32.totalorder %v948, 1
      %vm965 = vcmp.eq.s32.totalorder %v949, 1
      %vm966 = vcmp.eq.s32.totalorder %v950, 1
      %vm967 = vcmp.eq.s32.totalorder %v951, 1
      %vm968 = vcmp.eq.s32.totalorder %v952, 1
      %v969 = vsel %vm953, %v870, 0.0
      %v970 = vsel %vm954, %v871, 0.0
      %v971 = vsel %vm955, %v872, 0.0
      %v972 = vsel %vm956, %v873, 0.0
      %v973 = vsel %vm957, %v874, 0.0
      %v974 = vsel %vm958, %v875, 0.0
      %v975 = vsel %vm959, %v876, 0.0
      %v976 = vsel %vm960, %v877, 0.0
      %v977 = vsel %vm961, %v878, 0.0
      %v978 = vsel %vm962, %v879, 0.0
      %v979 = vsel %vm963, %v880, 0.0
      %v980 = vsel %vm964, %v881, 0.0
      %v981 = vsel %vm965, %v882, 0.0
      %v982 = vsel %vm966, %v883, 0.0
      %v983 = vsel %vm967, %v884, 0.0
      %v984 = vsel %vm968, %v885, 0.0
      %v985 = vadd.f32 %v969, %v970
      %v986 = vadd.f32 %v985, %v971
      %v987 = vadd.f32 %v986, %v972
      %v988 = vadd.f32 %v987, %v973
      %v989 = vadd.f32 %v988, %v974
      %v990 = vadd.f32 %v989, %v975
      %v991 = vadd.f32 %v990, %v976
      %v992 = vadd.f32 %v991, %v977
      %v993 = vadd.f32 %v992, %v978
      %v994 = vadd.f32 %v993, %v979
      %v995 = vadd.f32 %v994, %v980
      %v996 = vadd.f32 %v995, %v981
      %v997 = vadd.f32 %v996, %v982
      %v998 = vadd.f32 %v997, %v983
      %v999 = vadd.f32 %v998, %v984
      %v1000 = vrot.slane %v999, 4
      %v1001 = vadd.f32 %v999, %v1000
      %v1002 = vrot.slane %v1001, 2
      %v1003 = vadd.f32 %v1001, %v1002
      %v1004 = vrot.slane %v1003, 1
      %v1005 = vadd.f32 %v1003, %v1004
      %v1006 = vmul.f32 %v969, %v969
      %v1007 = vmul.f32 %v970, %v970
      %v1008 = vmul.f32 %v971, %v971
      %v1009 = vmul.f32 %v972, %v972
      %v1010 = vmul.f32 %v973, %v973
      %v1011 = vmul.f32 %v974, %v974
      %v1012 = vmul.f32 %v975, %v975
      %v1013 = vmul.f32 %v976, %v976
      %v1014 = vmul.f32 %v977, %v977
      %v1015 = vmul.f32 %v978, %v978
      %v1016 = vmul.f32 %v979, %v979
      %v1017 = vmul.f32 %v980, %v980
      %v1018 = vmul.f32 %v981, %v981
      %v1019 = vmul.f32 %v982, %v982
      %v1020 = vmul.f32 %v983, %v983
      %v1021 = vmul.f32 %v984, %v984
      %v1022 = vadd.f32 %v1006, %v1007
      %v1023 = vadd.f32 %v1022, %v1008
      %v1024 = vadd.f32 %v1023, %v1009
      %v1025 = vadd.f32 %v1024, %v1010
      %v1026 = vadd.f32 %v1025, %v1011
      %v1027 = vadd.f32 %v1026, %v1012
      %v1028 = vadd.f32 %v1027, %v1013
      %v1029 = vadd.f32 %v1028, %v1014
      %v1030 = vadd.f32 %v1029, %v1015
      %v1031 = vadd.f32 %v1030, %v1016
      %v1032 = vadd.f32 %v1031, %v1017
      %v1033 = vadd.f32 %v1032, %v1018
      %v1034 = vadd.f32 %v1033, %v1019
      %v1035 = vadd.f32 %v1034, %v1020
      %v1036 = vadd.f32 %v1035, %v1021
      %v1037 = vrot.slane %v1036, 4
      %v1038 = vadd.f32 %v1036, %v1037
      %v1039 = vrot.slane %v1038, 2
      %v1040 = vadd.f32 %v1038, %v1039
      %v1041 = vrot.slane %v1040, 1
      %v1042 = vadd.f32 %v1040, %v1041
      %vm1043 = vcmask 1040384
      %v1044 = vsel %vm1043, %v1005, %v1042
      %v1045 = vld [vmem:[%s185] sm:$0x3]
      %v1046 = vadd.f32 %v1045, %v1044
      %1047 = vst [vmem:[%s185] sm:$0x3] %v1046
      %s1048 = smul.u32 16, %s21
      %p1049 = scmp.lt.s32.totalorder %s20, 1
      %s1050 = scalar_select %p1049, %s20, 1
      %p1051 = scmp.lt.s32.totalorder %s1048, 31
      %s1052 = scalar_select %p1051, %s1048, 31
      %s1053 = smul.addr %s1050, 32
      %s1054 = sadd.s32 %s1052, %s1053
      %s1055 = smul.addr %s1054, 4
      %s1056 = scalar_lea.vmem %s3, %s1055
      %p1057 = scmp.lt.s32.totalorder %s20, 1
      %s1058 = scalar_select %p1057, %s20, 1
      %s1059 = smul.addr %s1058, 2
      %s1060 = scalar_lea.vmem %s4, %s1059
      // Predicated region
      $region81: #{_lambda_.9} parent=27 // pred_check
        %p1061 = pneg %p90
      $region82: #{_lambda_.9} parent=27 // pred_check_branch
        %1063 = sbr.rel (%p1061) target = $region84
      $region83: #{_lambda_.9} parent=27 // pred_region
        %s1064 = smul.u32 16, %s21
      $region84: #{_lambda_.9} parent=27 // pred_fallthru
        _
      // Predicated region
      $region85: #{_lambda_.9} parent=27 // pred_check
        %p1065 = pneg %p116
      $region86: #{_lambda_.9} parent=27 // pred_check_branch
        %1067 = sbr.rel (%p1065) target = $region88
      $region87: #{_lambda_.9} parent=27 // pred_region
        _
      $region88: #{_lambda_.9} parent=27 // pred_fallthru
        _
    $region28: #{_lambda_.9} parent=5 // pred_fallthru
      _
    %p1068 = scmp.le.s32.totalorder 2, %s11
    // Predicated region
    $region89: #{_lambda_.9} parent=5 // pred_check
      %p1069 = pneg %p1068
    $region90: #{_lambda_.9} parent=5 // pred_check_branch
      %1071 = sbr.rel (%p1069) target = $region92
    $region91: #{_lambda_.9} parent=5 // pred_region
      %s1072 = ssub.s32 %s11, 2
      // Predicated region
      $region93: #{_lambda_.9} parent=91 // pred_check
        %p1073 = pneg %p96
      $region94: #{_lambda_.9} parent=91 // pred_check_branch
        %1075 = sbr.rel (%p1073) target = $region96
      $region95: #{_lambda_.9} parent=91 // pred_region
        %s1076 = smul.u32 16, %s23
        %p1077 = scmp.lt.s32.totalorder %s22, 1
        %s1078 = scalar_select %p1077, %s22, 1
        %p1079 = scmp.lt.s32.totalorder %s1076, 31
        %s1080 = scalar_select %p1079, %s1076, 31
        %s1081 = smul.addr %s1078, 32
        %s1082 = sadd.s32 %s1080, %s1081
        %s1083 = smul.addr %s1082, 4
        %s1084 = scalar_lea.vmem %s3, %s1083
      $region96: #{_lambda_.9} parent=91 // pred_fallthru
        _
      // Predicated region
      $region97: #{_lambda_.9} parent=91 // pred_check
        %p1085 = pneg %p122
      $region98: #{_lambda_.9} parent=91 // pred_check_branch
        %1087 = sbr.rel (%p1085) target = $region100
      $region99: #{_lambda_.9} parent=91 // pred_region
        %p1088 = scmp.lt.s32.totalorder %s22, 1
        %s1089 = scalar_select %p1088, %s22, 1
        %s1090 = smul.addr %s1089, 2
        %s1091 = scalar_lea.vmem %s4, %s1090
      $region100: #{_lambda_.9} parent=91 // pred_fallthru
        _
    $region92: #{_lambda_.9} parent=5 // pred_fallthru
      _
  $region6: #{_lambda_.9} parent=0 // loop_footer
    %s15 = sadd.s32 1, %s11
  $region7: #{_lambda_.9} parent=0 // loop_footer_branch
    %10 = sbr.rel target = $region3
  $region8: #{_lambda_.9} parent=0 // loop_exit
    _
  %1092 = vsyncmov [#allocation3]
  %s1093 = vpop.sfrf %1092
  %p1094 = scmp.eq.s32.totalorder %s1093, 0
  %p1095 = pneg %p1094
  %1097 = shalt.err (%p1095)
  %s1098 = scalar_lea.sflag [#allocation3], 1
  %1099 = vsyncmov %s1098
  %s1100 = vpop.sfrf %1099
  %p1101 = scmp.eq.s32.totalorder %s1100, 0
  %p1102 = pneg %p1101
  %1104 = shalt.err (%p1102)

</llo_original>
